<compile_context>
chip_gen: v6e
topology: v6e:2x2x1
jax: 0.10.0
libtpu: 0.0.40
codegen_flags: <defaults>
</compile_context>

<pallas_src>
import functools

import jax
import jax.numpy as jnp
from jax import lax
from jax.experimental import pallas as pl
from jax.experimental.pallas import tpu as pltpu


_VMEM_SPEC = pl.BlockSpec(memory_space=pltpu.MemorySpace.VMEM)
_LN_EPS = 1e-5


def _round_up(n, m):
    return ((n + m - 1) // m) * m


def _vmem_limit_bytes():
    # Per-generation scoped-VMEM budget: ~75% of physical VMEM (v5e/v6e: 128 MiB,
    # v7x: 64 MiB), capped at 100 MiB, leaving headroom for compiler scratch.
    cap = 64 * 1024 * 1024
    try:
        info = pltpu.get_tpu_info()
        cap = int(getattr(info, "vmem_capacity_bytes", cap) or cap)
    except Exception:
        pass
    return min(cap * 3 // 4, 100 * 1024 * 1024)


# ---------------- Fused kernel: input proj + transformer + classifier -------- #
# Single pallas_call: all weights live in VMEM, the (BP, HP) activations never
# leave the chip.  Hidden is zero-padded to a multiple of 128; LayerNorm
# statistics are computed over the real hidden width only (mask + divide by
# H_real), and zero-padded gamma/beta keep padded lanes at exactly 0.
# TODO(synk): for very deep/wide configs on v7x (64 MiB VMEM), stream the
# per-layer w1/w2/wvo weights with a layer grid axis instead of keeping the
# whole stack resident; at the demo sizes everything fits comfortably.
# TODO(synk): if serving batch grows to >=128, add a "parallel" batch grid axis
# (megacore sharding on v7x) and chunk the FFN inner dimension to bound vreg
# pressure; at BP=8 neither change helps.

def _build_spoter_kernel(h_real, num_enc, num_dec):
    def kernel(x_ref, in_w, in_b, cq_ref,
               e_wvo, e_bvo, e_ln1g, e_ln1b, e_w1, e_b1, e_w2, e_b2,
               e_ln2g, e_ln2b,
               e_ng, e_nb,
               d_wvoc, d_bvoc,
               d_ln1g, d_ln1b, d_ln2g, d_ln2b, d_ln3g, d_ln3b,
               d_w1, d_b1, d_w2, d_b2,
               d_ng, d_nb,
               cls_w, cls_b,
               o_ref):
        bp = x_ref.shape[0]
        hp = in_b.shape[1]
        inv_n = jnp.float32(1.0 / h_real)
        lane = lax.broadcasted_iota(jnp.int32, (1, hp), 1)
        mask = (lane < h_real).astype(jnp.float32)

        def ln(z, g, b):
            # LayerNorm over the real hidden width (biased variance, eps=1e-5,
            # matching torch.nn.LayerNorm).  Padded lanes of z are always 0.
            mu = jnp.sum(z, axis=-1, keepdims=True) * inv_n
            d = (z - mu) * mask
            var = jnp.sum(d * d, axis=-1, keepdims=True) * inv_n
            return d * lax.rsqrt(var + jnp.float32(_LN_EPS)) * g + b

        def matmul(x, w, b):
            # bf16 MXU matmul with f32 accumulate + f32 bias.
            return jnp.dot(x.astype(jnp.bfloat16), w,
                           preferred_element_type=jnp.float32) + b

        # -------- input projection (x already bf16, padded lanes of W are 0) ----
        src = jnp.dot(x_ref[...], in_w[...],
                      preferred_element_type=jnp.float32) + in_b[...]

        # -------- encoder stack (post-norm) --------
        for l in range(num_enc):
            # self-attention with a single key: softmax == 1  =>
            # out_proj(v_proj(src)), folded offline into wvo / bvo.
            sa = matmul(src, e_wvo[l], e_bvo[l])
            src = ln(src + sa, e_ln1g[l], e_ln1b[l])
            hid = jnp.maximum(matmul(src, e_w1[l], e_b1[l]), 0.0)
            ff = matmul(hid, e_w2[l], e_b2[l])
            src = ln(src + ff, e_ln2g[l], e_ln2b[l])
        memory = ln(src, e_ng[...], e_nb[...])          # encoder final norm

        # -------- all decoder cross-attention folds in ONE wide matmul --------
        # memory is layer-invariant; d_wvoc is (HP, L_dec*HP).
        ca_all = jnp.dot(memory.astype(jnp.bfloat16), d_wvoc[...],
                         preferred_element_type=jnp.float32) + d_bvoc[...]

        # -------- SPOTER decoder stack --------
        tgt = jnp.broadcast_to(cq_ref[...], (bp, hp))   # class_query per batch row
        for l in range(num_dec):
            tgt = ln(tgt + tgt, d_ln1g[l], d_ln1b[l])   # self-attn removed; dropout identity
            ca = ca_all[:, l * hp:(l + 1) * hp]         # cross-attn, seq-len-1 fold
            tgt = ln(tgt + ca, d_ln2g[l], d_ln2b[l])
            hid = jnp.maximum(matmul(tgt, d_w1[l], d_b1[l]), 0.0)
            ff = matmul(hid, d_w2[l], d_b2[l])
            tgt = ln(tgt + ff, d_ln3g[l], d_ln3b[l])
        tgt = ln(tgt, d_ng[...], d_nb[...])             # decoder final norm

        o_ref[...] = matmul(tgt, cls_w[...], cls_b[...])   # classifier
    return kernel


def _spoter_call(xp, prep, *, h_real):
    enc, dec = prep["enc"], prep["dec"]
    num_enc = enc["wvo"].shape[0]
    num_dec = dec["w1"].shape[0]
    bp = xp.shape[0]
    fp = xp.shape[1]
    hp = prep["in_b"].shape[1]
    cp = prep["cls_w"].shape[1]
    ffnp = enc["w1"].shape[2]

    args = (xp, prep["in_w"], prep["in_b"], prep["class_query"],
            enc["wvo"], enc["bvo"], enc["ln1_g"], enc["ln1_b"],
            enc["w1"], enc["b1"], enc["w2"], enc["b2"],
            enc["ln2_g"], enc["ln2_b"],
            prep["enc_norm_g"], prep["enc_norm_b"],
            prep["dec_wvo_cat"], prep["dec_bvo_cat"],
            dec["ln1_g"], dec["ln1_b"], dec["ln2_g"], dec["ln2_b"],
            dec["ln3_g"], dec["ln3_b"],
            dec["w1"], dec["b1"], dec["w2"], dec["b2"],
            prep["dec_norm_g"], prep["dec_norm_b"],
            prep["cls_w"], prep["cls_b"])

    flops = (2 * bp * fp * hp
             + 2 * bp * (hp * hp + 2 * hp * ffnp) * num_enc
             + 2 * bp * hp * (hp * num_dec)
             + 2 * bp * (2 * hp * ffnp) * num_dec
             + 2 * bp * hp * cp)
    transcendentals = bp * (2 * num_enc + 1 + 3 * num_dec + 1)
    bytes_accessed = (sum(int(a.size) * a.dtype.itemsize for a in args)
                      + bp * cp * 4)

    return pl.pallas_call(
        _build_spoter_kernel(h_real, num_enc, num_dec),
        out_shape=jax.ShapeDtypeStruct((bp, cp), jnp.float32),
        in_specs=[_VMEM_SPEC] * len(args),
        out_specs=_VMEM_SPEC,
        compiler_params=pltpu.CompilerParams(
            vmem_limit_bytes=_vmem_limit_bytes()),
        cost_estimate=pl.CostEstimate(flops=int(flops),
                                      transcendentals=int(transcendentals),
                                      bytes_accessed=int(bytes_accessed)),
    )(*args)


# ------------------------------ Forward pass -------------------------------- #

def spoter_forward(inputs, prep, *, hidden, num_classes):
    # TODO(synk): dropout layers are identity here (inference mode only).
    B = inputs.shape[0]
    x = inputs.reshape(B, -1)                         # flatten(start_dim=1)
    F = x.shape[1]
    FP = prep["in_w"].shape[0]
    BP = _round_up(max(B, 1), 8)                      # sublane-dense batch
    # One pad+cast pass: bf16 halves the x HBM->VMEM DMA; MXU accumulates in f32.
    xp = jnp.pad(x, ((0, BP - B), (0, FP - F))).astype(jnp.bfloat16)
    out = _spoter_call(xp, prep, h_real=hidden)       # (BP, CP) f32
    return out[:B, :num_classes]


# --------------------------- Parameter creation ----------------------------- #

class KeyGen:
    def __init__(self, seed):
        self._key = jax.random.PRNGKey(seed)

    def __call__(self):
        self._key, sub = jax.random.split(self._key)
        return sub


def _w(kg, shape, scale=0.05):
    return (jax.random.normal(kg(), shape) * scale).astype(jnp.float32)


def _attn_params(kg, hidden):
    # wq/bq/wk/bk mirror the PyTorch module but are mathematically dead for
    # seq-len-1 attention (softmax over one key == 1); dropped during prep.
    return {
        "wq": _w(kg, (hidden, hidden)), "bq": jnp.zeros((hidden,), jnp.float32),
        "wk": _w(kg, (hidden, hidden)), "bk": jnp.zeros((hidden,), jnp.float32),
        "wv": _w(kg, (hidden, hidden)), "bv": jnp.zeros((hidden,), jnp.float32),
        "wo": _w(kg, (hidden, hidden)), "bo": jnp.zeros((hidden,), jnp.float32),
    }


def _enc_layer_params(kg, hidden, ffn):
    return {
        "attn": _attn_params(kg, hidden),
        "w1": _w(kg, (hidden, ffn)), "b1": jnp.zeros((ffn,), jnp.float32),
        "w2": _w(kg, (ffn, hidden)), "b2": jnp.zeros((hidden,), jnp.float32),
        "ln1_g": jnp.ones((hidden,), jnp.float32), "ln1_b": jnp.zeros((hidden,), jnp.float32),
        "ln2_g": jnp.ones((hidden,), jnp.float32), "ln2_b": jnp.zeros((hidden,), jnp.float32),
    }


def _dec_layer_params(kg, hidden, ffn):
    p = _enc_layer_params(kg, hidden, ffn)
    p["ln3_g"] = jnp.ones((hidden,), jnp.float32)
    p["ln3_b"] = jnp.zeros((hidden,), jnp.float32)
    return p


def make_spoter_params(num_classes, hidden, max_frame, enc_layers, dec_layers,
                       ffn=2048, seed=0):
    kg = KeyGen(seed)
    in_features = max_frame * 33 * 3
    return {
        "in_w": _w(kg, (in_features, hidden)),
        "in_b": jnp.zeros((hidden,), jnp.float32),
        # row_embed / pos are declared in the PyTorch module but unused in forward.
        "class_query": jax.random.uniform(kg(), (1, hidden), jnp.float32),
        "enc_layers": [_enc_layer_params(kg, hidden, ffn) for _ in range(enc_layers)],
        "dec_layers": [_dec_layer_params(kg, hidden, ffn) for _ in range(dec_layers)],
        "enc_norm_g": jnp.ones((hidden,), jnp.float32),
        "enc_norm_b": jnp.zeros((hidden,), jnp.float32),
        "dec_norm_g": jnp.ones((hidden,), jnp.float32),
        "dec_norm_b": jnp.zeros((hidden,), jnp.float32),
        "cls_w": _w(kg, (hidden, num_classes)),
        "cls_b": jnp.zeros((num_classes,), jnp.float32),
    }


# -------- Preparation: fold V·O, pad lane-dense, cast weights to bf16 -------- #

def _pad_mat(a, rows, cols):
    return jnp.pad(a, ((0, rows - a.shape[0]), (0, cols - a.shape[1])))


def _pad_row(v, cols):
    return jnp.pad(v, ((0, cols - v.shape[0]),)).reshape(1, cols)


def _fold_vo(attn, HP):
    wvo = attn["wv"] @ attn["wo"]                  # fold V and O projections (f32)
    bvo = attn["bv"] @ attn["wo"] + attn["bo"]
    return _pad_mat(wvo, HP, HP), _pad_row(bvo, HP)


def _prep_common(lp, HP, FFNP, with_ln3):
    d = {
        "ln1_g": _pad_row(lp["ln1_g"], HP), "ln1_b": _pad_row(lp["ln1_b"], HP),
        "w1": _pad_mat(lp["w1"], HP, FFNP).astype(jnp.bfloat16),
        "b1": _pad_row(lp["b1"], FFNP),
        "w2": _pad_mat(lp["w2"], FFNP, HP).astype(jnp.bfloat16),
        "b2": _pad_row(lp["b2"], HP),
        "ln2_g": _pad_row(lp["ln2_g"], HP), "ln2_b": _pad_row(lp["ln2_b"], HP),
    }
    if with_ln3:
        d["ln3_g"] = _pad_row(lp["ln3_g"], HP)
        d["ln3_b"] = _pad_row(lp["ln3_b"], HP)
    return d


def prepare_params(params):
    H = params["in_b"].shape[0]
    F = params["in_w"].shape[0]
    C = params["cls_b"].shape[0]
    FFN = params["enc_layers"][0]["b1"].shape[0]
    HP, FP, CP, FFNP = (_round_up(H, 128), _round_up(F, 128),
                        _round_up(C, 128), _round_up(FFN, 128))

    enc_list = []
    for lp in params["enc_layers"]:
        d = _prep_common(lp, HP, FFNP, with_ln3=False)
        wvo, bvo = _fold_vo(lp["attn"], HP)
        d["wvo"] = wvo.astype(jnp.bfloat16)
        d["bvo"] = bvo
        enc_list.append(d)
    enc = {k: jnp.stack([d[k] for d in enc_list]) for k in enc_list[0]}

    dec_list = [_prep_common(lp, HP, FFNP, with_ln3=True)
                for lp in params["dec_layers"]]
    dec = {k: jnp.stack([d[k] for d in dec_list]) for k in dec_list[0]}

    # Concatenate all decoder V*O folds along the output dim: one wide matmul
    # against the layer-invariant encoder memory inside the kernel.
    dec_wvo, dec_bvo = [], []
    for lp in params["dec_layers"]:
        wvo, bvo = _fold_vo(lp["attn"], HP)
        dec_wvo.append(wvo.astype(jnp.bfloat16))
        dec_bvo.append(bvo)
    dec_wvo_cat = jnp.concatenate(dec_wvo, axis=1)     # (HP, L_dec*HP) bf16
    dec_bvo_cat = jnp.concatenate(dec_bvo, axis=1)     # (1,  L_dec*HP) f32

    return {
        "in_w": _pad_mat(params["in_w"], FP, HP).astype(jnp.bfloat16),
        "in_b": _pad_row(params["in_b"], HP),
        "class_query": jnp.pad(params["class_query"], ((0, 0), (0, HP - H))),
        "enc": enc,
        "dec": dec,
        "dec_wvo_cat": dec_wvo_cat,
        "dec_bvo_cat": dec_bvo_cat,
        "enc_norm_g": _pad_row(params["enc_norm_g"], HP),
        "enc_norm_b": _pad_row(params["enc_norm_b"], HP),
        "dec_norm_g": _pad_row(params["dec_norm_g"], HP),
        "dec_norm_b": _pad_row(params["dec_norm_b"], HP),
        "cls_w": _pad_mat(params["cls_w"], HP, CP).astype(jnp.bfloat16),
        "cls_b": _pad_row(params["cls_b"], CP),
    }


# --------------------------------- Main ------------------------------------ #

if __name__ == "__main__":
    # Small but shape-consistent configuration.
    BATCH = 2
    NUM_CLASSES = 10
    HIDDEN = 32
    MAX_FRAME = 8          # input features = 8 * 33 * 3 = 792
    NUM_HEADS = 2          # head count is irrelevant after the seq-len-1 V*O fold
    ENC_LAYERS = 1
    DEC_LAYERS = 1

    params = make_spoter_params(NUM_CLASSES, HIDDEN, MAX_FRAME,
                                ENC_LAYERS, DEC_LAYERS, ffn=2048, seed=0)
    prepared = prepare_params(params)

    key = jax.random.PRNGKey(0)
    inputs = jax.random.normal(key, (BATCH, MAX_FRAME, 33, 3), dtype=jnp.float32)

    fwd = jax.jit(functools.partial(spoter_forward,
                                    hidden=HIDDEN, num_classes=NUM_CLASSES))
    out = fwd(inputs, prepared)
    out = jax.block_until_ready(out)

    assert out.shape == (BATCH, NUM_CLASSES), out.shape
    assert out.dtype == jnp.float32
    assert bool(jnp.all(jnp.isfinite(out)))
    print("KERNEL_OK")
</pallas_src>

<mosaic_0001>
module attributes {stable_mosaic.version = 11 : i64} {
  func.func @kernel(%arg0: memref<8x896xbf16, #tpu.memory_space<vmem>>, %arg1: memref<896x128xbf16, #tpu.memory_space<vmem>>, %arg2: memref<1x128xf32, #tpu.memory_space<vmem>>, %arg3: memref<1x128xf32, #tpu.memory_space<vmem>>, %arg4: memref<1x128x128xbf16, #tpu.memory_space<vmem>>, %arg5: memref<1x1x128xf32, #tpu.memory_space<vmem>>, %arg6: memref<1x1x128xf32, #tpu.memory_space<vmem>>, %arg7: memref<1x1x128xf32, #tpu.memory_space<vmem>>, %arg8: memref<1x128x2048xbf16, #tpu.memory_space<vmem>>, %arg9: memref<1x1x2048xf32, #tpu.memory_space<vmem>>, %arg10: memref<1x2048x128xbf16, #tpu.memory_space<vmem>>, %arg11: memref<1x1x128xf32, #tpu.memory_space<vmem>>, %arg12: memref<1x1x128xf32, #tpu.memory_space<vmem>>, %arg13: memref<1x1x128xf32, #tpu.memory_space<vmem>>, %arg14: memref<1x128xf32, #tpu.memory_space<vmem>>, %arg15: memref<1x128xf32, #tpu.memory_space<vmem>>, %arg16: memref<128x128xbf16, #tpu.memory_space<vmem>>, %arg17: memref<1x128xf32, #tpu.memory_space<vmem>>, %arg18: memref<1x1x128xf32, #tpu.memory_space<vmem>>, %arg19: memref<1x1x128xf32, #tpu.memory_space<vmem>>, %arg20: memref<1x1x128xf32, #tpu.memory_space<vmem>>, %arg21: memref<1x1x128xf32, #tpu.memory_space<vmem>>, %arg22: memref<1x1x128xf32, #tpu.memory_space<vmem>>, %arg23: memref<1x1x128xf32, #tpu.memory_space<vmem>>, %arg24: memref<1x128x2048xbf16, #tpu.memory_space<vmem>>, %arg25: memref<1x1x2048xf32, #tpu.memory_space<vmem>>, %arg26: memref<1x2048x128xbf16, #tpu.memory_space<vmem>>, %arg27: memref<1x1x128xf32, #tpu.memory_space<vmem>>, %arg28: memref<1x128xf32, #tpu.memory_space<vmem>>, %arg29: memref<1x128xf32, #tpu.memory_space<vmem>>, %arg30: memref<128x128xbf16, #tpu.memory_space<vmem>>, %arg31: memref<1x128xf32, #tpu.memory_space<vmem>>, %arg32: memref<8x128xf32, #tpu.memory_space<vmem>>) attributes {dimension_semantics = [], scalar_prefetch = 0 : i64, scratch_operands = 0 : i64, tpu.core_type = #tpu.core_type<tc>} {
    %0 = tpu.iota {dimensions = array<i32: 1>} : vector<1x128xi32>
    %c32_i32 = arith.constant 32 : i32
    %1 = vector.broadcast %c32_i32 : i32 to vector<1x128xi32>
    %2 = arith.cmpi slt, %0, %1 : vector<1x128xi32>
    %3 = arith.extui %2 : vector<1x128xi1> to vector<1x128xi32>
    %4 = arith.sitofp %3 : vector<1x128xi32> to vector<1x128xf32>
    %c0 = arith.constant 0 : index
    %c0_0 = arith.constant 0 : index
    %5 = vector.load %arg0[%c0, %c0_0] : memref<8x896xbf16, #tpu.memory_space<vmem>>, vector<8x896xbf16>
    %c0_1 = arith.constant 0 : index
    %c0_2 = arith.constant 0 : index
    %6 = vector.load %arg1[%c0_1, %c0_2] : memref<896x128xbf16, #tpu.memory_space<vmem>>, vector<896x128xbf16>
    %cst = arith.constant dense<0.000000e+00> : vector<8x128xf32>
    %7 = tpu.matmul %5, %6, %cst {dimension_numbers = #tpu.dot_dimension_numbers<[1], [0], [0], [1], [0, 0, 1, 1], [], []>} : vector<8x896xbf16>, vector<896x128xbf16>, vector<8x128xf32> -> vector<8x128xf32>
    %c0_3 = arith.constant 0 : index
    %c0_4 = arith.constant 0 : index
    %8 = vector.load %arg2[%c0_3, %c0_4] : memref<1x128xf32, #tpu.memory_space<vmem>>, vector<1x128xf32>
    %9 = vector.broadcast %8 : vector<1x128xf32> to vector<8x128xf32>
    %10 = arith.addf %7, %9 : vector<8x128xf32>
    %c0_5 = arith.constant 0 : index
    %c0_6 = arith.constant 0 : index
    %c0_7 = arith.constant 0 : index
    %11 = vector.load %arg4[%c0_5, %c0_6, %c0_7] : memref<1x128x128xbf16, #tpu.memory_space<vmem>>, vector<1x128x128xbf16>
    %12 = vector.shape_cast %11 : vector<1x128x128xbf16> to vector<128x128xbf16>
    %c0_8 = arith.constant 0 : index
    %c0_9 = arith.constant 0 : index
    %c0_10 = arith.constant 0 : index
    %13 = vector.load %arg5[%c0_8, %c0_9, %c0_10] : memref<1x1x128xf32, #tpu.memory_space<vmem>>, vector<1x1x128xf32>
    %14 = vector.shape_cast %13 : vector<1x1x128xf32> to vector<1x128xf32>
    %15 = arith.truncf %10 : vector<8x128xf32> to vector<8x128xbf16>
    %cst_11 = arith.constant dense<0.000000e+00> : vector<8x128xf32>
    %16 = tpu.matmul %15, %12, %cst_11 {dimension_numbers = #tpu.dot_dimension_numbers<[1], [0], [0], [1], [0, 0, 1, 1], [], []>} : vector<8x128xbf16>, vector<128x128xbf16>, vector<8x128xf32> -> vector<8x128xf32>
    %17 = vector.broadcast %14 : vector<1x128xf32> to vector<8x128xf32>
    %18 = arith.addf %16, %17 : vector<8x128xf32>
    %19 = arith.addf %10, %18 : vector<8x128xf32>
    %c0_12 = arith.constant 0 : index
    %c0_13 = arith.constant 0 : index
    %c0_14 = arith.constant 0 : index
    %20 = vector.load %arg6[%c0_12, %c0_13, %c0_14] : memref<1x1x128xf32, #tpu.memory_space<vmem>>, vector<1x1x128xf32>
    %21 = vector.shape_cast %20 : vector<1x1x128xf32> to vector<1x128xf32>
    %c0_15 = arith.constant 0 : index
    %c0_16 = arith.constant 0 : index
    %c0_17 = arith.constant 0 : index
    %22 = vector.load %arg7[%c0_15, %c0_16, %c0_17] : memref<1x1x128xf32, #tpu.memory_space<vmem>>, vector<1x1x128xf32>
    %23 = vector.shape_cast %22 : vector<1x1x128xf32> to vector<1x128xf32>
    %cst_18 = arith.constant dense<0.000000e+00> : vector<8xf32>
    %24 = vector.multi_reduction <add>, %19, %cst_18 [1] : vector<8x128xf32> to vector<8xf32>
    %25 = vector.shape_cast %24 : vector<8xf32> to vector<8x1xf32>
    %cst_19 = arith.constant 3.125000e-02 : f32
    %26 = vector.broadcast %cst_19 : f32 to vector<8x1xf32>
    %27 = arith.mulf %25, %26 : vector<8x1xf32>
    %28 = vector.broadcast %27 : vector<8x1xf32> to vector<8x128xf32>
    %29 = arith.subf %19, %28 : vector<8x128xf32>
    %30 = vector.broadcast %4 : vector<1x128xf32> to vector<8x128xf32>
    %31 = arith.mulf %29, %30 : vector<8x128xf32>
    %32 = arith.mulf %31, %31 : vector<8x128xf32>
    %cst_20 = arith.constant dense<0.000000e+00> : vector<8xf32>
    %33 = vector.multi_reduction <add>, %32, %cst_20 [1] : vector<8x128xf32> to vector<8xf32>
    %34 = vector.shape_cast %33 : vector<8xf32> to vector<8x1xf32>
    %cst_21 = arith.constant 3.125000e-02 : f32
    %35 = vector.broadcast %cst_21 : f32 to vector<8x1xf32>
    %36 = arith.mulf %34, %35 : vector<8x1xf32>
    %cst_22 = arith.constant 9.99999974E-6 : f32
    %37 = vector.broadcast %cst_22 : f32 to vector<8x1xf32>
    %38 = arith.addf %36, %37 : vector<8x1xf32>
    %39 = math.rsqrt %38 : vector<8x1xf32>
    %40 = vector.broadcast %39 : vector<8x1xf32> to vector<8x128xf32>
    %41 = arith.mulf %31, %40 : vector<8x128xf32>
    %42 = vector.broadcast %21 : vector<1x128xf32> to vector<8x128xf32>
    %43 = arith.mulf %41, %42 : vector<8x128xf32>
    %44 = vector.broadcast %23 : vector<1x128xf32> to vector<8x128xf32>
    %45 = arith.addf %43, %44 : vector<8x128xf32>
    %c0_23 = arith.constant 0 : index
    %c0_24 = arith.constant 0 : index
    %c0_25 = arith.constant 0 : index
    %46 = vector.load %arg8[%c0_23, %c0_24, %c0_25] : memref<1x128x2048xbf16, #tpu.memory_space<vmem>>, vector<1x128x2048xbf16>
    %47 = vector.shape_cast %46 : vector<1x128x2048xbf16> to vector<128x2048xbf16>
    %c0_26 = arith.constant 0 : index
    %c0_27 = arith.constant 0 : index
    %c0_28 = arith.constant 0 : index
    %48 = vector.load %arg9[%c0_26, %c0_27, %c0_28] : memref<1x1x2048xf32, #tpu.memory_space<vmem>>, vector<1x1x2048xf32>
    %49 = vector.shape_cast %48 : vector<1x1x2048xf32> to vector<1x2048xf32>
    %50 = arith.truncf %45 : vector<8x128xf32> to vector<8x128xbf16>
    %cst_29 = arith.constant dense<0.000000e+00> : vector<8x2048xf32>
    %51 = tpu.matmul %50, %47, %cst_29 {dimension_numbers = #tpu.dot_dimension_numbers<[1], [0], [0], [1], [0, 0, 1, 1], [], []>} : vector<8x128xbf16>, vector<128x2048xbf16>, vector<8x2048xf32> -> vector<8x2048xf32>
    %52 = vector.broadcast %49 : vector<1x2048xf32> to vector<8x2048xf32>
    %53 = arith.addf %51, %52 : vector<8x2048xf32>
    %cst_30 = arith.constant 0.000000e+00 : f32
    %54 = vector.broadcast %cst_30 : f32 to vector<8x2048xf32>
    %55 = arith.maximumf %53, %54 : vector<8x2048xf32>
    %c0_31 = arith.constant 0 : index
    %c0_32 = arith.constant 0 : index
    %c0_33 = arith.constant 0 : index
    %56 = vector.load %arg10[%c0_31, %c0_32, %c0_33] : memref<1x2048x128xbf16, #tpu.memory_space<vmem>>, vector<1x2048x128xbf16>
    %57 = vector.shape_cast %56 : vector<1x2048x128xbf16> to vector<2048x128xbf16>
    %c0_34 = arith.constant 0 : index
    %c0_35 = arith.constant 0 : index
    %c0_36 = arith.constant 0 : index
    %58 = vector.load %arg11[%c0_34, %c0_35, %c0_36] : memref<1x1x128xf32, #tpu.memory_space<vmem>>, vector<1x1x128xf32>
    %59 = vector.shape_cast %58 : vector<1x1x128xf32> to vector<1x128xf32>
    %60 = arith.truncf %55 : vector<8x2048xf32> to vector<8x2048xbf16>
    %cst_37 = arith.constant dense<0.000000e+00> : vector<8x128xf32>
    %61 = tpu.matmul %60, %57, %cst_37 {dimension_numbers = #tpu.dot_dimension_numbers<[1], [0], [0], [1], [0, 0, 1, 1], [], []>} : vector<8x2048xbf16>, vector<2048x128xbf16>, vector<8x128xf32> -> vector<8x128xf32>
    %62 = vector.broadcast %59 : vector<1x128xf32> to vector<8x128xf32>
    %63 = arith.addf %61, %62 : vector<8x128xf32>
    %64 = arith.addf %45, %63 : vector<8x128xf32>
    %c0_38 = arith.constant 0 : index
    %c0_39 = arith.constant 0 : index
    %c0_40 = arith.constant 0 : index
    %65 = vector.load %arg12[%c0_38, %c0_39, %c0_40] : memref<1x1x128xf32, #tpu.memory_space<vmem>>, vector<1x1x128xf32>
    %66 = vector.shape_cast %65 : vector<1x1x128xf32> to vector<1x128xf32>
    %c0_41 = arith.constant 0 : index
    %c0_42 = arith.constant 0 : index
    %c0_43 = arith.constant 0 : index
    %67 = vector.load %arg13[%c0_41, %c0_42, %c0_43] : memref<1x1x128xf32, #tpu.memory_space<vmem>>, vector<1x1x128xf32>
    %68 = vector.shape_cast %67 : vector<1x1x128xf32> to vector<1x128xf32>
    %cst_44 = arith.constant dense<0.000000e+00> : vector<8xf32>
    %69 = vector.multi_reduction <add>, %64, %cst_44 [1] : vector<8x128xf32> to vector<8xf32>
    %70 = vector.shape_cast %69 : vector<8xf32> to vector<8x1xf32>
    %cst_45 = arith.constant 3.125000e-02 : f32
    %71 = vector.broadcast %cst_45 : f32 to vector<8x1xf32>
    %72 = arith.mulf %70, %71 : vector<8x1xf32>
    %73 = vector.broadcast %72 : vector<8x1xf32> to vector<8x128xf32>
    %74 = arith.subf %64, %73 : vector<8x128xf32>
    %75 = vector.broadcast %4 : vector<1x128xf32> to vector<8x128xf32>
    %76 = arith.mulf %74, %75 : vector<8x128xf32>
    %77 = arith.mulf %76, %76 : vector<8x128xf32>
    %cst_46 = arith.constant dense<0.000000e+00> : vector<8xf32>
    %78 = vector.multi_reduction <add>, %77, %cst_46 [1] : vector<8x128xf32> to vector<8xf32>
    %79 = vector.shape_cast %78 : vector<8xf32> to vector<8x1xf32>
    %cst_47 = arith.constant 3.125000e-02 : f32
    %80 = vector.broadcast %cst_47 : f32 to vector<8x1xf32>
    %81 = arith.mulf %79, %80 : vector<8x1xf32>
    %cst_48 = arith.constant 9.99999974E-6 : f32
    %82 = vector.broadcast %cst_48 : f32 to vector<8x1xf32>
    %83 = arith.addf %81, %82 : vector<8x1xf32>
    %84 = math.rsqrt %83 : vector<8x1xf32>
    %85 = vector.broadcast %84 : vector<8x1xf32> to vector<8x128xf32>
    %86 = arith.mulf %76, %85 : vector<8x128xf32>
    %87 = vector.broadcast %66 : vector<1x128xf32> to vector<8x128xf32>
    %88 = arith.mulf %86, %87 : vector<8x128xf32>
    %89 = vector.broadcast %68 : vector<1x128xf32> to vector<8x128xf32>
    %90 = arith.addf %88, %89 : vector<8x128xf32>
    %c0_49 = arith.constant 0 : index
    %c0_50 = arith.constant 0 : index
    %91 = vector.load %arg14[%c0_49, %c0_50] : memref<1x128xf32, #tpu.memory_space<vmem>>, vector<1x128xf32>
    %c0_51 = arith.constant 0 : index
    %c0_52 = arith.constant 0 : index
    %92 = vector.load %arg15[%c0_51, %c0_52] : memref<1x128xf32, #tpu.memory_space<vmem>>, vector<1x128xf32>
    %cst_53 = arith.constant dense<0.000000e+00> : vector<8xf32>
    %93 = vector.multi_reduction <add>, %90, %cst_53 [1] : vector<8x128xf32> to vector<8xf32>
    %94 = vector.shape_cast %93 : vector<8xf32> to vector<8x1xf32>
    %cst_54 = arith.constant 3.125000e-02 : f32
    %95 = vector.broadcast %cst_54 : f32 to vector<8x1xf32>
    %96 = arith.mulf %94, %95 : vector<8x1xf32>
    %97 = vector.broadcast %96 : vector<8x1xf32> to vector<8x128xf32>
    %98 = arith.subf %90, %97 : vector<8x128xf32>
    %99 = vector.broadcast %4 : vector<1x128xf32> to vector<8x128xf32>
    %100 = arith.mulf %98, %99 : vector<8x128xf32>
    %101 = arith.mulf %100, %100 : vector<8x128xf32>
    %cst_55 = arith.constant dense<0.000000e+00> : vector<8xf32>
    %102 = vector.multi_reduction <add>, %101, %cst_55 [1] : vector<8x128xf32> to vector<8xf32>
    %103 = vector.shape_cast %102 : vector<8xf32> to vector<8x1xf32>
    %cst_56 = arith.constant 3.125000e-02 : f32
    %104 = vector.broadcast %cst_56 : f32 to vector<8x1xf32>
    %105 = arith.mulf %103, %104 : vector<8x1xf32>
    %cst_57 = arith.constant 9.99999974E-6 : f32
    %106 = vector.broadcast %cst_57 : f32 to vector<8x1xf32>
    %107 = arith.addf %105, %106 : vector<8x1xf32>
    %108 = math.rsqrt %107 : vector<8x1xf32>
    %109 = vector.broadcast %108 : vector<8x1xf32> to vector<8x128xf32>
    %110 = arith.mulf %100, %109 : vector<8x128xf32>
    %111 = vector.broadcast %91 : vector<1x128xf32> to vector<8x128xf32>
    %112 = arith.mulf %110, %111 : vector<8x128xf32>
    %113 = vector.broadcast %92 : vector<1x128xf32> to vector<8x128xf32>
    %114 = arith.addf %112, %113 : vector<8x128xf32>
    %115 = arith.truncf %114 : vector<8x128xf32> to vector<8x128xbf16>
    %c0_58 = arith.constant 0 : index
    %c0_59 = arith.constant 0 : index
    %116 = vector.load %arg16[%c0_58, %c0_59] : memref<128x128xbf16, #tpu.memory_space<vmem>>, vector<128x128xbf16>
    %cst_60 = arith.constant dense<0.000000e+00> : vector<8x128xf32>
    %117 = tpu.matmul %115, %116, %cst_60 {dimension_numbers = #tpu.dot_dimension_numbers<[1], [0], [0], [1], [0, 0, 1, 1], [], []>} : vector<8x128xbf16>, vector<128x128xbf16>, vector<8x128xf32> -> vector<8x128xf32>
    %c0_61 = arith.constant 0 : index
    %c0_62 = arith.constant 0 : index
    %118 = vector.load %arg17[%c0_61, %c0_62] : memref<1x128xf32, #tpu.memory_space<vmem>>, vector<1x128xf32>
    %119 = vector.broadcast %118 : vector<1x128xf32> to vector<8x128xf32>
    %120 = arith.addf %117, %119 : vector<8x128xf32>
    %c0_63 = arith.constant 0 : index
    %c0_64 = arith.constant 0 : index
    %121 = vector.load %arg3[%c0_63, %c0_64] : memref<1x128xf32, #tpu.memory_space<vmem>>, vector<1x128xf32>
    %122 = vector.shape_cast %121 : vector<1x128xf32> to vector<1x128xf32>
    %123 = vector.broadcast %122 : vector<1x128xf32> to vector<8x128xf32>
    %124 = arith.addf %123, %123 : vector<8x128xf32>
    %c0_65 = arith.constant 0 : index
    %c0_66 = arith.constant 0 : index
    %c0_67 = arith.constant 0 : index
    %125 = vector.load %arg18[%c0_65, %c0_66, %c0_67] : memref<1x1x128xf32, #tpu.memory_space<vmem>>, vector<1x1x128xf32>
    %126 = vector.shape_cast %125 : vector<1x1x128xf32> to vector<1x128xf32>
    %c0_68 = arith.constant 0 : index
    %c0_69 = arith.constant 0 : index
    %c0_70 = arith.constant 0 : index
    %127 = vector.load %arg19[%c0_68, %c0_69, %c0_70] : memref<1x1x128xf32, #tpu.memory_space<vmem>>, vector<1x1x128xf32>
    %128 = vector.shape_cast %127 : vector<1x1x128xf32> to vector<1x128xf32>
    %cst_71 = arith.constant dense<0.000000e+00> : vector<8xf32>
    %129 = vector.multi_reduction <add>, %124, %cst_71 [1] : vector<8x128xf32> to vector<8xf32>
    %130 = vector.shape_cast %129 : vector<8xf32> to vector<8x1xf32>
    %cst_72 = arith.constant 3.125000e-02 : f32
    %131 = vector.broadcast %cst_72 : f32 to vector<8x1xf32>
    %132 = arith.mulf %130, %131 : vector<8x1xf32>
    %133 = vector.broadcast %132 : vector<8x1xf32> to vector<8x128xf32>
    %134 = arith.subf %124, %133 : vector<8x128xf32>
    %135 = vector.broadcast %4 : vector<1x128xf32> to vector<8x128xf32>
    %136 = arith.mulf %134, %135 : vector<8x128xf32>
    %137 = arith.mulf %136, %136 : vector<8x128xf32>
    %cst_73 = arith.constant dense<0.000000e+00> : vector<8xf32>
    %138 = vector.multi_reduction <add>, %137, %cst_73 [1] : vector<8x128xf32> to vector<8xf32>
    %139 = vector.shape_cast %138 : vector<8xf32> to vector<8x1xf32>
    %cst_74 = arith.constant 3.125000e-02 : f32
    %140 = vector.broadcast %cst_74 : f32 to vector<8x1xf32>
    %141 = arith.mulf %139, %140 : vector<8x1xf32>
    %cst_75 = arith.constant 9.99999974E-6 : f32
    %142 = vector.broadcast %cst_75 : f32 to vector<8x1xf32>
    %143 = arith.addf %141, %142 : vector<8x1xf32>
    %144 = math.rsqrt %143 : vector<8x1xf32>
    %145 = vector.broadcast %144 : vector<8x1xf32> to vector<8x128xf32>
    %146 = arith.mulf %136, %145 : vector<8x128xf32>
    %147 = vector.broadcast %126 : vector<1x128xf32> to vector<8x128xf32>
    %148 = arith.mulf %146, %147 : vector<8x128xf32>
    %149 = vector.broadcast %128 : vector<1x128xf32> to vector<8x128xf32>
    %150 = arith.addf %148, %149 : vector<8x128xf32>
    %151 = arith.addf %150, %120 : vector<8x128xf32>
    %c0_76 = arith.constant 0 : index
    %c0_77 = arith.constant 0 : index
    %c0_78 = arith.constant 0 : index
    %152 = vector.load %arg20[%c0_76, %c0_77, %c0_78] : memref<1x1x128xf32, #tpu.memory_space<vmem>>, vector<1x1x128xf32>
    %153 = vector.shape_cast %152 : vector<1x1x128xf32> to vector<1x128xf32>
    %c0_79 = arith.constant 0 : index
    %c0_80 = arith.constant 0 : index
    %c0_81 = arith.constant 0 : index
    %154 = vector.load %arg21[%c0_79, %c0_80, %c0_81] : memref<1x1x128xf32, #tpu.memory_space<vmem>>, vector<1x1x128xf32>
    %155 = vector.shape_cast %154 : vector<1x1x128xf32> to vector<1x128xf32>
    %cst_82 = arith.constant dense<0.000000e+00> : vector<8xf32>
    %156 = vector.multi_reduction <add>, %151, %cst_82 [1] : vector<8x128xf32> to vector<8xf32>
    %157 = vector.shape_cast %156 : vector<8xf32> to vector<8x1xf32>
    %cst_83 = arith.constant 3.125000e-02 : f32
    %158 = vector.broadcast %cst_83 : f32 to vector<8x1xf32>
    %159 = arith.mulf %157, %158 : vector<8x1xf32>
    %160 = vector.broadcast %159 : vector<8x1xf32> to vector<8x128xf32>
    %161 = arith.subf %151, %160 : vector<8x128xf32>
    %162 = vector.broadcast %4 : vector<1x128xf32> to vector<8x128xf32>
    %163 = arith.mulf %161, %162 : vector<8x128xf32>
    %164 = arith.mulf %163, %163 : vector<8x128xf32>
    %cst_84 = arith.constant dense<0.000000e+00> : vector<8xf32>
    %165 = vector.multi_reduction <add>, %164, %cst_84 [1] : vector<8x128xf32> to vector<8xf32>
    %166 = vector.shape_cast %165 : vector<8xf32> to vector<8x1xf32>
    %cst_85 = arith.constant 3.125000e-02 : f32
    %167 = vector.broadcast %cst_85 : f32 to vector<8x1xf32>
    %168 = arith.mulf %166, %167 : vector<8x1xf32>
    %cst_86 = arith.constant 9.99999974E-6 : f32
    %169 = vector.broadcast %cst_86 : f32 to vector<8x1xf32>
    %170 = arith.addf %168, %169 : vector<8x1xf32>
    %171 = math.rsqrt %170 : vector<8x1xf32>
    %172 = vector.broadcast %171 : vector<8x1xf32> to vector<8x128xf32>
    %173 = arith.mulf %163, %172 : vector<8x128xf32>
    %174 = vector.broadcast %153 : vector<1x128xf32> to vector<8x128xf32>
    %175 = arith.mulf %173, %174 : vector<8x128xf32>
    %176 = vector.broadcast %155 : vector<1x128xf32> to vector<8x128xf32>
    %177 = arith.addf %175, %176 : vector<8x128xf32>
    %c0_87 = arith.constant 0 : index
    %c0_88 = arith.constant 0 : index
    %c0_89 = arith.constant 0 : index
    %178 = vector.load %arg24[%c0_87, %c0_88, %c0_89] : memref<1x128x2048xbf16, #tpu.memory_space<vmem>>, vector<1x128x2048xbf16>
    %179 = vector.shape_cast %178 : vector<1x128x2048xbf16> to vector<128x2048xbf16>
    %c0_90 = arith.constant 0 : index
    %c0_91 = arith.constant 0 : index
    %c0_92 = arith.constant 0 : index
    %180 = vector.load %arg25[%c0_90, %c0_91, %c0_92] : memref<1x1x2048xf32, #tpu.memory_space<vmem>>, vector<1x1x2048xf32>
    %181 = vector.shape_cast %180 : vector<1x1x2048xf32> to vector<1x2048xf32>
    %182 = arith.truncf %177 : vector<8x128xf32> to vector<8x128xbf16>
    %cst_93 = arith.constant dense<0.000000e+00> : vector<8x2048xf32>
    %183 = tpu.matmul %182, %179, %cst_93 {dimension_numbers = #tpu.dot_dimension_numbers<[1], [0], [0], [1], [0, 0, 1, 1], [], []>} : vector<8x128xbf16>, vector<128x2048xbf16>, vector<8x2048xf32> -> vector<8x2048xf32>
    %184 = vector.broadcast %181 : vector<1x2048xf32> to vector<8x2048xf32>
    %185 = arith.addf %183, %184 : vector<8x2048xf32>
    %cst_94 = arith.constant 0.000000e+00 : f32
    %186 = vector.broadcast %cst_94 : f32 to vector<8x2048xf32>
    %187 = arith.maximumf %185, %186 : vector<8x2048xf32>
    %c0_95 = arith.constant 0 : index
    %c0_96 = arith.constant 0 : index
    %c0_97 = arith.constant 0 : index
    %188 = vector.load %arg26[%c0_95, %c0_96, %c0_97] : memref<1x2048x128xbf16, #tpu.memory_space<vmem>>, vector<1x2048x128xbf16>
    %189 = vector.shape_cast %188 : vector<1x2048x128xbf16> to vector<2048x128xbf16>
    %c0_98 = arith.constant 0 : index
    %c0_99 = arith.constant 0 : index
    %c0_100 = arith.constant 0 : index
    %190 = vector.load %arg27[%c0_98, %c0_99, %c0_100] : memref<1x1x128xf32, #tpu.memory_space<vmem>>, vector<1x1x128xf32>
    %191 = vector.shape_cast %190 : vector<1x1x128xf32> to vector<1x128xf32>
    %192 = arith.truncf %187 : vector<8x2048xf32> to vector<8x2048xbf16>
    %cst_101 = arith.constant dense<0.000000e+00> : vector<8x128xf32>
    %193 = tpu.matmul %192, %189, %cst_101 {dimension_numbers = #tpu.dot_dimension_numbers<[1], [0], [0], [1], [0, 0, 1, 1], [], []>} : vector<8x2048xbf16>, vector<2048x128xbf16>, vector<8x128xf32> -> vector<8x128xf32>
    %194 = vector.broadcast %191 : vector<1x128xf32> to vector<8x128xf32>
    %195 = arith.addf %193, %194 : vector<8x128xf32>
    %196 = arith.addf %177, %195 : vector<8x128xf32>
    %c0_102 = arith.constant 0 : index
    %c0_103 = arith.constant 0 : index
    %c0_104 = arith.constant 0 : index
    %197 = vector.load %arg22[%c0_102, %c0_103, %c0_104] : memref<1x1x128xf32, #tpu.memory_space<vmem>>, vector<1x1x128xf32>
    %198 = vector.shape_cast %197 : vector<1x1x128xf32> to vector<1x128xf32>
    %c0_105 = arith.constant 0 : index
    %c0_106 = arith.constant 0 : index
    %c0_107 = arith.constant 0 : index
    %199 = vector.load %arg23[%c0_105, %c0_106, %c0_107] : memref<1x1x128xf32, #tpu.memory_space<vmem>>, vector<1x1x128xf32>
    %200 = vector.shape_cast %199 : vector<1x1x128xf32> to vector<1x128xf32>
    %cst_108 = arith.constant dense<0.000000e+00> : vector<8xf32>
    %201 = vector.multi_reduction <add>, %196, %cst_108 [1] : vector<8x128xf32> to vector<8xf32>
    %202 = vector.shape_cast %201 : vector<8xf32> to vector<8x1xf32>
    %cst_109 = arith.constant 3.125000e-02 : f32
    %203 = vector.broadcast %cst_109 : f32 to vector<8x1xf32>
    %204 = arith.mulf %202, %203 : vector<8x1xf32>
    %205 = vector.broadcast %204 : vector<8x1xf32> to vector<8x128xf32>
    %206 = arith.subf %196, %205 : vector<8x128xf32>
    %207 = vector.broadcast %4 : vector<1x128xf32> to vector<8x128xf32>
    %208 = arith.mulf %206, %207 : vector<8x128xf32>
    %209 = arith.mulf %208, %208 : vector<8x128xf32>
    %cst_110 = arith.constant dense<0.000000e+00> : vector<8xf32>
    %210 = vector.multi_reduction <add>, %209, %cst_110 [1] : vector<8x128xf32> to vector<8xf32>
    %211 = vector.shape_cast %210 : vector<8xf32> to vector<8x1xf32>
    %cst_111 = arith.constant 3.125000e-02 : f32
    %212 = vector.broadcast %cst_111 : f32 to vector<8x1xf32>
    %213 = arith.mulf %211, %212 : vector<8x1xf32>
    %cst_112 = arith.constant 9.99999974E-6 : f32
    %214 = vector.broadcast %cst_112 : f32 to vector<8x1xf32>
    %215 = arith.addf %213, %214 : vector<8x1xf32>
    %216 = math.rsqrt %215 : vector<8x1xf32>
    %217 = vector.broadcast %216 : vector<8x1xf32> to vector<8x128xf32>
    %218 = arith.mulf %208, %217 : vector<8x128xf32>
    %219 = vector.broadcast %198 : vector<1x128xf32> to vector<8x128xf32>
    %220 = arith.mulf %218, %219 : vector<8x128xf32>
    %221 = vector.broadcast %200 : vector<1x128xf32> to vector<8x128xf32>
    %222 = arith.addf %220, %221 : vector<8x128xf32>
    %c0_113 = arith.constant 0 : index
    %c0_114 = arith.constant 0 : index
    %223 = vector.load %arg28[%c0_113, %c0_114] : memref<1x128xf32, #tpu.memory_space<vmem>>, vector<1x128xf32>
    %c0_115 = arith.constant 0 : index
    %c0_116 = arith.constant 0 : index
    %224 = vector.load %arg29[%c0_115, %c0_116] : memref<1x128xf32, #tpu.memory_space<vmem>>, vector<1x128xf32>
    %cst_117 = arith.constant dense<0.000000e+00> : vector<8xf32>
    %225 = vector.multi_reduction <add>, %222, %cst_117 [1] : vector<8x128xf32> to vector<8xf32>
    %226 = vector.shape_cast %225 : vector<8xf32> to vector<8x1xf32>
    %cst_118 = arith.constant 3.125000e-02 : f32
    %227 = vector.broadcast %cst_118 : f32 to vector<8x1xf32>
    %228 = arith.mulf %226, %227 : vector<8x1xf32>
    %229 = vector.broadcast %228 : vector<8x1xf32> to vector<8x128xf32>
    %230 = arith.subf %222, %229 : vector<8x128xf32>
    %231 = vector.broadcast %4 : vector<1x128xf32> to vector<8x128xf32>
    %232 = arith.mulf %230, %231 : vector<8x128xf32>
    %233 = arith.mulf %232, %232 : vector<8x128xf32>
    %cst_119 = arith.constant dense<0.000000e+00> : vector<8xf32>
    %234 = vector.multi_reduction <add>, %233, %cst_119 [1] : vector<8x128xf32> to vector<8xf32>
    %235 = vector.shape_cast %234 : vector<8xf32> to vector<8x1xf32>
    %cst_120 = arith.constant 3.125000e-02 : f32
    %236 = vector.broadcast %cst_120 : f32 to vector<8x1xf32>
    %237 = arith.mulf %235, %236 : vector<8x1xf32>
    %cst_121 = arith.constant 9.99999974E-6 : f32
    %238 = vector.broadcast %cst_121 : f32 to vector<8x1xf32>
    %239 = arith.addf %237, %238 : vector<8x1xf32>
    %240 = math.rsqrt %239 : vector<8x1xf32>
    %241 = vector.broadcast %240 : vector<8x1xf32> to vector<8x128xf32>
    %242 = arith.mulf %232, %241 : vector<8x128xf32>
    %243 = vector.broadcast %223 : vector<1x128xf32> to vector<8x128xf32>
    %244 = arith.mulf %242, %243 : vector<8x128xf32>
    %245 = vector.broadcast %224 : vector<1x128xf32> to vector<8x128xf32>
    %246 = arith.addf %244, %245 : vector<8x128xf32>
    %c0_122 = arith.constant 0 : index
    %c0_123 = arith.constant 0 : index
    %247 = vector.load %arg30[%c0_122, %c0_123] : memref<128x128xbf16, #tpu.memory_space<vmem>>, vector<128x128xbf16>
    %c0_124 = arith.constant 0 : index
    %c0_125 = arith.constant 0 : index
    %248 = vector.load %arg31[%c0_124, %c0_125] : memref<1x128xf32, #tpu.memory_space<vmem>>, vector<1x128xf32>
    %249 = arith.truncf %246 : vector<8x128xf32> to vector<8x128xbf16>
    %cst_126 = arith.constant dense<0.000000e+00> : vector<8x128xf32>
    %250 = tpu.matmul %249, %247, %cst_126 {dimension_numbers = #tpu.dot_dimension_numbers<[1], [0], [0], [1], [0, 0, 1, 1], [], []>} : vector<8x128xbf16>, vector<128x128xbf16>, vector<8x128xf32> -> vector<8x128xf32>
    %251 = vector.broadcast %248 : vector<1x128xf32> to vector<8x128xf32>
    %252 = arith.addf %250, %251 : vector<8x128xf32>
    %c0_127 = arith.constant 0 : index
    %c0_128 = arith.constant 0 : index
    %253 = vector.load %arg32[%c0_127, %c0_128] : memref<8x128xf32, #tpu.memory_space<vmem>>, vector<8x128xf32>
    tpu.vector_store %arg32[%c0_127, %c0_128], %252 {strides = array<i32>} : memref<8x128xf32, #tpu.memory_space<vmem>>, vector<8x128xf32>,
    return
  }
}

</mosaic_0001>

<llo_original>
// kernel: spoter_forward.1
$region0: #{spoter_forward.1}
  #allocation0 [shape = 'u32[]', space=smem, size = 0x4, offset = 0x4, fixed_abs, tag = 'smem constant byte address 0x4 - core index']
  #allocation1 [shape = 'u32[144,128]{1,0:T(1,128)}', space=vmem, size = 0x12000, scoped, tag = 'internal scratch']
  %s0 = inlined_call_operand.smem [shape: u32[33], index: -1, kind: input, shape index: {}]
  %s1 = sld [smem:[%s0]]
  %s2 = scalar_lea.smem %s0, 1
  %s3 = sld [smem:[%s2]]
  %s4 = scalar_lea.smem %s0, 2
  %s5 = sld [smem:[%s4]]
  %s6 = scalar_lea.smem %s0, 3
  %s7 = sld [smem:[%s6]]
  %s8 = scalar_lea.smem %s0, 4
  %s9 = sld [smem:[%s8]]
  %s10 = scalar_lea.smem %s0, 5
  %s11 = sld [smem:[%s10]]
  %s12 = scalar_lea.smem %s0, 6
  %s13 = sld [smem:[%s12]]
  %s14 = scalar_lea.smem %s0, 7
  %s15 = sld [smem:[%s14]]
  %s16 = scalar_lea.smem %s0, 8
  %s17 = sld [smem:[%s16]]
  %s18 = scalar_lea.smem %s0, 9
  %s19 = sld [smem:[%s18]]
  %s20 = scalar_lea.smem %s0, 10
  %s21 = sld [smem:[%s20]]
  %s22 = scalar_lea.smem %s0, 11
  %s23 = sld [smem:[%s22]]
  %s24 = scalar_lea.smem %s0, 12
  %s25 = sld [smem:[%s24]]
  %s26 = scalar_lea.smem %s0, 13
  %s27 = sld [smem:[%s26]]
  %s28 = scalar_lea.smem %s0, 14
  %s29 = sld [smem:[%s28]]
  %s30 = scalar_lea.smem %s0, 15
  %s31 = sld [smem:[%s30]]
  %s32 = scalar_lea.smem %s0, 16
  %s33 = sld [smem:[%s32]]
  %s34 = scalar_lea.smem %s0, 17
  %s35 = sld [smem:[%s34]]
  %s36 = scalar_lea.smem %s0, 18
  %s37 = sld [smem:[%s36]]
  %s38 = scalar_lea.smem %s0, 19
  %s39 = sld [smem:[%s38]]
  %s40 = scalar_lea.smem %s0, 20
  %s41 = sld [smem:[%s40]]
  %s42 = scalar_lea.smem %s0, 21
  %s43 = sld [smem:[%s42]]
  %s44 = scalar_lea.smem %s0, 22
  %s45 = sld [smem:[%s44]]
  %s46 = scalar_lea.smem %s0, 23
  %s47 = sld [smem:[%s46]]
  %s48 = scalar_lea.smem %s0, 24
  %s49 = sld [smem:[%s48]]
  %s50 = scalar_lea.smem %s0, 25
  %s51 = sld [smem:[%s50]]
  %s52 = scalar_lea.smem %s0, 26
  %s53 = sld [smem:[%s52]]
  %s54 = scalar_lea.smem %s0, 27
  %s55 = sld [smem:[%s54]]
  %s56 = scalar_lea.smem %s0, 28
  %s57 = sld [smem:[%s56]]
  %s58 = scalar_lea.smem %s0, 29
  %s59 = sld [smem:[%s58]]
  %s60 = scalar_lea.smem %s0, 30
  %s61 = sld [smem:[%s60]]
  %s62 = scalar_lea.smem %s0, 31
  %s63 = sld [smem:[%s62]]
  %s64 = scalar_lea.smem %s0, 32
  %s65 = sld [smem:[%s64]]
  %s66 = sld [smem:[#allocation0]]
  $region154: #{spoter_forward.1} parent=0
    _
  %s68 = ssub.s32 1, %s66
  %s69 = scalar_select 0, %s68, %s66
  $region1: #{spoter_forward.1} parent=0
    #allocation2 [shape = 'u8[524288]{0}', space=vmem, size = 0x80000, scoped, tag = 'input window, operand 8, single buffered']
    #allocation3 [shape = 's32[1]{0}', space=sflag, size = 0x4, scoped, tag = 'scoped memory for spoter_forward.1']
    #allocation4 [shape = 'u8[524288]{0}', space=vmem, size = 0x80000, scoped, tag = 'input window, operand 10, single buffered']
    #allocation5 [shape = 's32[1]{0}', space=sflag, size = 0x4, scoped, tag = 'scoped memory for spoter_forward.1']
    #allocation6 [shape = 'u8[524288]{0}', space=vmem, size = 0x80000, scoped, tag = 'input window, operand 24, single buffered']
    #allocation7 [shape = 'u8[524288]{0}', space=vmem, size = 0x80000, scoped, tag = 'input window, operand 26, single buffered']
    #allocation8 [shape = 's32[1]{0}', space=sflag, size = 0x4, scoped, tag = 'scoped memory for spoter_forward.1']
    %70 = vsyncpa [#allocation3], 0
    %71 = vsyncpa [#allocation5], 0
    %72 = vsyncpa [#allocation8], 0
    // Predicated region
    $region2: #{spoter_forward.1} parent=1 // pred_check
      _
    $region3: #{spoter_forward.1} parent=1 // pred_check_branch
      %74 = sbr.rel (0) target = $region5
    $region4: #{spoter_forward.1} parent=1 // pred_region
      _
    $region5: #{spoter_forward.1} parent=1 // pred_fallthru
      _
    // Predicated region
    $region6: #{spoter_forward.1} parent=1 // pred_check
      _
    $region7: #{spoter_forward.1} parent=1 // pred_check_branch
      %76 = sbr.rel (0) target = $region9
    $region8: #{spoter_forward.1} parent=1 // pred_region
      _
    $region9: #{spoter_forward.1} parent=1 // pred_fallthru
      _
    // Predicated region
    $region10: #{spoter_forward.1} parent=1 // pred_check
      _
    $region11: #{spoter_forward.1} parent=1 // pred_check_branch
      %78 = sbr.rel (0) target = $region13
    $region12: #{spoter_forward.1} parent=1 // pred_region
      _
    $region13: #{spoter_forward.1} parent=1 // pred_fallthru
      _
    // Predicated region
    $region14: #{spoter_forward.1} parent=1 // pred_check
      _
    $region15: #{spoter_forward.1} parent=1 // pred_check_branch
      %80 = sbr.rel (0) target = $region17
    $region16: #{spoter_forward.1} parent=1 // pred_region
      _
    $region17: #{spoter_forward.1} parent=1 // pred_fallthru
      _
    // Predicated region
    $region18: #{spoter_forward.1} parent=1 // pred_check
      _
    $region19: #{spoter_forward.1} parent=1 // pred_check_branch
      %82 = sbr.rel (0) target = $region21
    $region20: #{spoter_forward.1} parent=1 // pred_region
      _
    $region21: #{spoter_forward.1} parent=1 // pred_fallthru
      _
    // Predicated region
    $region22: #{spoter_forward.1} parent=1 // pred_check
      _
    $region23: #{spoter_forward.1} parent=1 // pred_check_branch
      %84 = sbr.rel (0) target = $region25
    $region24: #{spoter_forward.1} parent=1 // pred_region
      _
    $region25: #{spoter_forward.1} parent=1 // pred_fallthru
      _
    // Predicated region
    $region26: #{spoter_forward.1} parent=1 // pred_check
      _
    $region27: #{spoter_forward.1} parent=1 // pred_check_branch
      %86 = sbr.rel (0) target = $region29
    $region28: #{spoter_forward.1} parent=1 // pred_region
      _
    $region29: #{spoter_forward.1} parent=1 // pred_fallthru
      _
    // Predicated region
    $region30: #{spoter_forward.1} parent=1 // pred_check
      _
    $region31: #{spoter_forward.1} parent=1 // pred_check_branch
      %88 = sbr.rel (0) target = $region33
    $region32: #{spoter_forward.1} parent=1 // pred_region
      _
    $region33: #{spoter_forward.1} parent=1 // pred_fallthru
      _
    // Predicated region
    $region34: #{spoter_forward.1} parent=1 // pred_check
      _
    $region35: #{spoter_forward.1} parent=1 // pred_check_branch
      %90 = sbr.rel (0) target = $region37
    $region36: #{spoter_forward.1} parent=1 // pred_region
      %s92 = ssub.s32 16384, 16384
      %93 = vsyncadd [#allocation3], %s92
      %s94 = sshll.u32 [#allocation2], 4
      %s95 = int_to_ptr.vmem [resolvable:$true] %s94
      %100 = dma.hbm_to_vmem [thread:$0]  %s17, 16384, %s95, [#allocation3], 1024, 1024, 64
    $region37: #{spoter_forward.1} parent=1 // pred_fallthru
      _
    // Predicated region
    $region38: #{spoter_forward.1} parent=1 // pred_check
      _
    $region39: #{spoter_forward.1} parent=1 // pred_check_branch
      %102 = sbr.rel (0) target = $region41
    $region40: #{spoter_forward.1} parent=1 // pred_region
      _
    $region41: #{spoter_forward.1} parent=1 // pred_fallthru
      _
    // Predicated region
    $region42: #{spoter_forward.1} parent=1 // pred_check
      _
    $region43: #{spoter_forward.1} parent=1 // pred_check_branch
      %104 = sbr.rel (0) target = $region45
    $region44: #{spoter_forward.1} parent=1 // pred_region
      %s106 = ssub.s32 16384, 16384
      %107 = vsyncadd [#allocation5], %s106
      %s108 = sshll.u32 [#allocation4], 4
      %s109 = int_to_ptr.vmem [resolvable:$true] %s108
      %114 = dma.hbm_to_vmem [thread:$0]  %s21, 16384, %s109, [#allocation5], 64, 64, 4
    $region45: #{spoter_forward.1} parent=1 // pred_fallthru
      _
    // Predicated region
    $region46: #{spoter_forward.1} parent=1 // pred_check
      _
    $region47: #{spoter_forward.1} parent=1 // pred_check_branch
      %116 = sbr.rel (0) target = $region49
    $region48: #{spoter_forward.1} parent=1 // pred_region
      _
    $region49: #{spoter_forward.1} parent=1 // pred_fallthru
      _
    // Predicated region
    $region50: #{spoter_forward.1} parent=1 // pred_check
      _
    $region51: #{spoter_forward.1} parent=1 // pred_check_branch
      %118 = sbr.rel (0) target = $region53
    $region52: #{spoter_forward.1} parent=1 // pred_region
      _
    $region53: #{spoter_forward.1} parent=1 // pred_fallthru
      _
    // Predicated region
    $region54: #{spoter_forward.1} parent=1 // pred_check
      _
    $region55: #{spoter_forward.1} parent=1 // pred_check_branch
      %120 = sbr.rel (0) target = $region57
    $region56: #{spoter_forward.1} parent=1 // pred_region
      _
    $region57: #{spoter_forward.1} parent=1 // pred_fallthru
      _
    // Predicated region
    $region58: #{spoter_forward.1} parent=1 // pred_check
      _
    $region59: #{spoter_forward.1} parent=1 // pred_check_branch
      %122 = sbr.rel (0) target = $region61
    $region60: #{spoter_forward.1} parent=1 // pred_region
      _
    $region61: #{spoter_forward.1} parent=1 // pred_fallthru
      _
    // Predicated region
    $region62: #{spoter_forward.1} parent=1 // pred_check
      _
    $region63: #{spoter_forward.1} parent=1 // pred_check_branch
      %124 = sbr.rel (0) target = $region65
    $region64: #{spoter_forward.1} parent=1 // pred_region
      _
    $region65: #{spoter_forward.1} parent=1 // pred_fallthru
      _
    // Predicated region
    $region66: #{spoter_forward.1} parent=1 // pred_check
      _
    $region67: #{spoter_forward.1} parent=1 // pred_check_branch
      %126 = sbr.rel (0) target = $region69
    $region68: #{spoter_forward.1} parent=1 // pred_region
      _
    $region69: #{spoter_forward.1} parent=1 // pred_fallthru
      _
    // Predicated region
    $region70: #{spoter_forward.1} parent=1 // pred_check
      _
    $region71: #{spoter_forward.1} parent=1 // pred_check_branch
      %128 = sbr.rel (0) target = $region73
    $region72: #{spoter_forward.1} parent=1 // pred_region
      _
    $region73: #{spoter_forward.1} parent=1 // pred_fallthru
      _
    // Predicated region
    $region74: #{spoter_forward.1} parent=1 // pred_check
      _
    $region75: #{spoter_forward.1} parent=1 // pred_check_branch
      %130 = sbr.rel (0) target = $region77
    $region76: #{spoter_forward.1} parent=1 // pred_region
      _
    $region77: #{spoter_forward.1} parent=1 // pred_fallthru
      _
    // Predicated region
    $region78: #{spoter_forward.1} parent=1 // pred_check
      _
    $region79: #{spoter_forward.1} parent=1 // pred_check_branch
      %132 = sbr.rel (0) target = $region81
    $region80: #{spoter_forward.1} parent=1 // pred_region
      _
    $region81: #{spoter_forward.1} parent=1 // pred_fallthru
      _
    // Predicated region
    $region82: #{spoter_forward.1} parent=1 // pred_check
      _
    $region83: #{spoter_forward.1} parent=1 // pred_check_branch
      %134 = sbr.rel (0) target = $region85
    $region84: #{spoter_forward.1} parent=1 // pred_region
      _
    $region85: #{spoter_forward.1} parent=1 // pred_fallthru
      _
    // Predicated region
    $region86: #{spoter_forward.1} parent=1 // pred_check
      _
    $region87: #{spoter_forward.1} parent=1 // pred_check_branch
      %136 = sbr.rel (0) target = $region89
    $region88: #{spoter_forward.1} parent=1 // pred_region
      _
    $region89: #{spoter_forward.1} parent=1 // pred_fallthru
      _
    // Predicated region
    $region90: #{spoter_forward.1} parent=1 // pred_check
      _
    $region91: #{spoter_forward.1} parent=1 // pred_check_branch
      %138 = sbr.rel (0) target = $region93
    $region92: #{spoter_forward.1} parent=1 // pred_region
      _
    $region93: #{spoter_forward.1} parent=1 // pred_fallthru
      _
    // Predicated region
    $region94: #{spoter_forward.1} parent=1 // pred_check
      _
    $region95: #{spoter_forward.1} parent=1 // pred_check_branch
      %140 = sbr.rel (0) target = $region97
    $region96: #{spoter_forward.1} parent=1 // pred_region
      _
    $region97: #{spoter_forward.1} parent=1 // pred_fallthru
      _
    // Predicated region
    $region98: #{spoter_forward.1} parent=1 // pred_check
      _
    $region99: #{spoter_forward.1} parent=1 // pred_check_branch
      %142 = sbr.rel (0) target = $region101
    $region100: #{spoter_forward.1} parent=1 // pred_region
      %s144 = ssub.s32 16384, 16384
      %145 = vsyncadd [#allocation5], %s144
      %s146 = sshll.u32 [#allocation6], 4
      %s147 = int_to_ptr.vmem [resolvable:$true] %s146
      %152 = dma.hbm_to_vmem [thread:$0]  %s49, 16384, %s147, [#allocation5], 1024, 1024, 64
    $region101: #{spoter_forward.1} parent=1 // pred_fallthru
      _
    // Predicated region
    $region102: #{spoter_forward.1} parent=1 // pred_check
      _
    $region103: #{spoter_forward.1} parent=1 // pred_check_branch
      %154 = sbr.rel (0) target = $region105
    $region104: #{spoter_forward.1} parent=1 // pred_region
      _
    $region105: #{spoter_forward.1} parent=1 // pred_fallthru
      _
    // Predicated region
    $region106: #{spoter_forward.1} parent=1 // pred_check
      _
    $region107: #{spoter_forward.1} parent=1 // pred_check_branch
      %156 = sbr.rel (0) target = $region109
    $region108: #{spoter_forward.1} parent=1 // pred_region
      %s158 = ssub.s32 16384, 16384
      %159 = vsyncadd [#allocation8], %s158
      %s160 = sshll.u32 [#allocation7], 4
      %s161 = int_to_ptr.vmem [resolvable:$true] %s160
      %166 = dma.hbm_to_vmem [thread:$0]  %s53, 16384, %s161, [#allocation8], 64, 64, 4
    $region109: #{spoter_forward.1} parent=1 // pred_fallthru
      _
    // Predicated region
    $region110: #{spoter_forward.1} parent=1 // pred_check
      _
    $region111: #{spoter_forward.1} parent=1 // pred_check_branch
      %168 = sbr.rel (0) target = $region113
    $region112: #{spoter_forward.1} parent=1 // pred_region
      _
    $region113: #{spoter_forward.1} parent=1 // pred_fallthru
      _
    // Predicated region
    $region114: #{spoter_forward.1} parent=1 // pred_check
      _
    $region115: #{spoter_forward.1} parent=1 // pred_check_branch
      %170 = sbr.rel (0) target = $region117
    $region116: #{spoter_forward.1} parent=1 // pred_region
      _
    $region117: #{spoter_forward.1} parent=1 // pred_fallthru
      _
    // Predicated region
    $region118: #{spoter_forward.1} parent=1 // pred_check
      _
    $region119: #{spoter_forward.1} parent=1 // pred_check_branch
      %172 = sbr.rel (0) target = $region121
    $region120: #{spoter_forward.1} parent=1 // pred_region
      _
    $region121: #{spoter_forward.1} parent=1 // pred_fallthru
      _
    // Predicated region
    $region122: #{spoter_forward.1} parent=1 // pred_check
      _
    $region123: #{spoter_forward.1} parent=1 // pred_check_branch
      %174 = sbr.rel (0) target = $region125
    $region124: #{spoter_forward.1} parent=1 // pred_region
      _
    $region125: #{spoter_forward.1} parent=1 // pred_fallthru
      _
    // Predicated region
    $region126: #{spoter_forward.1} parent=1 // pred_check
      _
    $region127: #{spoter_forward.1} parent=1 // pred_check_branch
      %176 = sbr.rel (0) target = $region129
    $region128: #{spoter_forward.1} parent=1 // pred_region
      _
    $region129: #{spoter_forward.1} parent=1 // pred_fallthru
      _
    // Predicated region
    $region130: #{spoter_forward.1} parent=1 // pred_check
      _
    $region131: #{spoter_forward.1} parent=1 // pred_check_branch
      %178 = sbr.rel (0) target = $region133
    $region132: #{spoter_forward.1} parent=1 // pred_region
      %179 = dma.done [#allocation3], 16384
    $region133: #{spoter_forward.1} parent=1 // pred_fallthru
      _
    // Predicated region
    $region134: #{spoter_forward.1} parent=1 // pred_check
      _
    $region135: #{spoter_forward.1} parent=1 // pred_check_branch
      %181 = sbr.rel (0) target = $region137
    $region136: #{spoter_forward.1} parent=1 // pred_region
      %182 = dma.done [#allocation5], 16384
    $region137: #{spoter_forward.1} parent=1 // pred_fallthru
      _
    // Predicated region
    $region138: #{spoter_forward.1} parent=1 // pred_check
      _
    $region139: #{spoter_forward.1} parent=1 // pred_check_branch
      %184 = sbr.rel (0) target = $region141
    $region140: #{spoter_forward.1} parent=1 // pred_region
      %185 = dma.done [#allocation5], 16384
    $region141: #{spoter_forward.1} parent=1 // pred_fallthru
      _
    // Predicated region
    $region142: #{spoter_forward.1} parent=1 // pred_check
      _
    $region143: #{spoter_forward.1} parent=1 // pred_check_branch
      %187 = sbr.rel (0) target = $region145
    $region144: #{spoter_forward.1} parent=1 // pred_region
      %188 = dma.done [#allocation8], 16384
    $region145: #{spoter_forward.1} parent=1 // pred_fallthru
      _
    %v190 = vlaneseq
    %v191 = vand.u32 %v190, 127
    %vm192 = vcmp.lt.s32.totalorder %v191, 32
    %v193 = vsel %vm192, 1, 0
    %v194 = vcvt.s32.f32 %v193
    %v195 = vld [vmem:[%s1] sm:$0xff]
    %v196 = vld [vmem:[%s1 + $0x8] sm:$0xff]
    %v197 = vld [vmem:[%s1 + $0x10] sm:$0xff]
    %v198 = vld [vmem:[%s1 + $0x18] sm:$0xf]
    %v199 = vld [vmem:[%s3] sm:$0xf]
    %v200 = vld [vmem:[%s3 + $0x4] sm:$0xf]
    %v201 = vld [vmem:[%s3 + $0x8] sm:$0xf]
    %v202 = vld [vmem:[%s3 + $0xc] sm:$0xf]
    %v203 = vld [vmem:[%s3 + $0x10] sm:$0xf]
    %v204 = vld [vmem:[%s3 + $0x14] sm:$0xf]
    %v205 = vld [vmem:[%s3 + $0x18] sm:$0xf]
    %v206 = vld [vmem:[%s3 + $0x1c] sm:$0xf]
    %v207 = vld [vmem:[%s3 + $0x20] sm:$0xf]
    %v208 = vld [vmem:[%s3 + $0x24] sm:$0xf]
    %v209 = vld [vmem:[%s3 + $0x28] sm:$0xf]
    %v210 = vld [vmem:[%s3 + $0x2c] sm:$0xf]
    %v211 = vld [vmem:[%s3 + $0x30] sm:$0xf]
    %v212 = vld [vmem:[%s3 + $0x34] sm:$0xf]
    %v213 = vld [vmem:[%s3 + $0x38] sm:$0xf]
    %v214 = vld [vmem:[%s3 + $0x3c] sm:$0xf]
    %v215 = vld [vmem:[%s3 + $0x40] sm:$0xf]
    %v216 = vld [vmem:[%s3 + $0x44] sm:$0xf]
    %v217 = vld [vmem:[%s3 + $0x48] sm:$0xf]
    %v218 = vld [vmem:[%s3 + $0x4c] sm:$0xf]
    %v219 = vld [vmem:[%s3 + $0x50] sm:$0xf]
    %v220 = vld [vmem:[%s3 + $0x54] sm:$0xf]
    %v221 = vld [vmem:[%s3 + $0x58] sm:$0xf]
    %v222 = vld [vmem:[%s3 + $0x5c] sm:$0xf]
    %v223 = vld [vmem:[%s3 + $0x60] sm:$0xf]
    %v224 = vld [vmem:[%s3 + $0x64] sm:$0xf]
    %v225 = vld [vmem:[%s3 + $0x68] sm:$0xf]
    %v226 = vld [vmem:[%s3 + $0x6c] sm:$0xf]
    %v227 = vld [vmem:[%s3 + $0x70] sm:$0xf]
    %v228 = vld [vmem:[%s3 + $0x74] sm:$0xf]
    %v229 = vld [vmem:[%s3 + $0x78] sm:$0xf]
    %v230 = vld [vmem:[%s3 + $0x7c] sm:$0xf]
    %v231 = vld [vmem:[%s3 + $0x80] sm:$0xf]
    %v232 = vld [vmem:[%s3 + $0x84] sm:$0xf]
    %v233 = vld [vmem:[%s3 + $0x88] sm:$0xf]
    %v234 = vld [vmem:[%s3 + $0x8c] sm:$0xf]
    %v235 = vld [vmem:[%s3 + $0x90] sm:$0xf]
    %v236 = vld [vmem:[%s3 + $0x94] sm:$0xf]
    %v237 = vld [vmem:[%s3 + $0x98] sm:$0xf]
    %v238 = vld [vmem:[%s3 + $0x9c] sm:$0xf]
    %v239 = vld [vmem:[%s3 + $0xa0] sm:$0xf]
    %v240 = vld [vmem:[%s3 + $0xa4] sm:$0xf]
    %v241 = vld [vmem:[%s3 + $0xa8] sm:$0xf]
    %v242 = vld [vmem:[%s3 + $0xac] sm:$0xf]
    %v243 = vld [vmem:[%s3 + $0xb0] sm:$0xf]
    %v244 = vld [vmem:[%s3 + $0xb4] sm:$0xf]
    %v245 = vld [vmem:[%s3 + $0xb8] sm:$0xf]
    %v246 = vld [vmem:[%s3 + $0xbc] sm:$0xf]
    %v247 = vld [vmem:[%s3 + $0xc0] sm:$0xf]
    %v248 = vld [vmem:[%s3 + $0xc4] sm:$0xf]
    %v249 = vld [vmem:[%s3 + $0xc8] sm:$0xf]
    %v250 = vld [vmem:[%s3 + $0xcc] sm:$0xf]
    %v251 = vld [vmem:[%s3 + $0xd0] sm:$0xf]
    %v252 = vld [vmem:[%s3 + $0xd4] sm:$0xf]
    %v253 = vld [vmem:[%s3 + $0xd8] sm:$0xf]
    %v254 = vld [vmem:[%s3 + $0xdc] sm:$0xf]
    %v255 = vld [vmem:[%s3 + $0xe0] sm:$0xf]
    %v256 = vld [vmem:[%s3 + $0xe4] sm:$0xf]
    %v257 = vld [vmem:[%s3 + $0xe8] sm:$0xf]
    %v258 = vld [vmem:[%s3 + $0xec] sm:$0xf]
    %v259 = vld [vmem:[%s3 + $0xf0] sm:$0xf]
    %v260 = vld [vmem:[%s3 + $0xf4] sm:$0xf]
    %v261 = vld [vmem:[%s3 + $0xf8] sm:$0xf]
    %v262 = vld [vmem:[%s3 + $0xfc] sm:$0xf]
    %v263 = vld [vmem:[%s3 + $0x100] sm:$0xf]
    %v264 = vld [vmem:[%s3 + $0x104] sm:$0xf]
    %v265 = vld [vmem:[%s3 + $0x108] sm:$0xf]
    %v266 = vld [vmem:[%s3 + $0x10c] sm:$0xf]
    %v267 = vld [vmem:[%s3 + $0x110] sm:$0xf]
    %v268 = vld [vmem:[%s3 + $0x114] sm:$0xf]
    %v269 = vld [vmem:[%s3 + $0x118] sm:$0xf]
    %v270 = vld [vmem:[%s3 + $0x11c] sm:$0xf]
    %v271 = vld [vmem:[%s3 + $0x120] sm:$0xf]
    %v272 = vld [vmem:[%s3 + $0x124] sm:$0xf]
    %v273 = vld [vmem:[%s3 + $0x128] sm:$0xf]
    %v274 = vld [vmem:[%s3 + $0x12c] sm:$0xf]
    %v275 = vld [vmem:[%s3 + $0x130] sm:$0xf]
    %v276 = vld [vmem:[%s3 + $0x134] sm:$0xf]
    %v277 = vld [vmem:[%s3 + $0x138] sm:$0xf]
    %v278 = vld [vmem:[%s3 + $0x13c] sm:$0xf]
    %v279 = vld [vmem:[%s3 + $0x140] sm:$0xf]
    %v280 = vld [vmem:[%s3 + $0x144] sm:$0xf]
    %v281 = vld [vmem:[%s3 + $0x148] sm:$0xf]
    %v282 = vld [vmem:[%s3 + $0x14c] sm:$0xf]
    %v283 = vld [vmem:[%s3 + $0x150] sm:$0xf]
    %v284 = vld [vmem:[%s3 + $0x154] sm:$0xf]
    %v285 = vld [vmem:[%s3 + $0x158] sm:$0xf]
    %v286 = vld [vmem:[%s3 + $0x15c] sm:$0xf]
    %v287 = vld [vmem:[%s3 + $0x160] sm:$0xf]
    %v288 = vld [vmem:[%s3 + $0x164] sm:$0xf]
    %v289 = vld [vmem:[%s3 + $0x168] sm:$0xf]
    %v290 = vld [vmem:[%s3 + $0x16c] sm:$0xf]
    %v291 = vld [vmem:[%s3 + $0x170] sm:$0xf]
    %v292 = vld [vmem:[%s3 + $0x174] sm:$0xf]
    %v293 = vld [vmem:[%s3 + $0x178] sm:$0xf]
    %v294 = vld [vmem:[%s3 + $0x17c] sm:$0xf]
    %v295 = vld [vmem:[%s3 + $0x180] sm:$0xf]
    %v296 = vld [vmem:[%s3 + $0x184] sm:$0xf]
    %v297 = vld [vmem:[%s3 + $0x188] sm:$0xf]
    %v298 = vld [vmem:[%s3 + $0x18c] sm:$0xf]
    %v299 = vld [vmem:[%s3 + $0x190] sm:$0xf]
    %v300 = vld [vmem:[%s3 + $0x194] sm:$0xf]
    %v301 = vld [vmem:[%s3 + $0x198] sm:$0xf]
    %v302 = vld [vmem:[%s3 + $0x19c] sm:$0xf]
    %v303 = vld [vmem:[%s3 + $0x1a0] sm:$0xf]
    %v304 = vld [vmem:[%s3 + $0x1a4] sm:$0xf]
    %v305 = vld [vmem:[%s3 + $0x1a8] sm:$0xf]
    %v306 = vld [vmem:[%s3 + $0x1ac] sm:$0xf]
    %v307 = vld [vmem:[%s3 + $0x1b0] sm:$0xf]
    %v308 = vld [vmem:[%s3 + $0x1b4] sm:$0xf]
    %v309 = vld [vmem:[%s3 + $0x1b8] sm:$0xf]
    %v310 = vld [vmem:[%s3 + $0x1bc] sm:$0xf]
    %v311 = vld [vmem:[%s5] sm:$0x1]
    %v313 = vlaneseq
    %v314 = vshrl.u32 %v313, 7
    %v315 = vsub.s32 0, %v314
    %v316 = vrot.slane %v311, %v315
    %v322 = vunpack.c.l.b16 %v195
    %v323 = vunpack.c.h.b16 %v195
    %v324 = vunpack.c.l.b16 %v196
    %v325 = vunpack.c.h.b16 %v196
    %v326 = vunpack.c.l.b16 %v197
    %v327 = vunpack.c.h.b16 %v197
    %v328 = vunpack.c.l.b16 %v198
    %v329 = vpack.c.b16 %v322, %v322
    %v330 = vpack.c.b16 %v323, %v323
    %v331 = vpack.c.b16 %v324, %v324
    %v332 = vpack.c.b16 %v325, %v325
    %v333 = vpack.c.b16 %v326, %v326
    %v334 = vpack.c.b16 %v327, %v327
    %v335 = vpack.c.b16 %v328, %v328
    %v455 = vunpack.c.l.b16 %v199
    %v456 = vunpack.c.l.b16 %v200
    %v457 = vunpack.c.l.b16 %v201
    %v458 = vunpack.c.l.b16 %v202
    %v459 = vunpack.c.l.b16 %v203
    %v460 = vunpack.c.l.b16 %v204
    %v461 = vunpack.c.l.b16 %v205
    %v462 = vunpack.c.l.b16 %v206
    %v463 = vunpack.c.l.b16 %v207
    %v464 = vunpack.c.l.b16 %v208
    %v465 = vunpack.c.l.b16 %v209
    %v466 = vunpack.c.l.b16 %v210
    %v467 = vunpack.c.l.b16 %v211
    %v468 = vunpack.c.l.b16 %v212
    %v469 = vunpack.c.l.b16 %v213
    %v470 = vunpack.c.l.b16 %v214
    %v471 = vunpack.c.l.b16 %v215
    %v472 = vunpack.c.l.b16 %v216
    %v473 = vunpack.c.l.b16 %v217
    %v474 = vunpack.c.l.b16 %v218
    %v475 = vunpack.c.l.b16 %v219
    %v476 = vunpack.c.l.b16 %v220
    %v477 = vunpack.c.l.b16 %v221
    %v478 = vunpack.c.l.b16 %v222
    %v479 = vunpack.c.l.b16 %v223
    %v480 = vunpack.c.l.b16 %v224
    %v481 = vunpack.c.l.b16 %v225
    %v482 = vunpack.c.l.b16 %v226
    %v483 = vunpack.c.l.b16 %v227
    %v484 = vunpack.c.l.b16 %v228
    %v485 = vunpack.c.l.b16 %v229
    %v486 = vunpack.c.l.b16 %v230
    %v487 = vunpack.c.l.b16 %v231
    %v488 = vunpack.c.l.b16 %v232
    %v489 = vunpack.c.l.b16 %v233
    %v490 = vunpack.c.l.b16 %v234
    %v491 = vunpack.c.l.b16 %v235
    %v492 = vunpack.c.l.b16 %v236
    %v493 = vunpack.c.l.b16 %v237
    %v494 = vunpack.c.l.b16 %v238
    %v495 = vunpack.c.l.b16 %v239
    %v496 = vunpack.c.l.b16 %v240
    %v497 = vunpack.c.l.b16 %v241
    %v498 = vunpack.c.l.b16 %v242
    %v499 = vunpack.c.l.b16 %v243
    %v500 = vunpack.c.l.b16 %v244
    %v501 = vunpack.c.l.b16 %v245
    %v502 = vunpack.c.l.b16 %v246
    %v503 = vunpack.c.l.b16 %v247
    %v504 = vunpack.c.l.b16 %v248
    %v505 = vunpack.c.l.b16 %v249
    %v506 = vunpack.c.l.b16 %v250
    %v507 = vunpack.c.l.b16 %v251
    %v508 = vunpack.c.l.b16 %v252
    %v509 = vunpack.c.l.b16 %v253
    %v510 = vunpack.c.l.b16 %v254
    %v511 = vunpack.c.l.b16 %v255
    %v512 = vunpack.c.l.b16 %v256
    %v513 = vunpack.c.l.b16 %v257
    %v514 = vunpack.c.l.b16 %v258
    %v515 = vunpack.c.l.b16 %v259
    %v516 = vunpack.c.l.b16 %v260
    %v517 = vunpack.c.l.b16 %v261
    %v518 = vunpack.c.l.b16 %v262
    %v519 = vunpack.c.l.b16 %v263
    %v520 = vunpack.c.l.b16 %v264
    %v521 = vunpack.c.l.b16 %v265
    %v522 = vunpack.c.l.b16 %v266
    %v523 = vunpack.c.l.b16 %v267
    %v524 = vunpack.c.l.b16 %v268
    %v525 = vunpack.c.l.b16 %v269
    %v526 = vunpack.c.l.b16 %v270
    %v527 = vunpack.c.l.b16 %v271
    %v528 = vunpack.c.l.b16 %v272
    %v529 = vunpack.c.l.b16 %v273
    %v530 = vunpack.c.l.b16 %v274
    %v531 = vunpack.c.l.b16 %v275
    %v532 = vunpack.c.l.b16 %v276
    %v533 = vunpack.c.l.b16 %v277
    %v534 = vunpack.c.l.b16 %v278
    %v535 = vunpack.c.l.b16 %v279
    %v536 = vunpack.c.l.b16 %v280
    %v537 = vunpack.c.l.b16 %v281
    %v538 = vunpack.c.l.b16 %v282
    %v539 = vunpack.c.l.b16 %v283
    %v540 = vunpack.c.l.b16 %v284
    %v541 = vunpack.c.l.b16 %v285
    %v542 = vunpack.c.l.b16 %v286
    %v543 = vunpack.c.l.b16 %v287
    %v544 = vunpack.c.l.b16 %v288
    %v545 = vunpack.c.l.b16 %v289
    %v546 = vunpack.c.l.b16 %v290
    %v547 = vunpack.c.l.b16 %v291
    %v548 = vunpack.c.l.b16 %v292
    %v549 = vunpack.c.l.b16 %v293
    %v550 = vunpack.c.l.b16 %v294
    %v551 = vunpack.c.l.b16 %v295
    %v552 = vunpack.c.l.b16 %v296
    %v553 = vunpack.c.l.b16 %v297
    %v554 = vunpack.c.l.b16 %v298
    %v555 = vunpack.c.l.b16 %v299
    %v556 = vunpack.c.l.b16 %v300
    %v557 = vunpack.c.l.b16 %v301
    %v558 = vunpack.c.l.b16 %v302
    %v559 = vunpack.c.l.b16 %v303
    %v560 = vunpack.c.l.b16 %v304
    %v561 = vunpack.c.l.b16 %v305
    %v562 = vunpack.c.l.b16 %v306
    %v563 = vunpack.c.l.b16 %v307
    %v564 = vunpack.c.l.b16 %v308
    %v565 = vunpack.c.l.b16 %v309
    %v566 = vunpack.c.l.b16 %v310
    %v567 = vpack.c.b16 %v456, %v455
    %v568 = vpack.c.b16 %v458, %v457
    %v569 = vpack.c.b16 %v460, %v459
    %v570 = vpack.c.b16 %v462, %v461
    %v571 = vpack.c.b16 %v464, %v463
    %v572 = vpack.c.b16 %v466, %v465
    %v573 = vpack.c.b16 %v468, %v467
    %v574 = vpack.c.b16 %v470, %v469
    %v575 = vpack.c.b16 %v472, %v471
    %v576 = vpack.c.b16 %v474, %v473
    %v577 = vpack.c.b16 %v476, %v475
    %v578 = vpack.c.b16 %v478, %v477
    %v579 = vpack.c.b16 %v480, %v479
    %v580 = vpack.c.b16 %v482, %v481
    %v581 = vpack.c.b16 %v484, %v483
    %v582 = vpack.c.b16 %v486, %v485
    %v583 = vpack.c.b16 %v488, %v487
    %v584 = vpack.c.b16 %v490, %v489
    %v585 = vpack.c.b16 %v492, %v491
    %v586 = vpack.c.b16 %v494, %v493
    %v587 = vpack.c.b16 %v496, %v495
    %v588 = vpack.c.b16 %v498, %v497
    %v589 = vpack.c.b16 %v500, %v499
    %v590 = vpack.c.b16 %v502, %v501
    %v591 = vpack.c.b16 %v504, %v503
    %v592 = vpack.c.b16 %v506, %v505
    %v593 = vpack.c.b16 %v508, %v507
    %v594 = vpack.c.b16 %v510, %v509
    %v595 = vpack.c.b16 %v512, %v511
    %v596 = vpack.c.b16 %v514, %v513
    %v597 = vpack.c.b16 %v516, %v515
    %v598 = vpack.c.b16 %v518, %v517
    %v599 = vpack.c.b16 %v520, %v519
    %v600 = vpack.c.b16 %v522, %v521
    %v601 = vpack.c.b16 %v524, %v523
    %v602 = vpack.c.b16 %v526, %v525
    %v603 = vpack.c.b16 %v528, %v527
    %v604 = vpack.c.b16 %v530, %v529
    %v605 = vpack.c.b16 %v532, %v531
    %v606 = vpack.c.b16 %v534, %v533
    %v607 = vpack.c.b16 %v536, %v535
    %v608 = vpack.c.b16 %v538, %v537
    %v609 = vpack.c.b16 %v540, %v539
    %v610 = vpack.c.b16 %v542, %v541
    %v611 = vpack.c.b16 %v544, %v543
    %v612 = vpack.c.b16 %v546, %v545
    %v613 = vpack.c.b16 %v548, %v547
    %v614 = vpack.c.b16 %v550, %v549
    %v615 = vpack.c.b16 %v552, %v551
    %v616 = vpack.c.b16 %v554, %v553
    %v617 = vpack.c.b16 %v556, %v555
    %v618 = vpack.c.b16 %v558, %v557
    %v619 = vpack.c.b16 %v560, %v559
    %v620 = vpack.c.b16 %v562, %v561
    %v621 = vpack.c.b16 %v564, %v563
    %v622 = vpack.c.b16 %v566, %v565
    %679 = vmatprep.subr.bf16.mxu0 0
    %680 = vmatpush1.bf16.msra.mxu0 %v574
    %681 = vmatprep.subr.bf16.mxu0 0
    %682 = vmatpush1.bf16.msra.mxu0 %v573
    %683 = vmatprep.subr.bf16.mxu0 0
    %684 = vmatpush1.bf16.msra.mxu0 %v572
    %685 = vmatprep.subr.bf16.mxu0 0
    %686 = vmatpush1.bf16.msra.mxu0 %v571
    %687 = vmatprep.subr.bf16.mxu0 0
    %688 = vmatpush1.bf16.msra.mxu0 %v570
    %689 = vmatprep.subr.bf16.mxu0 0
    %690 = vmatpush1.bf16.msra.mxu0 %v569
    %691 = vmatprep.subr.bf16.mxu0 0
    %692 = vmatpush1.bf16.msra.mxu0 %v568
    %693 = vmatprep.subr.bf16.mxu0 0
    %694 = vmatpush1.bf16.msra.mxu0 %v567
    %695 = vmatprep.subr.bf16.mxu0 0
    %696 = vmatpush2.bf16.msra.mxu0 %v582
    %697 = vmatprep.subr.bf16.mxu0 0
    %698 = vmatpush2.bf16.msra.mxu0 %v581
    %699 = vmatprep.subr.bf16.mxu0 0
    %700 = vmatpush2.bf16.msra.mxu0 %v580
    %701 = vmatprep.subr.bf16.mxu0 0
    %702 = vmatpush2.bf16.msra.mxu0 %v579
    %703 = vmatprep.subr.bf16.mxu0 0
    %704 = vmatpush2.bf16.msra.mxu0 %v578
    %705 = vmatprep.subr.bf16.mxu0 0
    %706 = vmatpush2.bf16.msra.mxu0 %v577
    %707 = vmatprep.subr.bf16.mxu0 0
    %708 = vmatpush2.bf16.msra.mxu0 %v576
    %709 = vmatprep.subr.bf16.mxu0 0
    %710 = vmatpush2.bf16.msra.mxu0 %v575
    %711 = vmatprep.mubr.bf16.mxu0 %v330
    %712 = vmatmul.mubr.bf16.gmra.mxu0 %v329
    %v713 = vpop.f32.mrf.mxu0
    %v714 = vadd.f32 %v316, %v713
    %v715 = vpop.f32.mrf.mxu0
    %v716 = vpop.f32.mrf.mxu0
    %v717 = vpop.f32.mrf.mxu0
    %718 = vdwg.mxu0
    %719 = vmatprep.subr.bf16.mxu0 0
    %720 = vmatpush1.bf16.msra.mxu0 %v590
    %721 = vmatprep.subr.bf16.mxu0 0
    %722 = vmatpush1.bf16.msra.mxu0 %v589
    %723 = vmatprep.subr.bf16.mxu0 0
    %724 = vmatpush1.bf16.msra.mxu0 %v588
    %725 = vmatprep.subr.bf16.mxu0 0
    %726 = vmatpush1.bf16.msra.mxu0 %v587
    %727 = vmatprep.subr.bf16.mxu0 0
    %728 = vmatpush1.bf16.msra.mxu0 %v586
    %729 = vmatprep.subr.bf16.mxu0 0
    %730 = vmatpush1.bf16.msra.mxu0 %v585
    %731 = vmatprep.subr.bf16.mxu0 0
    %732 = vmatpush1.bf16.msra.mxu0 %v584
    %733 = vmatprep.subr.bf16.mxu0 0
    %734 = vmatpush1.bf16.msra.mxu0 %v583
    %735 = vmatprep.subr.bf16.mxu0 0
    %736 = vmatpush2.bf16.msra.mxu0 %v598
    %737 = vmatprep.subr.bf16.mxu0 0
    %738 = vmatpush2.bf16.msra.mxu0 %v597
    %739 = vmatprep.subr.bf16.mxu0 0
    %740 = vmatpush2.bf16.msra.mxu0 %v596
    %741 = vmatprep.subr.bf16.mxu0 0
    %742 = vmatpush2.bf16.msra.mxu0 %v595
    %743 = vmatprep.subr.bf16.mxu0 0
    %744 = vmatpush2.bf16.msra.mxu0 %v594
    %745 = vmatprep.subr.bf16.mxu0 0
    %746 = vmatpush2.bf16.msra.mxu0 %v593
    %747 = vmatprep.subr.bf16.mxu0 0
    %748 = vmatpush2.bf16.msra.mxu0 %v592
    %749 = vmatprep.subr.bf16.mxu0 0
    %750 = vmatpush2.bf16.msra.mxu0 %v591
    %751 = vmatprep.mubr.bf16.mxu0 %v332
    %752 = vmatmul.mubr.bf16.gmra.mxu0 %v331
    %v753 = vpop.f32.mrf.mxu0
    %v754 = vadd.f32 %v714, %v753
    %v755 = vpop.f32.mrf.mxu0
    %v756 = vpop.f32.mrf.mxu0
    %v757 = vpop.f32.mrf.mxu0
    %758 = vdwg.mxu0
    %759 = vmatprep.subr.bf16.mxu0 0
    %760 = vmatpush1.bf16.msra.mxu0 %v606
    %761 = vmatprep.subr.bf16.mxu0 0
    %762 = vmatpush1.bf16.msra.mxu0 %v605
    %763 = vmatprep.subr.bf16.mxu0 0
    %764 = vmatpush1.bf16.msra.mxu0 %v604
    %765 = vmatprep.subr.bf16.mxu0 0
    %766 = vmatpush1.bf16.msra.mxu0 %v603
    %767 = vmatprep.subr.bf16.mxu0 0
    %768 = vmatpush1.bf16.msra.mxu0 %v602
    %769 = vmatprep.subr.bf16.mxu0 0
    %770 = vmatpush1.bf16.msra.mxu0 %v601
    %771 = vmatprep.subr.bf16.mxu0 0
    %772 = vmatpush1.bf16.msra.mxu0 %v600
    %773 = vmatprep.subr.bf16.mxu0 0
    %774 = vmatpush1.bf16.msra.mxu0 %v599
    %775 = vmatprep.subr.bf16.mxu0 0
    %776 = vmatpush2.bf16.msra.mxu0 %v614
    %777 = vmatprep.subr.bf16.mxu0 0
    %778 = vmatpush2.bf16.msra.mxu0 %v613
    %779 = vmatprep.subr.bf16.mxu0 0
    %780 = vmatpush2.bf16.msra.mxu0 %v612
    %781 = vmatprep.subr.bf16.mxu0 0
    %782 = vmatpush2.bf16.msra.mxu0 %v611
    %783 = vmatprep.subr.bf16.mxu0 0
    %784 = vmatpush2.bf16.msra.mxu0 %v610
    %785 = vmatprep.subr.bf16.mxu0 0
    %786 = vmatpush2.bf16.msra.mxu0 %v609
    %787 = vmatprep.subr.bf16.mxu0 0
    %788 = vmatpush2.bf16.msra.mxu0 %v608
    %789 = vmatprep.subr.bf16.mxu0 0
    %790 = vmatpush2.bf16.msra.mxu0 %v607
    %791 = vmatprep.mubr.bf16.mxu0 %v334
    %792 = vmatmul.mubr.bf16.gmra.mxu0 %v333
    %v793 = vpop.f32.mrf.mxu0
    %v794 = vadd.f32 %v754, %v793
    %v795 = vpop.f32.mrf.mxu0
    %v796 = vpop.f32.mrf.mxu0
    %v797 = vpop.f32.mrf.mxu0
    %798 = vdwg.mxu0
    %799 = vmatprep.subr.bf16.mxu0 0
    %800 = vmatpush1.bf16.msra.mxu0 %v622
    %801 = vmatprep.subr.bf16.mxu0 0
    %802 = vmatpush1.bf16.msra.mxu0 %v621
    %803 = vmatprep.subr.bf16.mxu0 0
    %804 = vmatpush1.bf16.msra.mxu0 %v620
    %805 = vmatprep.subr.bf16.mxu0 0
    %806 = vmatpush1.bf16.msra.mxu0 %v619
    %807 = vmatprep.subr.bf16.mxu0 0
    %808 = vmatpush1.bf16.msra.mxu0 %v618
    %809 = vmatprep.subr.bf16.mxu0 0
    %810 = vmatpush1.bf16.msra.mxu0 %v617
    %811 = vmatprep.subr.bf16.mxu0 0
    %812 = vmatpush1.bf16.msra.mxu0 %v616
    %813 = vmatprep.subr.bf16.mxu0 0
    %814 = vmatpush1.bf16.msra.mxu0 %v615
    %815 = vmatprep.subr.bf16.mxu0 0
    %816 = vmatpush2.bf16.msra.mxu0 0
    %817 = vmatprep.subr.bf16.mxu0 0
    %818 = vmatpush2.bf16.msra.mxu0 0
    %819 = vmatprep.subr.bf16.mxu0 0
    %820 = vmatpush2.bf16.msra.mxu0 0
    %821 = vmatprep.subr.bf16.mxu0 0
    %822 = vmatpush2.bf16.msra.mxu0 0
    %823 = vmatprep.subr.bf16.mxu0 0
    %824 = vmatpush2.bf16.msra.mxu0 0
    %825 = vmatprep.subr.bf16.mxu0 0
    %826 = vmatpush2.bf16.msra.mxu0 0
    %827 = vmatprep.subr.bf16.mxu0 0
    %828 = vmatpush2.bf16.msra.mxu0 0
    %829 = vmatprep.subr.bf16.mxu0 0
    %830 = vmatpush2.bf16.msra.mxu0 0
    %831 = vmatprep.mubr.bf16.mxu0 0
    %832 = vmatmul.mubr.bf16.gmra.mxu0 %v335
    %v833 = vpop.f32.mrf.mxu0
    %v834 = vadd.f32 %v794, %v833
    %v835 = vpop.f32.mrf.mxu0
    %v836 = vpop.f32.mrf.mxu0
    %v837 = vpop.f32.mrf.mxu0
    %838 = vdwg.mxu0
    %v839 = vld [vmem:[%s9] sm:$0xf]
    %v840 = vld [vmem:[%s9 + $0x4] sm:$0xf]
    %v841 = vld [vmem:[%s9 + $0x8] sm:$0xf]
    %v842 = vld [vmem:[%s9 + $0xc] sm:$0xf]
    %v843 = vld [vmem:[%s9 + $0x10] sm:$0xf]
    %v844 = vld [vmem:[%s9 + $0x14] sm:$0xf]
    %v845 = vld [vmem:[%s9 + $0x18] sm:$0xf]
    %v846 = vld [vmem:[%s9 + $0x1c] sm:$0xf]
    %v847 = vld [vmem:[%s9 + $0x20] sm:$0xf]
    %v848 = vld [vmem:[%s9 + $0x24] sm:$0xf]
    %v849 = vld [vmem:[%s9 + $0x28] sm:$0xf]
    %v850 = vld [vmem:[%s9 + $0x2c] sm:$0xf]
    %v851 = vld [vmem:[%s9 + $0x30] sm:$0xf]
    %v852 = vld [vmem:[%s9 + $0x34] sm:$0xf]
    %v853 = vld [vmem:[%s9 + $0x38] sm:$0xf]
    %v854 = vld [vmem:[%s9 + $0x3c] sm:$0xf]
    %v855 = vld [vmem:[%s11] sm:$0x1]
    %v856 = vpack.c.bf16 %v834, %v834
    %v858 = vlaneseq
    %v859 = vshrl.u32 %v858, 7
    %v860 = vsub.s32 0, %v859
    %v861 = vrot.slane %v855, %v860
    %v879 = vunpack.c.l.b16 %v839
    %v880 = vunpack.c.l.b16 %v840
    %v881 = vunpack.c.l.b16 %v841
    %v882 = vunpack.c.l.b16 %v842
    %v883 = vunpack.c.l.b16 %v843
    %v884 = vunpack.c.l.b16 %v844
    %v885 = vunpack.c.l.b16 %v845
    %v886 = vunpack.c.l.b16 %v846
    %v887 = vunpack.c.l.b16 %v847
    %v888 = vunpack.c.l.b16 %v848
    %v889 = vunpack.c.l.b16 %v849
    %v890 = vunpack.c.l.b16 %v850
    %v891 = vunpack.c.l.b16 %v851
    %v892 = vunpack.c.l.b16 %v852
    %v893 = vunpack.c.l.b16 %v853
    %v894 = vunpack.c.l.b16 %v854
    %v895 = vpack.c.b16 %v880, %v879
    %v896 = vpack.c.b16 %v882, %v881
    %v897 = vpack.c.b16 %v884, %v883
    %v898 = vpack.c.b16 %v886, %v885
    %v899 = vpack.c.b16 %v888, %v887
    %v900 = vpack.c.b16 %v890, %v889
    %v901 = vpack.c.b16 %v892, %v891
    %v902 = vpack.c.b16 %v894, %v893
    %911 = vmatprep.subr.bf16.mxu0 0
    %912 = vmatpush1.bf16.msra.mxu0 %v902
    %913 = vmatprep.subr.bf16.mxu0 0
    %914 = vmatpush1.bf16.msra.mxu0 %v901
    %915 = vmatprep.subr.bf16.mxu0 0
    %916 = vmatpush1.bf16.msra.mxu0 %v900
    %917 = vmatprep.subr.bf16.mxu0 0
    %918 = vmatpush1.bf16.msra.mxu0 %v899
    %919 = vmatprep.subr.bf16.mxu0 0
    %920 = vmatpush1.bf16.msra.mxu0 %v898
    %921 = vmatprep.subr.bf16.mxu0 0
    %922 = vmatpush1.bf16.msra.mxu0 %v897
    %923 = vmatprep.subr.bf16.mxu0 0
    %924 = vmatpush1.bf16.msra.mxu0 %v896
    %925 = vmatprep.subr.bf16.mxu0 0
    %926 = vmatpush1.bf16.msra.mxu0 %v895
    %927 = vmatprep.subr.bf16.mxu0 0
    %928 = vmatpush2.bf16.msra.mxu0 0
    %929 = vmatprep.subr.bf16.mxu0 0
    %930 = vmatpush2.bf16.msra.mxu0 0
    %931 = vmatprep.subr.bf16.mxu0 0
    %932 = vmatpush2.bf16.msra.mxu0 0
    %933 = vmatprep.subr.bf16.mxu0 0
    %934 = vmatpush2.bf16.msra.mxu0 0
    %935 = vmatprep.subr.bf16.mxu0 0
    %936 = vmatpush2.bf16.msra.mxu0 0
    %937 = vmatprep.subr.bf16.mxu0 0
    %938 = vmatpush2.bf16.msra.mxu0 0
    %939 = vmatprep.subr.bf16.mxu0 0
    %940 = vmatpush2.bf16.msra.mxu0 0
    %941 = vmatprep.subr.bf16.mxu0 0
    %942 = vmatpush2.bf16.msra.mxu0 0
    %943 = vmatprep.mubr.bf16.mxu0 0
    %944 = vmatmul.mubr.bf16.gmra.mxu0 %v856
    %v945 = vpop.f32.mrf.mxu0
    %v946 = vadd.f32 %v861, %v945
    %v947 = vpop.f32.mrf.mxu0
    %v948 = vpop.f32.mrf.mxu0
    %v949 = vpop.f32.mrf.mxu0
    %950 = vdwg.mxu0
    %v951 = vadd.f32 %v834, %v946
    %v952 = vld [vmem:[%s13] sm:$0x1]
    %v953 = vld [vmem:[%s15] sm:$0x1]
    %954 = vadd.xlane.f32.xlu0 %v951
    %v955 = vpop.xlane.xlu0 %954
    %v956 = vmul.f32 %v955, 0.03125
    %v957 = vsub.f32 %v951, %v956
    %v958 = vmul.f32 %v957, %v194
    %v959 = vmul.f32 %v958, %v958
    %960 = vadd.xlane.f32.xlu0 %v959
    %v961 = vpop.xlane.xlu0 %960
    %v962 = vmul.f32 %v961, 0.03125
    %v963 = vadd.f32 %v962, 1e-05
    %v964 = vrsqrt.pop %v963
    %v965 = vmul.f32 %v958, %v964
    %v967 = vlaneseq
    %v968 = vshrl.u32 %v967, 7
    %v969 = vsub.s32 0, %v968
    %v970 = vrot.slane %v952, %v969
    %v972 = vmul.f32 %v965, %v970
    %v974 = vlaneseq
    %v975 = vshrl.u32 %v974, 7
    %v976 = vsub.s32 0, %v975
    %v977 = vrot.slane %v953, %v976
    %v979 = vadd.f32 %v972, %v977
    %v980 = vld [vmem:[#allocation2] sm:$0xff]
    %v981 = vld [vmem:[#allocation2 + $0x8] sm:$0xff]
    %v982 = vld [vmem:[#allocation2 + $0x10] sm:$0xff]
    %v983 = vld [vmem:[#allocation2 + $0x18] sm:$0xff]
    %v984 = vld [vmem:[#allocation2 + $0x20] sm:$0xff]
    %v985 = vld [vmem:[#allocation2 + $0x28] sm:$0xff]
    %v986 = vld [vmem:[#allocation2 + $0x30] sm:$0xff]
    %v987 = vld [vmem:[#allocation2 + $0x38] sm:$0xff]
    %v988 = vld [vmem:[#allocation2 + $0x40] sm:$0xff]
    %v989 = vld [vmem:[#allocation2 + $0x48] sm:$0xff]
    %v990 = vld [vmem:[#allocation2 + $0x50] sm:$0xff]
    %v991 = vld [vmem:[#allocation2 + $0x58] sm:$0xff]
    %v992 = vld [vmem:[#allocation2 + $0x60] sm:$0xff]
    %v993 = vld [vmem:[#allocation2 + $0x68] sm:$0xff]
    %v994 = vld [vmem:[#allocation2 + $0x70] sm:$0xff]
    %v995 = vld [vmem:[#allocation2 + $0x78] sm:$0xff]
    %v996 = vld [vmem:[#allocation2 + $0x80] sm:$0xff]
    %v997 = vld [vmem:[#allocation2 + $0x88] sm:$0xff]
    %v998 = vld [vmem:[#allocation2 + $0x90] sm:$0xff]
    %v999 = vld [vmem:[#allocation2 + $0x98] sm:$0xff]
    %v1000 = vld [vmem:[#allocation2 + $0xa0] sm:$0xff]
    %v1001 = vld [vmem:[#allocation2 + $0xa8] sm:$0xff]
    %v1002 = vld [vmem:[#allocation2 + $0xb0] sm:$0xff]
    %v1003 = vld [vmem:[#allocation2 + $0xb8] sm:$0xff]
    %v1004 = vld [vmem:[#allocation2 + $0xc0] sm:$0xff]
    %v1005 = vld [vmem:[#allocation2 + $0xc8] sm:$0xff]
    %v1006 = vld [vmem:[#allocation2 + $0xd0] sm:$0xff]
    %v1007 = vld [vmem:[#allocation2 + $0xd8] sm:$0xff]
    %v1008 = vld [vmem:[#allocation2 + $0xe0] sm:$0xff]
    %v1009 = vld [vmem:[#allocation2 + $0xe8] sm:$0xff]
    %v1010 = vld [vmem:[#allocation2 + $0xf0] sm:$0xff]
    %v1011 = vld [vmem:[#allocation2 + $0xf8] sm:$0xff]
    %v1012 = vld [vmem:[#allocation2 + $0x100] sm:$0xff]
    %v1013 = vld [vmem:[#allocation2 + $0x108] sm:$0xff]
    %v1014 = vld [vmem:[#allocation2 + $0x110] sm:$0xff]
    %v1015 = vld [vmem:[#allocation2 + $0x118] sm:$0xff]
    %v1016 = vld [vmem:[#allocation2 + $0x120] sm:$0xff]
    %v1017 = vld [vmem:[#allocation2 + $0x128] sm:$0xff]
    %v1018 = vld [vmem:[#allocation2 + $0x130] sm:$0xff]
    %v1019 = vld [vmem:[#allocation2 + $0x138] sm:$0xff]
    %v1020 = vld [vmem:[#allocation2 + $0x140] sm:$0xff]
    %v1021 = vld [vmem:[#allocation2 + $0x148] sm:$0xff]
    %v1022 = vld [vmem:[#allocation2 + $0x150] sm:$0xff]
    %v1023 = vld [vmem:[#allocation2 + $0x158] sm:$0xff]
    %v1024 = vld [vmem:[#allocation2 + $0x160] sm:$0xff]
    %v1025 = vld [vmem:[#allocation2 + $0x168] sm:$0xff]
    %v1026 = vld [vmem:[#allocation2 + $0x170] sm:$0xff]
    %v1027 = vld [vmem:[#allocation2 + $0x178] sm:$0xff]
    %v1028 = vld [vmem:[#allocation2 + $0x180] sm:$0xff]
    %v1029 = vld [vmem:[#allocation2 + $0x188] sm:$0xff]
    %v1030 = vld [vmem:[#allocation2 + $0x190] sm:$0xff]
    %v1031 = vld [vmem:[#allocation2 + $0x198] sm:$0xff]
    %v1032 = vld [vmem:[#allocation2 + $0x1a0] sm:$0xff]
    %v1033 = vld [vmem:[#allocation2 + $0x1a8] sm:$0xff]
    %v1034 = vld [vmem:[#allocation2 + $0x1b0] sm:$0xff]
    %v1035 = vld [vmem:[#allocation2 + $0x1b8] sm:$0xff]
    %v1036 = vld [vmem:[#allocation2 + $0x1c0] sm:$0xff]
    %v1037 = vld [vmem:[#allocation2 + $0x1c8] sm:$0xff]
    %v1038 = vld [vmem:[#allocation2 + $0x1d0] sm:$0xff]
    %v1039 = vld [vmem:[#allocation2 + $0x1d8] sm:$0xff]
    %v1040 = vld [vmem:[#allocation2 + $0x1e0] sm:$0xff]
    %v1041 = vld [vmem:[#allocation2 + $0x1e8] sm:$0xff]
    %v1042 = vld [vmem:[#allocation2 + $0x1f0] sm:$0xff]
    %v1043 = vld [vmem:[#allocation2 + $0x1f8] sm:$0xff]
    %v1044 = vld [vmem:[#allocation2 + $0x200] sm:$0xff]
    %v1045 = vld [vmem:[#allocation2 + $0x208] sm:$0xff]
    %v1046 = vld [vmem:[#allocation2 + $0x210] sm:$0xff]
    %v1047 = vld [vmem:[#allocation2 + $0x218] sm:$0xff]
    %v1048 = vld [vmem:[#allocation2 + $0x220] sm:$0xff]
    %v1049 = vld [vmem:[#allocation2 + $0x228] sm:$0xff]
    %v1050 = vld [vmem:[#allocation2 + $0x230] sm:$0xff]
    %v1051 = vld [vmem:[#allocation2 + $0x238] sm:$0xff]
    %v1052 = vld [vmem:[#allocation2 + $0x240] sm:$0xff]
    %v1053 = vld [vmem:[#allocation2 + $0x248] sm:$0xff]
    %v1054 = vld [vmem:[#allocation2 + $0x250] sm:$0xff]
    %v1055 = vld [vmem:[#allocation2 + $0x258] sm:$0xff]
    %v1056 = vld [vmem:[#allocation2 + $0x260] sm:$0xff]
    %v1057 = vld [vmem:[#allocation2 + $0x268] sm:$0xff]
    %v1058 = vld [vmem:[#allocation2 + $0x270] sm:$0xff]
    %v1059 = vld [vmem:[#allocation2 + $0x278] sm:$0xff]
    %v1060 = vld [vmem:[#allocation2 + $0x280] sm:$0xff]
    %v1061 = vld [vmem:[#allocation2 + $0x288] sm:$0xff]
    %v1062 = vld [vmem:[#allocation2 + $0x290] sm:$0xff]
    %v1063 = vld [vmem:[#allocation2 + $0x298] sm:$0xff]
    %v1064 = vld [vmem:[#allocation2 + $0x2a0] sm:$0xff]
    %v1065 = vld [vmem:[#allocation2 + $0x2a8] sm:$0xff]
    %v1066 = vld [vmem:[#allocation2 + $0x2b0] sm:$0xff]
    %v1067 = vld [vmem:[#allocation2 + $0x2b8] sm:$0xff]
    %v1068 = vld [vmem:[#allocation2 + $0x2c0] sm:$0xff]
    %v1069 = vld [vmem:[#allocation2 + $0x2c8] sm:$0xff]
    %v1070 = vld [vmem:[#allocation2 + $0x2d0] sm:$0xff]
    %v1071 = vld [vmem:[#allocation2 + $0x2d8] sm:$0xff]
    %v1072 = vld [vmem:[#allocation2 + $0x2e0] sm:$0xff]
    %v1073 = vld [vmem:[#allocation2 + $0x2e8] sm:$0xff]
    %v1074 = vld [vmem:[#allocation2 + $0x2f0] sm:$0xff]
    %v1075 = vld [vmem:[#allocation2 + $0x2f8] sm:$0xff]
    %v1076 = vld [vmem:[#allocation2 + $0x300] sm:$0xff]
    %v1077 = vld [vmem:[#allocation2 + $0x308] sm:$0xff]
    %v1078 = vld [vmem:[#allocation2 + $0x310] sm:$0xff]
    %v1079 = vld [vmem:[#allocation2 + $0x318] sm:$0xff]
    %v1080 = vld [vmem:[#allocation2 + $0x320] sm:$0xff]
    %v1081 = vld [vmem:[#allocation2 + $0x328] sm:$0xff]
    %v1082 = vld [vmem:[#allocation2 + $0x330] sm:$0xff]
    %v1083 = vld [vmem:[#allocation2 + $0x338] sm:$0xff]
    %v1084 = vld [vmem:[#allocation2 + $0x340] sm:$0xff]
    %v1085 = vld [vmem:[#allocation2 + $0x348] sm:$0xff]
    %v1086 = vld [vmem:[#allocation2 + $0x350] sm:$0xff]
    %v1087 = vld [vmem:[#allocation2 + $0x358] sm:$0xff]
    %v1088 = vld [vmem:[#allocation2 + $0x360] sm:$0xff]
    %v1089 = vld [vmem:[#allocation2 + $0x368] sm:$0xff]
    %v1090 = vld [vmem:[#allocation2 + $0x370] sm:$0xff]
    %v1091 = vld [vmem:[#allocation2 + $0x378] sm:$0xff]
    %v1092 = vld [vmem:[#allocation2 + $0x380] sm:$0xff]
    %v1093 = vld [vmem:[#allocation2 + $0x388] sm:$0xff]
    %v1094 = vld [vmem:[#allocation2 + $0x390] sm:$0xff]
    %v1095 = vld [vmem:[#allocation2 + $0x398] sm:$0xff]
    %v1096 = vld [vmem:[#allocation2 + $0x3a0] sm:$0xff]
    %v1097 = vld [vmem:[#allocation2 + $0x3a8] sm:$0xff]
    %v1098 = vld [vmem:[#allocation2 + $0x3b0] sm:$0xff]
    %v1099 = vld [vmem:[#allocation2 + $0x3b8] sm:$0xff]
    %v1100 = vld [vmem:[#allocation2 + $0x3c0] sm:$0xff]
    %v1101 = vld [vmem:[#allocation2 + $0x3c8] sm:$0xff]
    %v1102 = vld [vmem:[#allocation2 + $0x3d0] sm:$0xff]
    %v1103 = vld [vmem:[#allocation2 + $0x3d8] sm:$0xff]
    %v1104 = vld [vmem:[#allocation2 + $0x3e0] sm:$0xff]
    %v1105 = vld [vmem:[#allocation2 + $0x3e8] sm:$0xff]
    %v1106 = vld [vmem:[#allocation2 + $0x3f0] sm:$0xff]
    %v1107 = vld [vmem:[#allocation2 + $0x3f8] sm:$0xff]
    %v1108 = vld [vmem:[%s19] sm:$0xff]
    %v1109 = vld [vmem:[%s19 + $0x8] sm:$0xff]
    %v1110 = vpack.c.bf16 %v979, %v979
    %v1113 = vlaneseq
    %v1114 = vshrl.u32 %v1113, 7
    %v1115 = vsub.s32 0, %v1114
    %v1116 = vrot.slane %v1108, %v1115
    %v1117 = vlaneseq
    %v1118 = vshrl.u32 %v1117, 7
    %v1119 = vsub.s32 1, %v1118
    %v1120 = vrot.slane %v1108, %v1119
    %v1121 = vlaneseq
    %v1122 = vshrl.u32 %v1121, 7
    %v1123 = vsub.s32 2, %v1122
    %v1124 = vrot.slane %v1108, %v1123
    %v1125 = vlaneseq
    %v1126 = vshrl.u32 %v1125, 7
    %v1127 = vsub.s32 3, %v1126
    %v1128 = vrot.slane %v1108, %v1127
    %v1129 = vlaneseq
    %v1130 = vshrl.u32 %v1129, 7
    %v1131 = vsub.s32 4, %v1130
    %v1132 = vrot.slane %v1108, %v1131
    %v1133 = vlaneseq
    %v1134 = vshrl.u32 %v1133, 7
    %v1135 = vsub.s32 5, %v1134
    %v1136 = vrot.slane %v1108, %v1135
    %v1137 = vlaneseq
    %v1138 = vshrl.u32 %v1137, 7
    %v1139 = vsub.s32 6, %v1138
    %v1140 = vrot.slane %v1108, %v1139
    %v1141 = vlaneseq
    %v1142 = vshrl.u32 %v1141, 7
    %v1143 = vsub.s32 7, %v1142
    %v1144 = vrot.slane %v1108, %v1143
    %v1145 = vlaneseq
    %v1146 = vshrl.u32 %v1145, 7
    %v1147 = vsub.s32 0, %v1146
    %v1148 = vrot.slane %v1109, %v1147
    %v1149 = vlaneseq
    %v1150 = vshrl.u32 %v1149, 7
    %v1151 = vsub.s32 1, %v1150
    %v1152 = vrot.slane %v1109, %v1151
    %v1153 = vlaneseq
    %v1154 = vshrl.u32 %v1153, 7
    %v1155 = vsub.s32 2, %v1154
    %v1156 = vrot.slane %v1109, %v1155
    %v1157 = vlaneseq
    %v1158 = vshrl.u32 %v1157, 7
    %v1159 = vsub.s32 3, %v1158
    %v1160 = vrot.slane %v1109, %v1159
    %v1161 = vlaneseq
    %v1162 = vshrl.u32 %v1161, 7
    %v1163 = vsub.s32 4, %v1162
    %v1164 = vrot.slane %v1109, %v1163
    %v1165 = vlaneseq
    %v1166 = vshrl.u32 %v1165, 7
    %v1167 = vsub.s32 5, %v1166
    %v1168 = vrot.slane %v1109, %v1167
    %v1169 = vlaneseq
    %v1170 = vshrl.u32 %v1169, 7
    %v1171 = vsub.s32 6, %v1170
    %v1172 = vrot.slane %v1109, %v1171
    %v1173 = vlaneseq
    %v1174 = vshrl.u32 %v1173, 7
    %v1175 = vsub.s32 7, %v1174
    %v1176 = vrot.slane %v1109, %v1175
    %v1321 = vunpack.c.l.b16 %v980
    %v1322 = vunpack.c.h.b16 %v980
    %v1323 = vunpack.c.l.b16 %v981
    %v1324 = vunpack.c.h.b16 %v981
    %v1325 = vunpack.c.l.b16 %v982
    %v1326 = vunpack.c.h.b16 %v982
    %v1327 = vunpack.c.l.b16 %v983
    %v1328 = vunpack.c.h.b16 %v983
    %v1329 = vunpack.c.l.b16 %v984
    %v1330 = vunpack.c.h.b16 %v984
    %v1331 = vunpack.c.l.b16 %v985
    %v1332 = vunpack.c.h.b16 %v985
    %v1333 = vunpack.c.l.b16 %v986
    %v1334 = vunpack.c.h.b16 %v986
    %v1335 = vunpack.c.l.b16 %v987
    %v1336 = vunpack.c.h.b16 %v987
    %v1337 = vunpack.c.l.b16 %v988
    %v1338 = vunpack.c.h.b16 %v988
    %v1339 = vunpack.c.l.b16 %v989
    %v1340 = vunpack.c.h.b16 %v989
    %v1341 = vunpack.c.l.b16 %v990
    %v1342 = vunpack.c.h.b16 %v990
    %v1343 = vunpack.c.l.b16 %v991
    %v1344 = vunpack.c.h.b16 %v991
    %v1345 = vunpack.c.l.b16 %v992
    %v1346 = vunpack.c.h.b16 %v992
    %v1347 = vunpack.c.l.b16 %v993
    %v1348 = vunpack.c.h.b16 %v993
    %v1349 = vunpack.c.l.b16 %v994
    %v1350 = vunpack.c.h.b16 %v994
    %v1351 = vunpack.c.l.b16 %v995
    %v1352 = vunpack.c.h.b16 %v995
    %v1353 = vunpack.c.l.b16 %v996
    %v1354 = vunpack.c.h.b16 %v996
    %v1355 = vunpack.c.l.b16 %v997
    %v1356 = vunpack.c.h.b16 %v997
    %v1357 = vunpack.c.l.b16 %v998
    %v1358 = vunpack.c.h.b16 %v998
    %v1359 = vunpack.c.l.b16 %v999
    %v1360 = vunpack.c.h.b16 %v999
    %v1361 = vunpack.c.l.b16 %v1000
    %v1362 = vunpack.c.h.b16 %v1000
    %v1363 = vunpack.c.l.b16 %v1001
    %v1364 = vunpack.c.h.b16 %v1001
    %v1365 = vunpack.c.l.b16 %v1002
    %v1366 = vunpack.c.h.b16 %v1002
    %v1367 = vunpack.c.l.b16 %v1003
    %v1368 = vunpack.c.h.b16 %v1003
    %v1369 = vunpack.c.l.b16 %v1004
    %v1370 = vunpack.c.h.b16 %v1004
    %v1371 = vunpack.c.l.b16 %v1005
    %v1372 = vunpack.c.h.b16 %v1005
    %v1373 = vunpack.c.l.b16 %v1006
    %v1374 = vunpack.c.h.b16 %v1006
    %v1375 = vunpack.c.l.b16 %v1007
    %v1376 = vunpack.c.h.b16 %v1007
    %v1377 = vunpack.c.l.b16 %v1008
    %v1378 = vunpack.c.h.b16 %v1008
    %v1379 = vunpack.c.l.b16 %v1009
    %v1380 = vunpack.c.h.b16 %v1009
    %v1381 = vunpack.c.l.b16 %v1010
    %v1382 = vunpack.c.h.b16 %v1010
    %v1383 = vunpack.c.l.b16 %v1011
    %v1384 = vunpack.c.h.b16 %v1011
    %v1385 = vunpack.c.l.b16 %v1012
    %v1386 = vunpack.c.h.b16 %v1012
    %v1387 = vunpack.c.l.b16 %v1013
    %v1388 = vunpack.c.h.b16 %v1013
    %v1389 = vunpack.c.l.b16 %v1014
    %v1390 = vunpack.c.h.b16 %v1014
    %v1391 = vunpack.c.l.b16 %v1015
    %v1392 = vunpack.c.h.b16 %v1015
    %v1393 = vunpack.c.l.b16 %v1016
    %v1394 = vunpack.c.h.b16 %v1016
    %v1395 = vunpack.c.l.b16 %v1017
    %v1396 = vunpack.c.h.b16 %v1017
    %v1397 = vunpack.c.l.b16 %v1018
    %v1398 = vunpack.c.h.b16 %v1018
    %v1399 = vunpack.c.l.b16 %v1019
    %v1400 = vunpack.c.h.b16 %v1019
    %v1401 = vunpack.c.l.b16 %v1020
    %v1402 = vunpack.c.h.b16 %v1020
    %v1403 = vunpack.c.l.b16 %v1021
    %v1404 = vunpack.c.h.b16 %v1021
    %v1405 = vunpack.c.l.b16 %v1022
    %v1406 = vunpack.c.h.b16 %v1022
    %v1407 = vunpack.c.l.b16 %v1023
    %v1408 = vunpack.c.h.b16 %v1023
    %v1409 = vunpack.c.l.b16 %v1024
    %v1410 = vunpack.c.h.b16 %v1024
    %v1411 = vunpack.c.l.b16 %v1025
    %v1412 = vunpack.c.h.b16 %v1025
    %v1413 = vunpack.c.l.b16 %v1026
    %v1414 = vunpack.c.h.b16 %v1026
    %v1415 = vunpack.c.l.b16 %v1027
    %v1416 = vunpack.c.h.b16 %v1027
    %v1417 = vunpack.c.l.b16 %v1028
    %v1418 = vunpack.c.h.b16 %v1028
    %v1419 = vunpack.c.l.b16 %v1029
    %v1420 = vunpack.c.h.b16 %v1029
    %v1421 = vunpack.c.l.b16 %v1030
    %v1422 = vunpack.c.h.b16 %v1030
    %v1423 = vunpack.c.l.b16 %v1031
    %v1424 = vunpack.c.h.b16 %v1031
    %v1425 = vunpack.c.l.b16 %v1032
    %v1426 = vunpack.c.h.b16 %v1032
    %v1427 = vunpack.c.l.b16 %v1033
    %v1428 = vunpack.c.h.b16 %v1033
    %v1429 = vunpack.c.l.b16 %v1034
    %v1430 = vunpack.c.h.b16 %v1034
    %v1431 = vunpack.c.l.b16 %v1035
    %v1432 = vunpack.c.h.b16 %v1035
    %v1433 = vunpack.c.l.b16 %v1036
    %v1434 = vunpack.c.h.b16 %v1036
    %v1435 = vunpack.c.l.b16 %v1037
    %v1436 = vunpack.c.h.b16 %v1037
    %v1437 = vunpack.c.l.b16 %v1038
    %v1438 = vunpack.c.h.b16 %v1038
    %v1439 = vunpack.c.l.b16 %v1039
    %v1440 = vunpack.c.h.b16 %v1039
    %v1441 = vunpack.c.l.b16 %v1040
    %v1442 = vunpack.c.h.b16 %v1040
    %v1443 = vunpack.c.l.b16 %v1041
    %v1444 = vunpack.c.h.b16 %v1041
    %v1445 = vunpack.c.l.b16 %v1042
    %v1446 = vunpack.c.h.b16 %v1042
    %v1447 = vunpack.c.l.b16 %v1043
    %v1448 = vunpack.c.h.b16 %v1043
    %v1449 = vunpack.c.l.b16 %v1044
    %v1450 = vunpack.c.h.b16 %v1044
    %v1451 = vunpack.c.l.b16 %v1045
    %v1452 = vunpack.c.h.b16 %v1045
    %v1453 = vunpack.c.l.b16 %v1046
    %v1454 = vunpack.c.h.b16 %v1046
    %v1455 = vunpack.c.l.b16 %v1047
    %v1456 = vunpack.c.h.b16 %v1047
    %v1457 = vunpack.c.l.b16 %v1048
    %v1458 = vunpack.c.h.b16 %v1048
    %v1459 = vunpack.c.l.b16 %v1049
    %v1460 = vunpack.c.h.b16 %v1049
    %v1461 = vunpack.c.l.b16 %v1050
    %v1462 = vunpack.c.h.b16 %v1050
    %v1463 = vunpack.c.l.b16 %v1051
    %v1464 = vunpack.c.h.b16 %v1051
    %v1465 = vunpack.c.l.b16 %v1052
    %v1466 = vunpack.c.h.b16 %v1052
    %v1467 = vunpack.c.l.b16 %v1053
    %v1468 = vunpack.c.h.b16 %v1053
    %v1469 = vunpack.c.l.b16 %v1054
    %v1470 = vunpack.c.h.b16 %v1054
    %v1471 = vunpack.c.l.b16 %v1055
    %v1472 = vunpack.c.h.b16 %v1055
    %v1473 = vunpack.c.l.b16 %v1056
    %v1474 = vunpack.c.h.b16 %v1056
    %v1475 = vunpack.c.l.b16 %v1057
    %v1476 = vunpack.c.h.b16 %v1057
    %v1477 = vunpack.c.l.b16 %v1058
    %v1478 = vunpack.c.h.b16 %v1058
    %v1479 = vunpack.c.l.b16 %v1059
    %v1480 = vunpack.c.h.b16 %v1059
    %v1481 = vunpack.c.l.b16 %v1060
    %v1482 = vunpack.c.h.b16 %v1060
    %v1483 = vunpack.c.l.b16 %v1061
    %v1484 = vunpack.c.h.b16 %v1061
    %v1485 = vunpack.c.l.b16 %v1062
    %v1486 = vunpack.c.h.b16 %v1062
    %v1487 = vunpack.c.l.b16 %v1063
    %v1488 = vunpack.c.h.b16 %v1063
    %v1489 = vunpack.c.l.b16 %v1064
    %v1490 = vunpack.c.h.b16 %v1064
    %v1491 = vunpack.c.l.b16 %v1065
    %v1492 = vunpack.c.h.b16 %v1065
    %v1493 = vunpack.c.l.b16 %v1066
    %v1494 = vunpack.c.h.b16 %v1066
    %v1495 = vunpack.c.l.b16 %v1067
    %v1496 = vunpack.c.h.b16 %v1067
    %v1497 = vunpack.c.l.b16 %v1068
    %v1498 = vunpack.c.h.b16 %v1068
    %v1499 = vunpack.c.l.b16 %v1069
    %v1500 = vunpack.c.h.b16 %v1069
    %v1501 = vunpack.c.l.b16 %v1070
    %v1502 = vunpack.c.h.b16 %v1070
    %v1503 = vunpack.c.l.b16 %v1071
    %v1504 = vunpack.c.h.b16 %v1071
    %v1505 = vunpack.c.l.b16 %v1072
    %v1506 = vunpack.c.h.b16 %v1072
    %v1507 = vunpack.c.l.b16 %v1073
    %v1508 = vunpack.c.h.b16 %v1073
    %v1509 = vunpack.c.l.b16 %v1074
    %v1510 = vunpack.c.h.b16 %v1074
    %v1511 = vunpack.c.l.b16 %v1075
    %v1512 = vunpack.c.h.b16 %v1075
    %v1513 = vunpack.c.l.b16 %v1076
    %v1514 = vunpack.c.h.b16 %v1076
    %v1515 = vunpack.c.l.b16 %v1077
    %v1516 = vunpack.c.h.b16 %v1077
    %v1517 = vunpack.c.l.b16 %v1078
    %v1518 = vunpack.c.h.b16 %v1078
    %v1519 = vunpack.c.l.b16 %v1079
    %v1520 = vunpack.c.h.b16 %v1079
    %v1521 = vunpack.c.l.b16 %v1080
    %v1522 = vunpack.c.h.b16 %v1080
    %v1523 = vunpack.c.l.b16 %v1081
    %v1524 = vunpack.c.h.b16 %v1081
    %v1525 = vunpack.c.l.b16 %v1082
    %v1526 = vunpack.c.h.b16 %v1082
    %v1527 = vunpack.c.l.b16 %v1083
    %v1528 = vunpack.c.h.b16 %v1083
    %v1529 = vunpack.c.l.b16 %v1084
    %v1530 = vunpack.c.h.b16 %v1084
    %v1531 = vunpack.c.l.b16 %v1085
    %v1532 = vunpack.c.h.b16 %v1085
    %v1533 = vunpack.c.l.b16 %v1086
    %v1534 = vunpack.c.h.b16 %v1086
    %v1535 = vunpack.c.l.b16 %v1087
    %v1536 = vunpack.c.h.b16 %v1087
    %v1537 = vunpack.c.l.b16 %v1088
    %v1538 = vunpack.c.h.b16 %v1088
    %v1539 = vunpack.c.l.b16 %v1089
    %v1540 = vunpack.c.h.b16 %v1089
    %v1541 = vunpack.c.l.b16 %v1090
    %v1542 = vunpack.c.h.b16 %v1090
    %v1543 = vunpack.c.l.b16 %v1091
    %v1544 = vunpack.c.h.b16 %v1091
    %v1545 = vunpack.c.l.b16 %v1092
    %v1546 = vunpack.c.h.b16 %v1092
    %v1547 = vunpack.c.l.b16 %v1093
    %v1548 = vunpack.c.h.b16 %v1093
    %v1549 = vunpack.c.l.b16 %v1094
    %v1550 = vunpack.c.h.b16 %v1094
    %v1551 = vunpack.c.l.b16 %v1095
    %v1552 = vunpack.c.h.b16 %v1095
    %v1553 = vunpack.c.l.b16 %v1096
    %v1554 = vunpack.c.h.b16 %v1096
    %v1555 = vunpack.c.l.b16 %v1097
    %v1556 = vunpack.c.h.b16 %v1097
    %v1557 = vunpack.c.l.b16 %v1098
    %v1558 = vunpack.c.h.b16 %v1098
    %v1559 = vunpack.c.l.b16 %v1099
    %v1560 = vunpack.c.h.b16 %v1099
    %v1561 = vunpack.c.l.b16 %v1100
    %v1562 = vunpack.c.h.b16 %v1100
    %v1563 = vunpack.c.l.b16 %v1101
    %v1564 = vunpack.c.h.b16 %v1101
    %v1565 = vunpack.c.l.b16 %v1102
    %v1566 = vunpack.c.h.b16 %v1102
    %v1567 = vunpack.c.l.b16 %v1103
    %v1568 = vunpack.c.h.b16 %v1103
    %v1569 = vunpack.c.l.b16 %v1104
    %v1570 = vunpack.c.h.b16 %v1104
    %v1571 = vunpack.c.l.b16 %v1105
    %v1572 = vunpack.c.h.b16 %v1105
    %v1573 = vunpack.c.l.b16 %v1106
    %v1574 = vunpack.c.h.b16 %v1106
    %v1575 = vunpack.c.l.b16 %v1107
    %v1576 = vunpack.c.h.b16 %v1107
    %v1577 = vpack.c.b16 %v1337, %v1321
    %v1578 = vpack.c.b16 %v1338, %v1322
    %v1579 = vpack.c.b16 %v1339, %v1323
    %v1580 = vpack.c.b16 %v1340, %v1324
    %v1581 = vpack.c.b16 %v1341, %v1325
    %v1582 = vpack.c.b16 %v1342, %v1326
    %v1583 = vpack.c.b16 %v1343, %v1327
    %v1584 = vpack.c.b16 %v1344, %v1328
    %v1585 = vpack.c.b16 %v1345, %v1329
    %v1586 = vpack.c.b16 %v1346, %v1330
    %v1587 = vpack.c.b16 %v1347, %v1331
    %v1588 = vpack.c.b16 %v1348, %v1332
    %v1589 = vpack.c.b16 %v1349, %v1333
    %v1590 = vpack.c.b16 %v1350, %v1334
    %v1591 = vpack.c.b16 %v1351, %v1335
    %v1592 = vpack.c.b16 %v1352, %v1336
    %v1593 = vpack.c.b16 %v1369, %v1353
    %v1594 = vpack.c.b16 %v1370, %v1354
    %v1595 = vpack.c.b16 %v1371, %v1355
    %v1596 = vpack.c.b16 %v1372, %v1356
    %v1597 = vpack.c.b16 %v1373, %v1357
    %v1598 = vpack.c.b16 %v1374, %v1358
    %v1599 = vpack.c.b16 %v1375, %v1359
    %v1600 = vpack.c.b16 %v1376, %v1360
    %v1601 = vpack.c.b16 %v1377, %v1361
    %v1602 = vpack.c.b16 %v1378, %v1362
    %v1603 = vpack.c.b16 %v1379, %v1363
    %v1604 = vpack.c.b16 %v1380, %v1364
    %v1605 = vpack.c.b16 %v1381, %v1365
    %v1606 = vpack.c.b16 %v1382, %v1366
    %v1607 = vpack.c.b16 %v1383, %v1367
    %v1608 = vpack.c.b16 %v1384, %v1368
    %v1609 = vpack.c.b16 %v1401, %v1385
    %v1610 = vpack.c.b16 %v1402, %v1386
    %v1611 = vpack.c.b16 %v1403, %v1387
    %v1612 = vpack.c.b16 %v1404, %v1388
    %v1613 = vpack.c.b16 %v1405, %v1389
    %v1614 = vpack.c.b16 %v1406, %v1390
    %v1615 = vpack.c.b16 %v1407, %v1391
    %v1616 = vpack.c.b16 %v1408, %v1392
    %v1617 = vpack.c.b16 %v1409, %v1393
    %v1618 = vpack.c.b16 %v1410, %v1394
    %v1619 = vpack.c.b16 %v1411, %v1395
    %v1620 = vpack.c.b16 %v1412, %v1396
    %v1621 = vpack.c.b16 %v1413, %v1397
    %v1622 = vpack.c.b16 %v1414, %v1398
    %v1623 = vpack.c.b16 %v1415, %v1399
    %v1624 = vpack.c.b16 %v1416, %v1400
    %v1625 = vpack.c.b16 %v1433, %v1417
    %v1626 = vpack.c.b16 %v1434, %v1418
    %v1627 = vpack.c.b16 %v1435, %v1419
    %v1628 = vpack.c.b16 %v1436, %v1420
    %v1629 = vpack.c.b16 %v1437, %v1421
    %v1630 = vpack.c.b16 %v1438, %v1422
    %v1631 = vpack.c.b16 %v1439, %v1423
    %v1632 = vpack.c.b16 %v1440, %v1424
    %v1633 = vpack.c.b16 %v1441, %v1425
    %v1634 = vpack.c.b16 %v1442, %v1426
    %v1635 = vpack.c.b16 %v1443, %v1427
    %v1636 = vpack.c.b16 %v1444, %v1428
    %v1637 = vpack.c.b16 %v1445, %v1429
    %v1638 = vpack.c.b16 %v1446, %v1430
    %v1639 = vpack.c.b16 %v1447, %v1431
    %v1640 = vpack.c.b16 %v1448, %v1432
    %v1641 = vpack.c.b16 %v1465, %v1449
    %v1642 = vpack.c.b16 %v1466, %v1450
    %v1643 = vpack.c.b16 %v1467, %v1451
    %v1644 = vpack.c.b16 %v1468, %v1452
    %v1645 = vpack.c.b16 %v1469, %v1453
    %v1646 = vpack.c.b16 %v1470, %v1454
    %v1647 = vpack.c.b16 %v1471, %v1455
    %v1648 = vpack.c.b16 %v1472, %v1456
    %v1649 = vpack.c.b16 %v1473, %v1457
    %v1650 = vpack.c.b16 %v1474, %v1458
    %v1651 = vpack.c.b16 %v1475, %v1459
    %v1652 = vpack.c.b16 %v1476, %v1460
    %v1653 = vpack.c.b16 %v1477, %v1461
    %v1654 = vpack.c.b16 %v1478, %v1462
    %v1655 = vpack.c.b16 %v1479, %v1463
    %v1656 = vpack.c.b16 %v1480, %v1464
    %v1657 = vpack.c.b16 %v1497, %v1481
    %v1658 = vpack.c.b16 %v1498, %v1482
    %v1659 = vpack.c.b16 %v1499, %v1483
    %v1660 = vpack.c.b16 %v1500, %v1484
    %v1661 = vpack.c.b16 %v1501, %v1485
    %v1662 = vpack.c.b16 %v1502, %v1486
    %v1663 = vpack.c.b16 %v1503, %v1487
    %v1664 = vpack.c.b16 %v1504, %v1488
    %v1665 = vpack.c.b16 %v1505, %v1489
    %v1666 = vpack.c.b16 %v1506, %v1490
    %v1667 = vpack.c.b16 %v1507, %v1491
    %v1668 = vpack.c.b16 %v1508, %v1492
    %v1669 = vpack.c.b16 %v1509, %v1493
    %v1670 = vpack.c.b16 %v1510, %v1494
    %v1671 = vpack.c.b16 %v1511, %v1495
    %v1672 = vpack.c.b16 %v1512, %v1496
    %v1673 = vpack.c.b16 %v1529, %v1513
    %v1674 = vpack.c.b16 %v1530, %v1514
    %v1675 = vpack.c.b16 %v1531, %v1515
    %v1676 = vpack.c.b16 %v1532, %v1516
    %v1677 = vpack.c.b16 %v1533, %v1517
    %v1678 = vpack.c.b16 %v1534, %v1518
    %v1679 = vpack.c.b16 %v1535, %v1519
    %v1680 = vpack.c.b16 %v1536, %v1520
    %v1681 = vpack.c.b16 %v1537, %v1521
    %v1682 = vpack.c.b16 %v1538, %v1522
    %v1683 = vpack.c.b16 %v1539, %v1523
    %v1684 = vpack.c.b16 %v1540, %v1524
    %v1685 = vpack.c.b16 %v1541, %v1525
    %v1686 = vpack.c.b16 %v1542, %v1526
    %v1687 = vpack.c.b16 %v1543, %v1527
    %v1688 = vpack.c.b16 %v1544, %v1528
    %v1689 = vpack.c.b16 %v1561, %v1545
    %v1690 = vpack.c.b16 %v1562, %v1546
    %v1691 = vpack.c.b16 %v1563, %v1547
    %v1692 = vpack.c.b16 %v1564, %v1548
    %v1693 = vpack.c.b16 %v1565, %v1549
    %v1694 = vpack.c.b16 %v1566, %v1550
    %v1695 = vpack.c.b16 %v1567, %v1551
    %v1696 = vpack.c.b16 %v1568, %v1552
    %v1697 = vpack.c.b16 %v1569, %v1553
    %v1698 = vpack.c.b16 %v1570, %v1554
    %v1699 = vpack.c.b16 %v1571, %v1555
    %v1700 = vpack.c.b16 %v1572, %v1556
    %v1701 = vpack.c.b16 %v1573, %v1557
    %v1702 = vpack.c.b16 %v1574, %v1558
    %v1703 = vpack.c.b16 %v1575, %v1559
    %v1704 = vpack.c.b16 %v1576, %v1560
    %1833 = vmatprep.subr.bf16.mxu0 %v1690
    %1834 = vmatpush1.bf16.msra.mxu0 %v1689
    %1835 = vmatprep.subr.bf16.mxu0 %v1674
    %1836 = vmatpush1.bf16.msra.mxu0 %v1673
    %1837 = vmatprep.subr.bf16.mxu0 %v1658
    %1838 = vmatpush1.bf16.msra.mxu0 %v1657
    %1839 = vmatprep.subr.bf16.mxu0 %v1642
    %1840 = vmatpush1.bf16.msra.mxu0 %v1641
    %1841 = vmatprep.subr.bf16.mxu0 %v1626
    %1842 = vmatpush1.bf16.msra.mxu0 %v1625
    %1843 = vmatprep.subr.bf16.mxu0 %v1610
    %1844 = vmatpush1.bf16.msra.mxu0 %v1609
    %1845 = vmatprep.subr.bf16.mxu0 %v1594
    %1846 = vmatpush1.bf16.msra.mxu0 %v1593
    %1847 = vmatprep.subr.bf16.mxu0 %v1578
    %1848 = vmatpush1.bf16.msra.mxu0 %v1577
    %1849 = vmatprep.subr.bf16.mxu0 0
    %1850 = vmatpush2.bf16.msra.mxu0 0
    %1851 = vmatprep.subr.bf16.mxu0 0
    %1852 = vmatpush2.bf16.msra.mxu0 0
    %1853 = vmatprep.subr.bf16.mxu0 0
    %1854 = vmatpush2.bf16.msra.mxu0 0
    %1855 = vmatprep.subr.bf16.mxu0 0
    %1856 = vmatpush2.bf16.msra.mxu0 0
    %1857 = vmatprep.subr.bf16.mxu0 0
    %1858 = vmatpush2.bf16.msra.mxu0 0
    %1859 = vmatprep.subr.bf16.mxu0 0
    %1860 = vmatpush2.bf16.msra.mxu0 0
    %1861 = vmatprep.subr.bf16.mxu0 0
    %1862 = vmatpush2.bf16.msra.mxu0 0
    %1863 = vmatprep.subr.bf16.mxu0 0
    %1864 = vmatpush2.bf16.msra.mxu0 0
    %1865 = vmatprep.mubr.bf16.mxu0 0
    %1866 = vmatmul.mubr.bf16.gmra.mxu0 %v1110
    %v1867 = vpop.f32.mrf.mxu0
    %v1868 = vadd.f32 %v1116, %v1867
    %v1869 = vpop.f32.mrf.mxu0
    %v1870 = vadd.f32 %v1120, %v1869
    %v1871 = vpop.f32.mrf.mxu0
    %v1872 = vpop.f32.mrf.mxu0
    %1873 = vdwg.mxu0
    %1874 = vmatprep.subr.bf16.mxu0 %v1692
    %1875 = vmatpush1.bf16.msra.mxu0 %v1691
    %1876 = vmatprep.subr.bf16.mxu0 %v1676
    %1877 = vmatpush1.bf16.msra.mxu0 %v1675
    %1878 = vmatprep.subr.bf16.mxu0 %v1660
    %1879 = vmatpush1.bf16.msra.mxu0 %v1659
    %1880 = vmatprep.subr.bf16.mxu0 %v1644
    %1881 = vmatpush1.bf16.msra.mxu0 %v1643
    %1882 = vmatprep.subr.bf16.mxu0 %v1628
    %1883 = vmatpush1.bf16.msra.mxu0 %v1627
    %1884 = vmatprep.subr.bf16.mxu0 %v1612
    %1885 = vmatpush1.bf16.msra.mxu0 %v1611
    %1886 = vmatprep.subr.bf16.mxu0 %v1596
    %1887 = vmatpush1.bf16.msra.mxu0 %v1595
    %1888 = vmatprep.subr.bf16.mxu0 %v1580
    %1889 = vmatpush1.bf16.msra.mxu0 %v1579
    %1890 = vmatprep.subr.bf16.mxu0 0
    %1891 = vmatpush2.bf16.msra.mxu0 0
    %1892 = vmatprep.subr.bf16.mxu0 0
    %1893 = vmatpush2.bf16.msra.mxu0 0
    %1894 = vmatprep.subr.bf16.mxu0 0
    %1895 = vmatpush2.bf16.msra.mxu0 0
    %1896 = vmatprep.subr.bf16.mxu0 0
    %1897 = vmatpush2.bf16.msra.mxu0 0
    %1898 = vmatprep.subr.bf16.mxu0 0
    %1899 = vmatpush2.bf16.msra.mxu0 0
    %1900 = vmatprep.subr.bf16.mxu0 0
    %1901 = vmatpush2.bf16.msra.mxu0 0
    %1902 = vmatprep.subr.bf16.mxu0 0
    %1903 = vmatpush2.bf16.msra.mxu0 0
    %1904 = vmatprep.subr.bf16.mxu0 0
    %1905 = vmatpush2.bf16.msra.mxu0 0
    %1906 = vmatprep.mubr.bf16.mxu0 0
    %1907 = vmatmul.mubr.bf16.gmra.mxu0 %v1110
    %v1908 = vpop.f32.mrf.mxu0
    %v1909 = vadd.f32 %v1124, %v1908
    %v1910 = vpop.f32.mrf.mxu0
    %v1911 = vadd.f32 %v1128, %v1910
    %v1912 = vpop.f32.mrf.mxu0
    %v1913 = vpop.f32.mrf.mxu0
    %1914 = vdwg.mxu0
    %1915 = vmatprep.subr.bf16.mxu0 %v1694
    %1916 = vmatpush1.bf16.msra.mxu0 %v1693
    %1917 = vmatprep.subr.bf16.mxu0 %v1678
    %1918 = vmatpush1.bf16.msra.mxu0 %v1677
    %1919 = vmatprep.subr.bf16.mxu0 %v1662
    %1920 = vmatpush1.bf16.msra.mxu0 %v1661
    %1921 = vmatprep.subr.bf16.mxu0 %v1646
    %1922 = vmatpush1.bf16.msra.mxu0 %v1645
    %1923 = vmatprep.subr.bf16.mxu0 %v1630
    %1924 = vmatpush1.bf16.msra.mxu0 %v1629
    %1925 = vmatprep.subr.bf16.mxu0 %v1614
    %1926 = vmatpush1.bf16.msra.mxu0 %v1613
    %1927 = vmatprep.subr.bf16.mxu0 %v1598
    %1928 = vmatpush1.bf16.msra.mxu0 %v1597
    %1929 = vmatprep.subr.bf16.mxu0 %v1582
    %1930 = vmatpush1.bf16.msra.mxu0 %v1581
    %1931 = vmatprep.subr.bf16.mxu0 0
    %1932 = vmatpush2.bf16.msra.mxu0 0
    %1933 = vmatprep.subr.bf16.mxu0 0
    %1934 = vmatpush2.bf16.msra.mxu0 0
    %1935 = vmatprep.subr.bf16.mxu0 0
    %1936 = vmatpush2.bf16.msra.mxu0 0
    %1937 = vmatprep.subr.bf16.mxu0 0
    %1938 = vmatpush2.bf16.msra.mxu0 0
    %1939 = vmatprep.subr.bf16.mxu0 0
    %1940 = vmatpush2.bf16.msra.mxu0 0
    %1941 = vmatprep.subr.bf16.mxu0 0
    %1942 = vmatpush2.bf16.msra.mxu0 0
    %1943 = vmatprep.subr.bf16.mxu0 0
    %1944 = vmatpush2.bf16.msra.mxu0 0
    %1945 = vmatprep.subr.bf16.mxu0 0
    %1946 = vmatpush2.bf16.msra.mxu0 0
    %1947 = vmatprep.mubr.bf16.mxu0 0
    %1948 = vmatmul.mubr.bf16.gmra.mxu0 %v1110
    %v1949 = vpop.f32.mrf.mxu0
    %v1950 = vadd.f32 %v1132, %v1949
    %v1951 = vpop.f32.mrf.mxu0
    %v1952 = vadd.f32 %v1136, %v1951
    %v1953 = vpop.f32.mrf.mxu0
    %v1954 = vpop.f32.mrf.mxu0
    %1955 = vdwg.mxu0
    %1956 = vmatprep.subr.bf16.mxu0 %v1696
    %1957 = vmatpush1.bf16.msra.mxu0 %v1695
    %1958 = vmatprep.subr.bf16.mxu0 %v1680
    %1959 = vmatpush1.bf16.msra.mxu0 %v1679
    %1960 = vmatprep.subr.bf16.mxu0 %v1664
    %1961 = vmatpush1.bf16.msra.mxu0 %v1663
    %1962 = vmatprep.subr.bf16.mxu0 %v1648
    %1963 = vmatpush1.bf16.msra.mxu0 %v1647
    %1964 = vmatprep.subr.bf16.mxu0 %v1632
    %1965 = vmatpush1.bf16.msra.mxu0 %v1631
    %1966 = vmatprep.subr.bf16.mxu0 %v1616
    %1967 = vmatpush1.bf16.msra.mxu0 %v1615
    %1968 = vmatprep.subr.bf16.mxu0 %v1600
    %1969 = vmatpush1.bf16.msra.mxu0 %v1599
    %1970 = vmatprep.subr.bf16.mxu0 %v1584
    %1971 = vmatpush1.bf16.msra.mxu0 %v1583
    %1972 = vmatprep.subr.bf16.mxu0 0
    %1973 = vmatpush2.bf16.msra.mxu0 0
    %1974 = vmatprep.subr.bf16.mxu0 0
    %1975 = vmatpush2.bf16.msra.mxu0 0
    %1976 = vmatprep.subr.bf16.mxu0 0
    %1977 = vmatpush2.bf16.msra.mxu0 0
    %1978 = vmatprep.subr.bf16.mxu0 0
    %1979 = vmatpush2.bf16.msra.mxu0 0
    %1980 = vmatprep.subr.bf16.mxu0 0
    %1981 = vmatpush2.bf16.msra.mxu0 0
    %1982 = vmatprep.subr.bf16.mxu0 0
    %1983 = vmatpush2.bf16.msra.mxu0 0
    %1984 = vmatprep.subr.bf16.mxu0 0
    %1985 = vmatpush2.bf16.msra.mxu0 0
    %1986 = vmatprep.subr.bf16.mxu0 0
    %1987 = vmatpush2.bf16.msra.mxu0 0
    %1988 = vmatprep.mubr.bf16.mxu0 0
    %1989 = vmatmul.mubr.bf16.gmra.mxu0 %v1110
    %v1990 = vpop.f32.mrf.mxu0
    %v1991 = vadd.f32 %v1140, %v1990
    %v1992 = vpop.f32.mrf.mxu0
    %v1993 = vadd.f32 %v1144, %v1992
    %v1994 = vpop.f32.mrf.mxu0
    %v1995 = vpop.f32.mrf.mxu0
    %1996 = vdwg.mxu0
    %1997 = vmatprep.subr.bf16.mxu0 %v1698
    %1998 = vmatpush1.bf16.msra.mxu0 %v1697
    %1999 = vmatprep.subr.bf16.mxu0 %v1682
    %2000 = vmatpush1.bf16.msra.mxu0 %v1681
    %2001 = vmatprep.subr.bf16.mxu0 %v1666
    %2002 = vmatpush1.bf16.msra.mxu0 %v1665
    %2003 = vmatprep.subr.bf16.mxu0 %v1650
    %2004 = vmatpush1.bf16.msra.mxu0 %v1649
    %2005 = vmatprep.subr.bf16.mxu0 %v1634
    %2006 = vmatpush1.bf16.msra.mxu0 %v1633
    %2007 = vmatprep.subr.bf16.mxu0 %v1618
    %2008 = vmatpush1.bf16.msra.mxu0 %v1617
    %2009 = vmatprep.subr.bf16.mxu0 %v1602
    %2010 = vmatpush1.bf16.msra.mxu0 %v1601
    %2011 = vmatprep.subr.bf16.mxu0 %v1586
    %2012 = vmatpush1.bf16.msra.mxu0 %v1585
    %2013 = vmatprep.subr.bf16.mxu0 0
    %2014 = vmatpush2.bf16.msra.mxu0 0
    %2015 = vmatprep.subr.bf16.mxu0 0
    %2016 = vmatpush2.bf16.msra.mxu0 0
    %2017 = vmatprep.subr.bf16.mxu0 0
    %2018 = vmatpush2.bf16.msra.mxu0 0
    %2019 = vmatprep.subr.bf16.mxu0 0
    %2020 = vmatpush2.bf16.msra.mxu0 0
    %2021 = vmatprep.subr.bf16.mxu0 0
    %2022 = vmatpush2.bf16.msra.mxu0 0
    %2023 = vmatprep.subr.bf16.mxu0 0
    %2024 = vmatpush2.bf16.msra.mxu0 0
    %2025 = vmatprep.subr.bf16.mxu0 0
    %2026 = vmatpush2.bf16.msra.mxu0 0
    %2027 = vmatprep.subr.bf16.mxu0 0
    %2028 = vmatpush2.bf16.msra.mxu0 0
    %2029 = vmatprep.mubr.bf16.mxu0 0
    %2030 = vmatmul.mubr.bf16.gmra.mxu0 %v1110
    %v2031 = vpop.f32.mrf.mxu0
    %v2032 = vadd.f32 %v1148, %v2031
    %v2033 = vpop.f32.mrf.mxu0
    %v2034 = vadd.f32 %v1152, %v2033
    %v2035 = vpop.f32.mrf.mxu0
    %v2036 = vpop.f32.mrf.mxu0
    %2037 = vdwg.mxu0
    %2038 = vmatprep.subr.bf16.mxu0 %v1700
    %2039 = vmatpush1.bf16.msra.mxu0 %v1699
    %2040 = vmatprep.subr.bf16.mxu0 %v1684
    %2041 = vmatpush1.bf16.msra.mxu0 %v1683
    %2042 = vmatprep.subr.bf16.mxu0 %v1668
    %2043 = vmatpush1.bf16.msra.mxu0 %v1667
    %2044 = vmatprep.subr.bf16.mxu0 %v1652
    %2045 = vmatpush1.bf16.msra.mxu0 %v1651
    %2046 = vmatprep.subr.bf16.mxu0 %v1636
    %2047 = vmatpush1.bf16.msra.mxu0 %v1635
    %2048 = vmatprep.subr.bf16.mxu0 %v1620
    %2049 = vmatpush1.bf16.msra.mxu0 %v1619
    %2050 = vmatprep.subr.bf16.mxu0 %v1604
    %2051 = vmatpush1.bf16.msra.mxu0 %v1603
    %2052 = vmatprep.subr.bf16.mxu0 %v1588
    %2053 = vmatpush1.bf16.msra.mxu0 %v1587
    %2054 = vmatprep.subr.bf16.mxu0 0
    %2055 = vmatpush2.bf16.msra.mxu0 0
    %2056 = vmatprep.subr.bf16.mxu0 0
    %2057 = vmatpush2.bf16.msra.mxu0 0
    %2058 = vmatprep.subr.bf16.mxu0 0
    %2059 = vmatpush2.bf16.msra.mxu0 0
    %2060 = vmatprep.subr.bf16.mxu0 0
    %2061 = vmatpush2.bf16.msra.mxu0 0
    %2062 = vmatprep.subr.bf16.mxu0 0
    %2063 = vmatpush2.bf16.msra.mxu0 0
    %2064 = vmatprep.subr.bf16.mxu0 0
    %2065 = vmatpush2.bf16.msra.mxu0 0
    %2066 = vmatprep.subr.bf16.mxu0 0
    %2067 = vmatpush2.bf16.msra.mxu0 0
    %2068 = vmatprep.subr.bf16.mxu0 0
    %2069 = vmatpush2.bf16.msra.mxu0 0
    %2070 = vmatprep.mubr.bf16.mxu0 0
    %2071 = vmatmul.mubr.bf16.gmra.mxu0 %v1110
    %v2072 = vpop.f32.mrf.mxu0
    %v2073 = vadd.f32 %v1156, %v2072
    %v2074 = vpop.f32.mrf.mxu0
    %v2075 = vadd.f32 %v1160, %v2074
    %v2076 = vpop.f32.mrf.mxu0
    %v2077 = vpop.f32.mrf.mxu0
    %2078 = vdwg.mxu0
    %2079 = vmatprep.subr.bf16.mxu0 %v1702
    %2080 = vmatpush1.bf16.msra.mxu0 %v1701
    %2081 = vmatprep.subr.bf16.mxu0 %v1686
    %2082 = vmatpush1.bf16.msra.mxu0 %v1685
    %2083 = vmatprep.subr.bf16.mxu0 %v1670
    %2084 = vmatpush1.bf16.msra.mxu0 %v1669
    %2085 = vmatprep.subr.bf16.mxu0 %v1654
    %2086 = vmatpush1.bf16.msra.mxu0 %v1653
    %2087 = vmatprep.subr.bf16.mxu0 %v1638
    %2088 = vmatpush1.bf16.msra.mxu0 %v1637
    %2089 = vmatprep.subr.bf16.mxu0 %v1622
    %2090 = vmatpush1.bf16.msra.mxu0 %v1621
    %2091 = vmatprep.subr.bf16.mxu0 %v1606
    %2092 = vmatpush1.bf16.msra.mxu0 %v1605
    %2093 = vmatprep.subr.bf16.mxu0 %v1590
    %2094 = vmatpush1.bf16.msra.mxu0 %v1589
    %2095 = vmatprep.subr.bf16.mxu0 0
    %2096 = vmatpush2.bf16.msra.mxu0 0
    %2097 = vmatprep.subr.bf16.mxu0 0
    %2098 = vmatpush2.bf16.msra.mxu0 0
    %2099 = vmatprep.subr.bf16.mxu0 0
    %2100 = vmatpush2.bf16.msra.mxu0 0
    %2101 = vmatprep.subr.bf16.mxu0 0
    %2102 = vmatpush2.bf16.msra.mxu0 0
    %2103 = vmatprep.subr.bf16.mxu0 0
    %2104 = vmatpush2.bf16.msra.mxu0 0
    %2105 = vmatprep.subr.bf16.mxu0 0
    %2106 = vmatpush2.bf16.msra.mxu0 0
    %2107 = vmatprep.subr.bf16.mxu0 0
    %2108 = vmatpush2.bf16.msra.mxu0 0
    %2109 = vmatprep.subr.bf16.mxu0 0
    %2110 = vmatpush2.bf16.msra.mxu0 0
    %2111 = vmatprep.mubr.bf16.mxu0 0
    %2112 = vmatmul.mubr.bf16.gmra.mxu0 %v1110
    %v2113 = vpop.f32.mrf.mxu0
    %v2114 = vadd.f32 %v1164, %v2113
    %v2115 = vpop.f32.mrf.mxu0
    %v2116 = vadd.f32 %v1168, %v2115
    %v2117 = vpop.f32.mrf.mxu0
    %v2118 = vpop.f32.mrf.mxu0
    %2119 = vdwg.mxu0
    %2120 = vmatprep.subr.bf16.mxu0 %v1704
    %2121 = vmatpush1.bf16.msra.mxu0 %v1703
    %2122 = vmatprep.subr.bf16.mxu0 %v1688
    %2123 = vmatpush1.bf16.msra.mxu0 %v1687
    %2124 = vmatprep.subr.bf16.mxu0 %v1672
    %2125 = vmatpush1.bf16.msra.mxu0 %v1671
    %2126 = vmatprep.subr.bf16.mxu0 %v1656
    %2127 = vmatpush1.bf16.msra.mxu0 %v1655
    %2128 = vmatprep.subr.bf16.mxu0 %v1640
    %2129 = vmatpush1.bf16.msra.mxu0 %v1639
    %2130 = vmatprep.subr.bf16.mxu0 %v1624
    %2131 = vmatpush1.bf16.msra.mxu0 %v1623
    %2132 = vmatprep.subr.bf16.mxu0 %v1608
    %2133 = vmatpush1.bf16.msra.mxu0 %v1607
    %2134 = vmatprep.subr.bf16.mxu0 %v1592
    %2135 = vmatpush1.bf16.msra.mxu0 %v1591
    %2136 = vmatprep.subr.bf16.mxu0 0
    %2137 = vmatpush2.bf16.msra.mxu0 0
    %2138 = vmatprep.subr.bf16.mxu0 0
    %2139 = vmatpush2.bf16.msra.mxu0 0
    %2140 = vmatprep.subr.bf16.mxu0 0
    %2141 = vmatpush2.bf16.msra.mxu0 0
    %2142 = vmatprep.subr.bf16.mxu0 0
    %2143 = vmatpush2.bf16.msra.mxu0 0
    %2144 = vmatprep.subr.bf16.mxu0 0
    %2145 = vmatpush2.bf16.msra.mxu0 0
    %2146 = vmatprep.subr.bf16.mxu0 0
    %2147 = vmatpush2.bf16.msra.mxu0 0
    %2148 = vmatprep.subr.bf16.mxu0 0
    %2149 = vmatpush2.bf16.msra.mxu0 0
    %2150 = vmatprep.subr.bf16.mxu0 0
    %2151 = vmatpush2.bf16.msra.mxu0 0
    %2152 = vmatprep.mubr.bf16.mxu0 0
    %2153 = vmatmul.mubr.bf16.gmra.mxu0 %v1110
    %v2154 = vpop.f32.mrf.mxu0
    %v2155 = vadd.f32 %v1172, %v2154
    %v2156 = vpop.f32.mrf.mxu0
    %v2157 = vadd.f32 %v1176, %v2156
    %v2158 = vpop.f32.mrf.mxu0
    %v2159 = vpop.f32.mrf.mxu0
    %2160 = vdwg.mxu0
    %v2161 = vmax.f32 %v1868, 0.0
    %v2162 = vmax.f32 %v1870, 0.0
    %v2163 = vmax.f32 %v1909, 0.0
    %v2164 = vmax.f32 %v1911, 0.0
    %v2165 = vmax.f32 %v1950, 0.0
    %v2166 = vmax.f32 %v1952, 0.0
    %v2167 = vmax.f32 %v1991, 0.0
    %v2168 = vmax.f32 %v1993, 0.0
    %v2169 = vmax.f32 %v2032, 0.0
    %v2170 = vmax.f32 %v2034, 0.0
    %v2171 = vmax.f32 %v2073, 0.0
    %v2172 = vmax.f32 %v2075, 0.0
    %v2173 = vmax.f32 %v2114, 0.0
    %v2174 = vmax.f32 %v2116, 0.0
    %v2175 = vmax.f32 %v2155, 0.0
    %v2176 = vmax.f32 %v2157, 0.0
    %v2177 = vld [vmem:[#allocation4] sm:$0xf]
    %v2178 = vld [vmem:[#allocation4 + $0x4] sm:$0xf]
    %v2179 = vld [vmem:[#allocation4 + $0x8] sm:$0xf]
    %v2180 = vld [vmem:[#allocation4 + $0xc] sm:$0xf]
    %v2181 = vld [vmem:[#allocation4 + $0x10] sm:$0xf]
    %v2182 = vld [vmem:[#allocation4 + $0x14] sm:$0xf]
    %v2183 = vld [vmem:[#allocation4 + $0x18] sm:$0xf]
    %v2184 = vld [vmem:[#allocation4 + $0x1c] sm:$0xf]
    %v2185 = vld [vmem:[#allocation4 + $0x20] sm:$0xf]
    %v2186 = vld [vmem:[#allocation4 + $0x24] sm:$0xf]
    %v2187 = vld [vmem:[#allocation4 + $0x28] sm:$0xf]
    %v2188 = vld [vmem:[#allocation4 + $0x2c] sm:$0xf]
    %v2189 = vld [vmem:[#allocation4 + $0x30] sm:$0xf]
    %v2190 = vld [vmem:[#allocation4 + $0x34] sm:$0xf]
    %v2191 = vld [vmem:[#allocation4 + $0x38] sm:$0xf]
    %v2192 = vld [vmem:[#allocation4 + $0x3c] sm:$0xf]
    %v2193 = vld [vmem:[#allocation4 + $0x40] sm:$0xf]
    %v2194 = vld [vmem:[#allocation4 + $0x44] sm:$0xf]
    %v2195 = vld [vmem:[#allocation4 + $0x48] sm:$0xf]
    %v2196 = vld [vmem:[#allocation4 + $0x4c] sm:$0xf]
    %v2197 = vld [vmem:[#allocation4 + $0x50] sm:$0xf]
    %v2198 = vld [vmem:[#allocation4 + $0x54] sm:$0xf]
    %v2199 = vld [vmem:[#allocation4 + $0x58] sm:$0xf]
    %v2200 = vld [vmem:[#allocation4 + $0x5c] sm:$0xf]
    %v2201 = vld [vmem:[#allocation4 + $0x60] sm:$0xf]
    %v2202 = vld [vmem:[#allocation4 + $0x64] sm:$0xf]
    %v2203 = vld [vmem:[#allocation4 + $0x68] sm:$0xf]
    %v2204 = vld [vmem:[#allocation4 + $0x6c] sm:$0xf]
    %v2205 = vld [vmem:[#allocation4 + $0x70] sm:$0xf]
    %v2206 = vld [vmem:[#allocation4 + $0x74] sm:$0xf]
    %v2207 = vld [vmem:[#allocation4 + $0x78] sm:$0xf]
    %v2208 = vld [vmem:[#allocation4 + $0x7c] sm:$0xf]
    %v2209 = vld [vmem:[#allocation4 + $0x80] sm:$0xf]
    %v2210 = vld [vmem:[#allocation4 + $0x84] sm:$0xf]
    %v2211 = vld [vmem:[#allocation4 + $0x88] sm:$0xf]
    %v2212 = vld [vmem:[#allocation4 + $0x8c] sm:$0xf]
    %v2213 = vld [vmem:[#allocation4 + $0x90] sm:$0xf]
    %v2214 = vld [vmem:[#allocation4 + $0x94] sm:$0xf]
    %v2215 = vld [vmem:[#allocation4 + $0x98] sm:$0xf]
    %v2216 = vld [vmem:[#allocation4 + $0x9c] sm:$0xf]
    %v2217 = vld [vmem:[#allocation4 + $0xa0] sm:$0xf]
    %v2218 = vld [vmem:[#allocation4 + $0xa4] sm:$0xf]
    %v2219 = vld [vmem:[#allocation4 + $0xa8] sm:$0xf]
    %v2220 = vld [vmem:[#allocation4 + $0xac] sm:$0xf]
    %v2221 = vld [vmem:[#allocation4 + $0xb0] sm:$0xf]
    %v2222 = vld [vmem:[#allocation4 + $0xb4] sm:$0xf]
    %v2223 = vld [vmem:[#allocation4 + $0xb8] sm:$0xf]
    %v2224 = vld [vmem:[#allocation4 + $0xbc] sm:$0xf]
    %v2225 = vld [vmem:[#allocation4 + $0xc0] sm:$0xf]
    %v2226 = vld [vmem:[#allocation4 + $0xc4] sm:$0xf]
    %v2227 = vld [vmem:[#allocation4 + $0xc8] sm:$0xf]
    %v2228 = vld [vmem:[#allocation4 + $0xcc] sm:$0xf]
    %v2229 = vld [vmem:[#allocation4 + $0xd0] sm:$0xf]
    %v2230 = vld [vmem:[#allocation4 + $0xd4] sm:$0xf]
    %v2231 = vld [vmem:[#allocation4 + $0xd8] sm:$0xf]
    %v2232 = vld [vmem:[#allocation4 + $0xdc] sm:$0xf]
    %v2233 = vld [vmem:[#allocation4 + $0xe0] sm:$0xf]
    %v2234 = vld [vmem:[#allocation4 + $0xe4] sm:$0xf]
    %v2235 = vld [vmem:[#allocation4 + $0xe8] sm:$0xf]
    %v2236 = vld [vmem:[#allocation4 + $0xec] sm:$0xf]
    %v2237 = vld [vmem:[#allocation4 + $0xf0] sm:$0xf]
    %v2238 = vld [vmem:[#allocation4 + $0xf4] sm:$0xf]
    %v2239 = vld [vmem:[#allocation4 + $0xf8] sm:$0xf]
    %v2240 = vld [vmem:[#allocation4 + $0xfc] sm:$0xf]
    %v2241 = vld [vmem:[#allocation4 + $0x100] sm:$0xf]
    %v2242 = vld [vmem:[#allocation4 + $0x104] sm:$0xf]
    %v2243 = vld [vmem:[#allocation4 + $0x108] sm:$0xf]
    %v2244 = vld [vmem:[#allocation4 + $0x10c] sm:$0xf]
    %v2245 = vld [vmem:[#allocation4 + $0x110] sm:$0xf]
    %v2246 = vld [vmem:[#allocation4 + $0x114] sm:$0xf]
    %v2247 = vld [vmem:[#allocation4 + $0x118] sm:$0xf]
    %v2248 = vld [vmem:[#allocation4 + $0x11c] sm:$0xf]
    %v2249 = vld [vmem:[#allocation4 + $0x120] sm:$0xf]
    %v2250 = vld [vmem:[#allocation4 + $0x124] sm:$0xf]
    %v2251 = vld [vmem:[#allocation4 + $0x128] sm:$0xf]
    %v2252 = vld [vmem:[#allocation4 + $0x12c] sm:$0xf]
    %v2253 = vld [vmem:[#allocation4 + $0x130] sm:$0xf]
    %v2254 = vld [vmem:[#allocation4 + $0x134] sm:$0xf]
    %v2255 = vld [vmem:[#allocation4 + $0x138] sm:$0xf]
    %v2256 = vld [vmem:[#allocation4 + $0x13c] sm:$0xf]
    %v2257 = vld [vmem:[#allocation4 + $0x140] sm:$0xf]
    %v2258 = vld [vmem:[#allocation4 + $0x144] sm:$0xf]
    %v2259 = vld [vmem:[#allocation4 + $0x148] sm:$0xf]
    %v2260 = vld [vmem:[#allocation4 + $0x14c] sm:$0xf]
    %v2261 = vld [vmem:[#allocation4 + $0x150] sm:$0xf]
    %v2262 = vld [vmem:[#allocation4 + $0x154] sm:$0xf]
    %v2263 = vld [vmem:[#allocation4 + $0x158] sm:$0xf]
    %v2264 = vld [vmem:[#allocation4 + $0x15c] sm:$0xf]
    %v2265 = vld [vmem:[#allocation4 + $0x160] sm:$0xf]
    %v2266 = vld [vmem:[#allocation4 + $0x164] sm:$0xf]
    %v2267 = vld [vmem:[#allocation4 + $0x168] sm:$0xf]
    %v2268 = vld [vmem:[#allocation4 + $0x16c] sm:$0xf]
    %v2269 = vld [vmem:[#allocation4 + $0x170] sm:$0xf]
    %v2270 = vld [vmem:[#allocation4 + $0x174] sm:$0xf]
    %v2271 = vld [vmem:[#allocation4 + $0x178] sm:$0xf]
    %v2272 = vld [vmem:[#allocation4 + $0x17c] sm:$0xf]
    %v2273 = vld [vmem:[#allocation4 + $0x180] sm:$0xf]
    %v2274 = vld [vmem:[#allocation4 + $0x184] sm:$0xf]
    %v2275 = vld [vmem:[#allocation4 + $0x188] sm:$0xf]
    %v2276 = vld [vmem:[#allocation4 + $0x18c] sm:$0xf]
    %v2277 = vld [vmem:[#allocation4 + $0x190] sm:$0xf]
    %v2278 = vld [vmem:[#allocation4 + $0x194] sm:$0xf]
    %v2279 = vld [vmem:[#allocation4 + $0x198] sm:$0xf]
    %v2280 = vld [vmem:[#allocation4 + $0x19c] sm:$0xf]
    %v2281 = vld [vmem:[#allocation4 + $0x1a0] sm:$0xf]
    %v2282 = vld [vmem:[#allocation4 + $0x1a4] sm:$0xf]
    %v2283 = vld [vmem:[#allocation4 + $0x1a8] sm:$0xf]
    %v2284 = vld [vmem:[#allocation4 + $0x1ac] sm:$0xf]
    %v2285 = vld [vmem:[#allocation4 + $0x1b0] sm:$0xf]
    %v2286 = vld [vmem:[#allocation4 + $0x1b4] sm:$0xf]
    %v2287 = vld [vmem:[#allocation4 + $0x1b8] sm:$0xf]
    %v2288 = vld [vmem:[#allocation4 + $0x1bc] sm:$0xf]
    %v2289 = vld [vmem:[#allocation4 + $0x1c0] sm:$0xf]
    %v2290 = vld [vmem:[#allocation4 + $0x1c4] sm:$0xf]
    %v2291 = vld [vmem:[#allocation4 + $0x1c8] sm:$0xf]
    %v2292 = vld [vmem:[#allocation4 + $0x1cc] sm:$0xf]
    %v2293 = vld [vmem:[#allocation4 + $0x1d0] sm:$0xf]
    %v2294 = vld [vmem:[#allocation4 + $0x1d4] sm:$0xf]
    %v2295 = vld [vmem:[#allocation4 + $0x1d8] sm:$0xf]
    %v2296 = vld [vmem:[#allocation4 + $0x1dc] sm:$0xf]
    %v2297 = vld [vmem:[#allocation4 + $0x1e0] sm:$0xf]
    %v2298 = vld [vmem:[#allocation4 + $0x1e4] sm:$0xf]
    %v2299 = vld [vmem:[#allocation4 + $0x1e8] sm:$0xf]
    %v2300 = vld [vmem:[#allocation4 + $0x1ec] sm:$0xf]
    %v2301 = vld [vmem:[#allocation4 + $0x1f0] sm:$0xf]
    %v2302 = vld [vmem:[#allocation4 + $0x1f4] sm:$0xf]
    %v2303 = vld [vmem:[#allocation4 + $0x1f8] sm:$0xf]
    %v2304 = vld [vmem:[#allocation4 + $0x1fc] sm:$0xf]
    %v2305 = vld [vmem:[#allocation4 + $0x200] sm:$0xf]
    %v2306 = vld [vmem:[#allocation4 + $0x204] sm:$0xf]
    %v2307 = vld [vmem:[#allocation4 + $0x208] sm:$0xf]
    %v2308 = vld [vmem:[#allocation4 + $0x20c] sm:$0xf]
    %v2309 = vld [vmem:[#allocation4 + $0x210] sm:$0xf]
    %v2310 = vld [vmem:[#allocation4 + $0x214] sm:$0xf]
    %v2311 = vld [vmem:[#allocation4 + $0x218] sm:$0xf]
    %v2312 = vld [vmem:[#allocation4 + $0x21c] sm:$0xf]
    %v2313 = vld [vmem:[#allocation4 + $0x220] sm:$0xf]
    %v2314 = vld [vmem:[#allocation4 + $0x224] sm:$0xf]
    %v2315 = vld [vmem:[#allocation4 + $0x228] sm:$0xf]
    %v2316 = vld [vmem:[#allocation4 + $0x22c] sm:$0xf]
    %v2317 = vld [vmem:[#allocation4 + $0x230] sm:$0xf]
    %v2318 = vld [vmem:[#allocation4 + $0x234] sm:$0xf]
    %v2319 = vld [vmem:[#allocation4 + $0x238] sm:$0xf]
    %v2320 = vld [vmem:[#allocation4 + $0x23c] sm:$0xf]
    %v2321 = vld [vmem:[#allocation4 + $0x240] sm:$0xf]
    %v2322 = vld [vmem:[#allocation4 + $0x244] sm:$0xf]
    %v2323 = vld [vmem:[#allocation4 + $0x248] sm:$0xf]
    %v2324 = vld [vmem:[#allocation4 + $0x24c] sm:$0xf]
    %v2325 = vld [vmem:[#allocation4 + $0x250] sm:$0xf]
    %v2326 = vld [vmem:[#allocation4 + $0x254] sm:$0xf]
    %v2327 = vld [vmem:[#allocation4 + $0x258] sm:$0xf]
    %v2328 = vld [vmem:[#allocation4 + $0x25c] sm:$0xf]
    %v2329 = vld [vmem:[#allocation4 + $0x260] sm:$0xf]
    %v2330 = vld [vmem:[#allocation4 + $0x264] sm:$0xf]
    %v2331 = vld [vmem:[#allocation4 + $0x268] sm:$0xf]
    %v2332 = vld [vmem:[#allocation4 + $0x26c] sm:$0xf]
    %v2333 = vld [vmem:[#allocation4 + $0x270] sm:$0xf]
    %v2334 = vld [vmem:[#allocation4 + $0x274] sm:$0xf]
    %v2335 = vld [vmem:[#allocation4 + $0x278] sm:$0xf]
    %v2336 = vld [vmem:[#allocation4 + $0x27c] sm:$0xf]
    %v2337 = vld [vmem:[#allocation4 + $0x280] sm:$0xf]
    %v2338 = vld [vmem:[#allocation4 + $0x284] sm:$0xf]
    %v2339 = vld [vmem:[#allocation4 + $0x288] sm:$0xf]
    %v2340 = vld [vmem:[#allocation4 + $0x28c] sm:$0xf]
    %v2341 = vld [vmem:[#allocation4 + $0x290] sm:$0xf]
    %v2342 = vld [vmem:[#allocation4 + $0x294] sm:$0xf]
    %v2343 = vld [vmem:[#allocation4 + $0x298] sm:$0xf]
    %v2344 = vld [vmem:[#allocation4 + $0x29c] sm:$0xf]
    %v2345 = vld [vmem:[#allocation4 + $0x2a0] sm:$0xf]
    %v2346 = vld [vmem:[#allocation4 + $0x2a4] sm:$0xf]
    %v2347 = vld [vmem:[#allocation4 + $0x2a8] sm:$0xf]
    %v2348 = vld [vmem:[#allocation4 + $0x2ac] sm:$0xf]
    %v2349 = vld [vmem:[#allocation4 + $0x2b0] sm:$0xf]
    %v2350 = vld [vmem:[#allocation4 + $0x2b4] sm:$0xf]
    %v2351 = vld [vmem:[#allocation4 + $0x2b8] sm:$0xf]
    %v2352 = vld [vmem:[#allocation4 + $0x2bc] sm:$0xf]
    %v2353 = vld [vmem:[#allocation4 + $0x2c0] sm:$0xf]
    %v2354 = vld [vmem:[#allocation4 + $0x2c4] sm:$0xf]
    %v2355 = vld [vmem:[#allocation4 + $0x2c8] sm:$0xf]
    %v2356 = vld [vmem:[#allocation4 + $0x2cc] sm:$0xf]
    %v2357 = vld [vmem:[#allocation4 + $0x2d0] sm:$0xf]
    %v2358 = vld [vmem:[#allocation4 + $0x2d4] sm:$0xf]
    %v2359 = vld [vmem:[#allocation4 + $0x2d8] sm:$0xf]
    %v2360 = vld [vmem:[#allocation4 + $0x2dc] sm:$0xf]
    %v2361 = vld [vmem:[#allocation4 + $0x2e0] sm:$0xf]
    %v2362 = vld [vmem:[#allocation4 + $0x2e4] sm:$0xf]
    %v2363 = vld [vmem:[#allocation4 + $0x2e8] sm:$0xf]
    %v2364 = vld [vmem:[#allocation4 + $0x2ec] sm:$0xf]
    %v2365 = vld [vmem:[#allocation4 + $0x2f0] sm:$0xf]
    %v2366 = vld [vmem:[#allocation4 + $0x2f4] sm:$0xf]
    %v2367 = vld [vmem:[#allocation4 + $0x2f8] sm:$0xf]
    %v2368 = vld [vmem:[#allocation4 + $0x2fc] sm:$0xf]
    %v2369 = vld [vmem:[#allocation4 + $0x300] sm:$0xf]
    %v2370 = vld [vmem:[#allocation4 + $0x304] sm:$0xf]
    %v2371 = vld [vmem:[#allocation4 + $0x308] sm:$0xf]
    %v2372 = vld [vmem:[#allocation4 + $0x30c] sm:$0xf]
    %v2373 = vld [vmem:[#allocation4 + $0x310] sm:$0xf]
    %v2374 = vld [vmem:[#allocation4 + $0x314] sm:$0xf]
    %v2375 = vld [vmem:[#allocation4 + $0x318] sm:$0xf]
    %v2376 = vld [vmem:[#allocation4 + $0x31c] sm:$0xf]
    %v2377 = vld [vmem:[#allocation4 + $0x320] sm:$0xf]
    %v2378 = vld [vmem:[#allocation4 + $0x324] sm:$0xf]
    %v2379 = vld [vmem:[#allocation4 + $0x328] sm:$0xf]
    %v2380 = vld [vmem:[#allocation4 + $0x32c] sm:$0xf]
    %v2381 = vld [vmem:[#allocation4 + $0x330] sm:$0xf]
    %v2382 = vld [vmem:[#allocation4 + $0x334] sm:$0xf]
    %v2383 = vld [vmem:[#allocation4 + $0x338] sm:$0xf]
    %v2384 = vld [vmem:[#allocation4 + $0x33c] sm:$0xf]
    %v2385 = vld [vmem:[#allocation4 + $0x340] sm:$0xf]
    %v2386 = vld [vmem:[#allocation4 + $0x344] sm:$0xf]
    %v2387 = vld [vmem:[#allocation4 + $0x348] sm:$0xf]
    %v2388 = vld [vmem:[#allocation4 + $0x34c] sm:$0xf]
    %v2389 = vld [vmem:[#allocation4 + $0x350] sm:$0xf]
    %v2390 = vld [vmem:[#allocation4 + $0x354] sm:$0xf]
    %v2391 = vld [vmem:[#allocation4 + $0x358] sm:$0xf]
    %v2392 = vld [vmem:[#allocation4 + $0x35c] sm:$0xf]
    %v2393 = vld [vmem:[#allocation4 + $0x360] sm:$0xf]
    %v2394 = vld [vmem:[#allocation4 + $0x364] sm:$0xf]
    %v2395 = vld [vmem:[#allocation4 + $0x368] sm:$0xf]
    %v2396 = vld [vmem:[#allocation4 + $0x36c] sm:$0xf]
    %v2397 = vld [vmem:[#allocation4 + $0x370] sm:$0xf]
    %v2398 = vld [vmem:[#allocation4 + $0x374] sm:$0xf]
    %v2399 = vld [vmem:[#allocation4 + $0x378] sm:$0xf]
    %v2400 = vld [vmem:[#allocation4 + $0x37c] sm:$0xf]
    %v2401 = vld [vmem:[#allocation4 + $0x380] sm:$0xf]
    %v2402 = vld [vmem:[#allocation4 + $0x384] sm:$0xf]
    %v2403 = vld [vmem:[#allocation4 + $0x388] sm:$0xf]
    %v2404 = vld [vmem:[#allocation4 + $0x38c] sm:$0xf]
    %v2405 = vld [vmem:[#allocation4 + $0x390] sm:$0xf]
    %v2406 = vld [vmem:[#allocation4 + $0x394] sm:$0xf]
    %v2407 = vld [vmem:[#allocation4 + $0x398] sm:$0xf]
    %v2408 = vld [vmem:[#allocation4 + $0x39c] sm:$0xf]
    %v2409 = vld [vmem:[#allocation4 + $0x3a0] sm:$0xf]
    %v2410 = vld [vmem:[#allocation4 + $0x3a4] sm:$0xf]
    %v2411 = vld [vmem:[#allocation4 + $0x3a8] sm:$0xf]
    %v2412 = vld [vmem:[#allocation4 + $0x3ac] sm:$0xf]
    %v2413 = vld [vmem:[#allocation4 + $0x3b0] sm:$0xf]
    %v2414 = vld [vmem:[#allocation4 + $0x3b4] sm:$0xf]
    %v2415 = vld [vmem:[#allocation4 + $0x3b8] sm:$0xf]
    %v2416 = vld [vmem:[#allocation4 + $0x3bc] sm:$0xf]
    %v2417 = vld [vmem:[#allocation4 + $0x3c0] sm:$0xf]
    %v2418 = vld [vmem:[#allocation4 + $0x3c4] sm:$0xf]
    %v2419 = vld [vmem:[#allocation4 + $0x3c8] sm:$0xf]
    %v2420 = vld [vmem:[#allocation4 + $0x3cc] sm:$0xf]
    %v2421 = vld [vmem:[#allocation4 + $0x3d0] sm:$0xf]
    %v2422 = vld [vmem:[#allocation4 + $0x3d4] sm:$0xf]
    %v2423 = vld [vmem:[#allocation4 + $0x3d8] sm:$0xf]
    %v2424 = vld [vmem:[#allocation4 + $0x3dc] sm:$0xf]
    %v2425 = vld [vmem:[#allocation4 + $0x3e0] sm:$0xf]
    %v2426 = vld [vmem:[#allocation4 + $0x3e4] sm:$0xf]
    %v2427 = vld [vmem:[#allocation4 + $0x3e8] sm:$0xf]
    %v2428 = vld [vmem:[#allocation4 + $0x3ec] sm:$0xf]
    %v2429 = vld [vmem:[#allocation4 + $0x3f0] sm:$0xf]
    %v2430 = vld [vmem:[#allocation4 + $0x3f4] sm:$0xf]
    %v2431 = vld [vmem:[#allocation4 + $0x3f8] sm:$0xf]
    %v2432 = vld [vmem:[#allocation4 + $0x3fc] sm:$0xf]
    %v2433 = vld [vmem:[%s23] sm:$0x1]
    %v2434 = vpack.c.bf16 %v2161, %v2161
    %v2435 = vpack.c.bf16 %v2162, %v2162
    %v2436 = vpack.c.bf16 %v2163, %v2163
    %v2437 = vpack.c.bf16 %v2164, %v2164
    %v2438 = vpack.c.bf16 %v2165, %v2165
    %v2439 = vpack.c.bf16 %v2166, %v2166
    %v2440 = vpack.c.bf16 %v2167, %v2167
    %v2441 = vpack.c.bf16 %v2168, %v2168
    %v2442 = vpack.c.bf16 %v2169, %v2169
    %v2443 = vpack.c.bf16 %v2170, %v2170
    %v2444 = vpack.c.bf16 %v2171, %v2171
    %v2445 = vpack.c.bf16 %v2172, %v2172
    %v2446 = vpack.c.bf16 %v2173, %v2173
    %v2447 = vpack.c.bf16 %v2174, %v2174
    %v2448 = vpack.c.bf16 %v2175, %v2175
    %v2449 = vpack.c.bf16 %v2176, %v2176
    %v2451 = vlaneseq
    %v2452 = vshrl.u32 %v2451, 7
    %v2453 = vsub.s32 0, %v2452
    %v2454 = vrot.slane %v2433, %v2453
    %v2712 = vunpack.c.l.b16 %v2177
    %v2713 = vunpack.c.l.b16 %v2178
    %v2714 = vunpack.c.l.b16 %v2179
    %v2715 = vunpack.c.l.b16 %v2180
    %v2716 = vunpack.c.l.b16 %v2181
    %v2717 = vunpack.c.l.b16 %v2182
    %v2718 = vunpack.c.l.b16 %v2183
    %v2719 = vunpack.c.l.b16 %v2184
    %v2720 = vunpack.c.l.b16 %v2185
    %v2721 = vunpack.c.l.b16 %v2186
    %v2722 = vunpack.c.l.b16 %v2187
    %v2723 = vunpack.c.l.b16 %v2188
    %v2724 = vunpack.c.l.b16 %v2189
    %v2725 = vunpack.c.l.b16 %v2190
    %v2726 = vunpack.c.l.b16 %v2191
    %v2727 = vunpack.c.l.b16 %v2192
    %v2728 = vunpack.c.l.b16 %v2193
    %v2729 = vunpack.c.l.b16 %v2194
    %v2730 = vunpack.c.l.b16 %v2195
    %v2731 = vunpack.c.l.b16 %v2196
    %v2732 = vunpack.c.l.b16 %v2197
    %v2733 = vunpack.c.l.b16 %v2198
    %v2734 = vunpack.c.l.b16 %v2199
    %v2735 = vunpack.c.l.b16 %v2200
    %v2736 = vunpack.c.l.b16 %v2201
    %v2737 = vunpack.c.l.b16 %v2202
    %v2738 = vunpack.c.l.b16 %v2203
    %v2739 = vunpack.c.l.b16 %v2204
    %v2740 = vunpack.c.l.b16 %v2205
    %v2741 = vunpack.c.l.b16 %v2206
    %v2742 = vunpack.c.l.b16 %v2207
    %v2743 = vunpack.c.l.b16 %v2208
    %v2744 = vunpack.c.l.b16 %v2209
    %v2745 = vunpack.c.l.b16 %v2210
    %v2746 = vunpack.c.l.b16 %v2211
    %v2747 = vunpack.c.l.b16 %v2212
    %v2748 = vunpack.c.l.b16 %v2213
    %v2749 = vunpack.c.l.b16 %v2214
    %v2750 = vunpack.c.l.b16 %v2215
    %v2751 = vunpack.c.l.b16 %v2216
    %v2752 = vunpack.c.l.b16 %v2217
    %v2753 = vunpack.c.l.b16 %v2218
    %v2754 = vunpack.c.l.b16 %v2219
    %v2755 = vunpack.c.l.b16 %v2220
    %v2756 = vunpack.c.l.b16 %v2221
    %v2757 = vunpack.c.l.b16 %v2222
    %v2758 = vunpack.c.l.b16 %v2223
    %v2759 = vunpack.c.l.b16 %v2224
    %v2760 = vunpack.c.l.b16 %v2225
    %v2761 = vunpack.c.l.b16 %v2226
    %v2762 = vunpack.c.l.b16 %v2227
    %v2763 = vunpack.c.l.b16 %v2228
    %v2764 = vunpack.c.l.b16 %v2229
    %v2765 = vunpack.c.l.b16 %v2230
    %v2766 = vunpack.c.l.b16 %v2231
    %v2767 = vunpack.c.l.b16 %v2232
    %v2768 = vunpack.c.l.b16 %v2233
    %v2769 = vunpack.c.l.b16 %v2234
    %v2770 = vunpack.c.l.b16 %v2235
    %v2771 = vunpack.c.l.b16 %v2236
    %v2772 = vunpack.c.l.b16 %v2237
    %v2773 = vunpack.c.l.b16 %v2238
    %v2774 = vunpack.c.l.b16 %v2239
    %v2775 = vunpack.c.l.b16 %v2240
    %v2776 = vunpack.c.l.b16 %v2241
    %v2777 = vunpack.c.l.b16 %v2242
    %v2778 = vunpack.c.l.b16 %v2243
    %v2779 = vunpack.c.l.b16 %v2244
    %v2780 = vunpack.c.l.b16 %v2245
    %v2781 = vunpack.c.l.b16 %v2246
    %v2782 = vunpack.c.l.b16 %v2247
    %v2783 = vunpack.c.l.b16 %v2248
    %v2784 = vunpack.c.l.b16 %v2249
    %v2785 = vunpack.c.l.b16 %v2250
    %v2786 = vunpack.c.l.b16 %v2251
    %v2787 = vunpack.c.l.b16 %v2252
    %v2788 = vunpack.c.l.b16 %v2253
    %v2789 = vunpack.c.l.b16 %v2254
    %v2790 = vunpack.c.l.b16 %v2255
    %v2791 = vunpack.c.l.b16 %v2256
    %v2792 = vunpack.c.l.b16 %v2257
    %v2793 = vunpack.c.l.b16 %v2258
    %v2794 = vunpack.c.l.b16 %v2259
    %v2795 = vunpack.c.l.b16 %v2260
    %v2796 = vunpack.c.l.b16 %v2261
    %v2797 = vunpack.c.l.b16 %v2262
    %v2798 = vunpack.c.l.b16 %v2263
    %v2799 = vunpack.c.l.b16 %v2264
    %v2800 = vunpack.c.l.b16 %v2265
    %v2801 = vunpack.c.l.b16 %v2266
    %v2802 = vunpack.c.l.b16 %v2267
    %v2803 = vunpack.c.l.b16 %v2268
    %v2804 = vunpack.c.l.b16 %v2269
    %v2805 = vunpack.c.l.b16 %v2270
    %v2806 = vunpack.c.l.b16 %v2271
    %v2807 = vunpack.c.l.b16 %v2272
    %v2808 = vunpack.c.l.b16 %v2273
    %v2809 = vunpack.c.l.b16 %v2274
    %v2810 = vunpack.c.l.b16 %v2275
    %v2811 = vunpack.c.l.b16 %v2276
    %v2812 = vunpack.c.l.b16 %v2277
    %v2813 = vunpack.c.l.b16 %v2278
    %v2814 = vunpack.c.l.b16 %v2279
    %v2815 = vunpack.c.l.b16 %v2280
    %v2816 = vunpack.c.l.b16 %v2281
    %v2817 = vunpack.c.l.b16 %v2282
    %v2818 = vunpack.c.l.b16 %v2283
    %v2819 = vunpack.c.l.b16 %v2284
    %v2820 = vunpack.c.l.b16 %v2285
    %v2821 = vunpack.c.l.b16 %v2286
    %v2822 = vunpack.c.l.b16 %v2287
    %v2823 = vunpack.c.l.b16 %v2288
    %v2824 = vunpack.c.l.b16 %v2289
    %v2825 = vunpack.c.l.b16 %v2290
    %v2826 = vunpack.c.l.b16 %v2291
    %v2827 = vunpack.c.l.b16 %v2292
    %v2828 = vunpack.c.l.b16 %v2293
    %v2829 = vunpack.c.l.b16 %v2294
    %v2830 = vunpack.c.l.b16 %v2295
    %v2831 = vunpack.c.l.b16 %v2296
    %v2832 = vunpack.c.l.b16 %v2297
    %v2833 = vunpack.c.l.b16 %v2298
    %v2834 = vunpack.c.l.b16 %v2299
    %v2835 = vunpack.c.l.b16 %v2300
    %v2836 = vunpack.c.l.b16 %v2301
    %v2837 = vunpack.c.l.b16 %v2302
    %v2838 = vunpack.c.l.b16 %v2303
    %v2839 = vunpack.c.l.b16 %v2304
    %v2840 = vunpack.c.l.b16 %v2305
    %v2841 = vunpack.c.l.b16 %v2306
    %v2842 = vunpack.c.l.b16 %v2307
    %v2843 = vunpack.c.l.b16 %v2308
    %v2844 = vunpack.c.l.b16 %v2309
    %v2845 = vunpack.c.l.b16 %v2310
    %v2846 = vunpack.c.l.b16 %v2311
    %v2847 = vunpack.c.l.b16 %v2312
    %v2848 = vunpack.c.l.b16 %v2313
    %v2849 = vunpack.c.l.b16 %v2314
    %v2850 = vunpack.c.l.b16 %v2315
    %v2851 = vunpack.c.l.b16 %v2316
    %v2852 = vunpack.c.l.b16 %v2317
    %v2853 = vunpack.c.l.b16 %v2318
    %v2854 = vunpack.c.l.b16 %v2319
    %v2855 = vunpack.c.l.b16 %v2320
    %v2856 = vunpack.c.l.b16 %v2321
    %v2857 = vunpack.c.l.b16 %v2322
    %v2858 = vunpack.c.l.b16 %v2323
    %v2859 = vunpack.c.l.b16 %v2324
    %v2860 = vunpack.c.l.b16 %v2325
    %v2861 = vunpack.c.l.b16 %v2326
    %v2862 = vunpack.c.l.b16 %v2327
    %v2863 = vunpack.c.l.b16 %v2328
    %v2864 = vunpack.c.l.b16 %v2329
    %v2865 = vunpack.c.l.b16 %v2330
    %v2866 = vunpack.c.l.b16 %v2331
    %v2867 = vunpack.c.l.b16 %v2332
    %v2868 = vunpack.c.l.b16 %v2333
    %v2869 = vunpack.c.l.b16 %v2334
    %v2870 = vunpack.c.l.b16 %v2335
    %v2871 = vunpack.c.l.b16 %v2336
    %v2872 = vunpack.c.l.b16 %v2337
    %v2873 = vunpack.c.l.b16 %v2338
    %v2874 = vunpack.c.l.b16 %v2339
    %v2875 = vunpack.c.l.b16 %v2340
    %v2876 = vunpack.c.l.b16 %v2341
    %v2877 = vunpack.c.l.b16 %v2342
    %v2878 = vunpack.c.l.b16 %v2343
    %v2879 = vunpack.c.l.b16 %v2344
    %v2880 = vunpack.c.l.b16 %v2345
    %v2881 = vunpack.c.l.b16 %v2346
    %v2882 = vunpack.c.l.b16 %v2347
    %v2883 = vunpack.c.l.b16 %v2348
    %v2884 = vunpack.c.l.b16 %v2349
    %v2885 = vunpack.c.l.b16 %v2350
    %v2886 = vunpack.c.l.b16 %v2351
    %v2887 = vunpack.c.l.b16 %v2352
    %v2888 = vunpack.c.l.b16 %v2353
    %v2889 = vunpack.c.l.b16 %v2354
    %v2890 = vunpack.c.l.b16 %v2355
    %v2891 = vunpack.c.l.b16 %v2356
    %v2892 = vunpack.c.l.b16 %v2357
    %v2893 = vunpack.c.l.b16 %v2358
    %v2894 = vunpack.c.l.b16 %v2359
    %v2895 = vunpack.c.l.b16 %v2360
    %v2896 = vunpack.c.l.b16 %v2361
    %v2897 = vunpack.c.l.b16 %v2362
    %v2898 = vunpack.c.l.b16 %v2363
    %v2899 = vunpack.c.l.b16 %v2364
    %v2900 = vunpack.c.l.b16 %v2365
    %v2901 = vunpack.c.l.b16 %v2366
    %v2902 = vunpack.c.l.b16 %v2367
    %v2903 = vunpack.c.l.b16 %v2368
    %v2904 = vunpack.c.l.b16 %v2369
    %v2905 = vunpack.c.l.b16 %v2370
    %v2906 = vunpack.c.l.b16 %v2371
    %v2907 = vunpack.c.l.b16 %v2372
    %v2908 = vunpack.c.l.b16 %v2373
    %v2909 = vunpack.c.l.b16 %v2374
    %v2910 = vunpack.c.l.b16 %v2375
    %v2911 = vunpack.c.l.b16 %v2376
    %v2912 = vunpack.c.l.b16 %v2377
    %v2913 = vunpack.c.l.b16 %v2378
    %v2914 = vunpack.c.l.b16 %v2379
    %v2915 = vunpack.c.l.b16 %v2380
    %v2916 = vunpack.c.l.b16 %v2381
    %v2917 = vunpack.c.l.b16 %v2382
    %v2918 = vunpack.c.l.b16 %v2383
    %v2919 = vunpack.c.l.b16 %v2384
    %v2920 = vunpack.c.l.b16 %v2385
    %v2921 = vunpack.c.l.b16 %v2386
    %v2922 = vunpack.c.l.b16 %v2387
    %v2923 = vunpack.c.l.b16 %v2388
    %v2924 = vunpack.c.l.b16 %v2389
    %v2925 = vunpack.c.l.b16 %v2390
    %v2926 = vunpack.c.l.b16 %v2391
    %v2927 = vunpack.c.l.b16 %v2392
    %v2928 = vunpack.c.l.b16 %v2393
    %v2929 = vunpack.c.l.b16 %v2394
    %v2930 = vunpack.c.l.b16 %v2395
    %v2931 = vunpack.c.l.b16 %v2396
    %v2932 = vunpack.c.l.b16 %v2397
    %v2933 = vunpack.c.l.b16 %v2398
    %v2934 = vunpack.c.l.b16 %v2399
    %v2935 = vunpack.c.l.b16 %v2400
    %v2936 = vunpack.c.l.b16 %v2401
    %v2937 = vunpack.c.l.b16 %v2402
    %v2938 = vunpack.c.l.b16 %v2403
    %v2939 = vunpack.c.l.b16 %v2404
    %v2940 = vunpack.c.l.b16 %v2405
    %v2941 = vunpack.c.l.b16 %v2406
    %v2942 = vunpack.c.l.b16 %v2407
    %v2943 = vunpack.c.l.b16 %v2408
    %v2944 = vunpack.c.l.b16 %v2409
    %v2945 = vunpack.c.l.b16 %v2410
    %v2946 = vunpack.c.l.b16 %v2411
    %v2947 = vunpack.c.l.b16 %v2412
    %v2948 = vunpack.c.l.b16 %v2413
    %v2949 = vunpack.c.l.b16 %v2414
    %v2950 = vunpack.c.l.b16 %v2415
    %v2951 = vunpack.c.l.b16 %v2416
    %v2952 = vunpack.c.l.b16 %v2417
    %v2953 = vunpack.c.l.b16 %v2418
    %v2954 = vunpack.c.l.b16 %v2419
    %v2955 = vunpack.c.l.b16 %v2420
    %v2956 = vunpack.c.l.b16 %v2421
    %v2957 = vunpack.c.l.b16 %v2422
    %v2958 = vunpack.c.l.b16 %v2423
    %v2959 = vunpack.c.l.b16 %v2424
    %v2960 = vunpack.c.l.b16 %v2425
    %v2961 = vunpack.c.l.b16 %v2426
    %v2962 = vunpack.c.l.b16 %v2427
    %v2963 = vunpack.c.l.b16 %v2428
    %v2964 = vunpack.c.l.b16 %v2429
    %v2965 = vunpack.c.l.b16 %v2430
    %v2966 = vunpack.c.l.b16 %v2431
    %v2967 = vunpack.c.l.b16 %v2432
    %v2968 = vpack.c.b16 %v2713, %v2712
    %v2969 = vpack.c.b16 %v2715, %v2714
    %v2970 = vpack.c.b16 %v2717, %v2716
    %v2971 = vpack.c.b16 %v2719, %v2718
    %v2972 = vpack.c.b16 %v2721, %v2720
    %v2973 = vpack.c.b16 %v2723, %v2722
    %v2974 = vpack.c.b16 %v2725, %v2724
    %v2975 = vpack.c.b16 %v2727, %v2726
    %v2976 = vpack.c.b16 %v2729, %v2728
    %v2977 = vpack.c.b16 %v2731, %v2730
    %v2978 = vpack.c.b16 %v2733, %v2732
    %v2979 = vpack.c.b16 %v2735, %v2734
    %v2980 = vpack.c.b16 %v2737, %v2736
    %v2981 = vpack.c.b16 %v2739, %v2738
    %v2982 = vpack.c.b16 %v2741, %v2740
    %v2983 = vpack.c.b16 %v2743, %v2742
    %v2984 = vpack.c.b16 %v2745, %v2744
    %v2985 = vpack.c.b16 %v2747, %v2746
    %v2986 = vpack.c.b16 %v2749, %v2748
    %v2987 = vpack.c.b16 %v2751, %v2750
    %v2988 = vpack.c.b16 %v2753, %v2752
    %v2989 = vpack.c.b16 %v2755, %v2754
    %v2990 = vpack.c.b16 %v2757, %v2756
    %v2991 = vpack.c.b16 %v2759, %v2758
    %v2992 = vpack.c.b16 %v2761, %v2760
    %v2993 = vpack.c.b16 %v2763, %v2762
    %v2994 = vpack.c.b16 %v2765, %v2764
    %v2995 = vpack.c.b16 %v2767, %v2766
    %v2996 = vpack.c.b16 %v2769, %v2768
    %v2997 = vpack.c.b16 %v2771, %v2770
    %v2998 = vpack.c.b16 %v2773, %v2772
    %v2999 = vpack.c.b16 %v2775, %v2774
    %v3000 = vpack.c.b16 %v2777, %v2776
    %v3001 = vpack.c.b16 %v2779, %v2778
    %v3002 = vpack.c.b16 %v2781, %v2780
    %v3003 = vpack.c.b16 %v2783, %v2782
    %v3004 = vpack.c.b16 %v2785, %v2784
    %v3005 = vpack.c.b16 %v2787, %v2786
    %v3006 = vpack.c.b16 %v2789, %v2788
    %v3007 = vpack.c.b16 %v2791, %v2790
    %v3008 = vpack.c.b16 %v2793, %v2792
    %v3009 = vpack.c.b16 %v2795, %v2794
    %v3010 = vpack.c.b16 %v2797, %v2796
    %v3011 = vpack.c.b16 %v2799, %v2798
    %v3012 = vpack.c.b16 %v2801, %v2800
    %v3013 = vpack.c.b16 %v2803, %v2802
    %v3014 = vpack.c.b16 %v2805, %v2804
    %v3015 = vpack.c.b16 %v2807, %v2806
    %v3016 = vpack.c.b16 %v2809, %v2808
    %v3017 = vpack.c.b16 %v2811, %v2810
    %v3018 = vpack.c.b16 %v2813, %v2812
    %v3019 = vpack.c.b16 %v2815, %v2814
    %v3020 = vpack.c.b16 %v2817, %v2816
    %v3021 = vpack.c.b16 %v2819, %v2818
    %v3022 = vpack.c.b16 %v2821, %v2820
    %v3023 = vpack.c.b16 %v2823, %v2822
    %v3024 = vpack.c.b16 %v2825, %v2824
    %v3025 = vpack.c.b16 %v2827, %v2826
    %v3026 = vpack.c.b16 %v2829, %v2828
    %v3027 = vpack.c.b16 %v2831, %v2830
    %v3028 = vpack.c.b16 %v2833, %v2832
    %v3029 = vpack.c.b16 %v2835, %v2834
    %v3030 = vpack.c.b16 %v2837, %v2836
    %v3031 = vpack.c.b16 %v2839, %v2838
    %v3032 = vpack.c.b16 %v2841, %v2840
    %v3033 = vpack.c.b16 %v2843, %v2842
    %v3034 = vpack.c.b16 %v2845, %v2844
    %v3035 = vpack.c.b16 %v2847, %v2846
    %v3036 = vpack.c.b16 %v2849, %v2848
    %v3037 = vpack.c.b16 %v2851, %v2850
    %v3038 = vpack.c.b16 %v2853, %v2852
    %v3039 = vpack.c.b16 %v2855, %v2854
    %v3040 = vpack.c.b16 %v2857, %v2856
    %v3041 = vpack.c.b16 %v2859, %v2858
    %v3042 = vpack.c.b16 %v2861, %v2860
    %v3043 = vpack.c.b16 %v2863, %v2862
    %v3044 = vpack.c.b16 %v2865, %v2864
    %v3045 = vpack.c.b16 %v2867, %v2866
    %v3046 = vpack.c.b16 %v2869, %v2868
    %v3047 = vpack.c.b16 %v2871, %v2870
    %v3048 = vpack.c.b16 %v2873, %v2872
    %v3049 = vpack.c.b16 %v2875, %v2874
    %v3050 = vpack.c.b16 %v2877, %v2876
    %v3051 = vpack.c.b16 %v2879, %v2878
    %v3052 = vpack.c.b16 %v2881, %v2880
    %v3053 = vpack.c.b16 %v2883, %v2882
    %v3054 = vpack.c.b16 %v2885, %v2884
    %v3055 = vpack.c.b16 %v2887, %v2886
    %v3056 = vpack.c.b16 %v2889, %v2888
    %v3057 = vpack.c.b16 %v2891, %v2890
    %v3058 = vpack.c.b16 %v2893, %v2892
    %v3059 = vpack.c.b16 %v2895, %v2894
    %v3060 = vpack.c.b16 %v2897, %v2896
    %v3061 = vpack.c.b16 %v2899, %v2898
    %v3062 = vpack.c.b16 %v2901, %v2900
    %v3063 = vpack.c.b16 %v2903, %v2902
    %v3064 = vpack.c.b16 %v2905, %v2904
    %v3065 = vpack.c.b16 %v2907, %v2906
    %v3066 = vpack.c.b16 %v2909, %v2908
    %v3067 = vpack.c.b16 %v2911, %v2910
    %v3068 = vpack.c.b16 %v2913, %v2912
    %v3069 = vpack.c.b16 %v2915, %v2914
    %v3070 = vpack.c.b16 %v2917, %v2916
    %v3071 = vpack.c.b16 %v2919, %v2918
    %v3072 = vpack.c.b16 %v2921, %v2920
    %v3073 = vpack.c.b16 %v2923, %v2922
    %v3074 = vpack.c.b16 %v2925, %v2924
    %v3075 = vpack.c.b16 %v2927, %v2926
    %v3076 = vpack.c.b16 %v2929, %v2928
    %v3077 = vpack.c.b16 %v2931, %v2930
    %v3078 = vpack.c.b16 %v2933, %v2932
    %v3079 = vpack.c.b16 %v2935, %v2934
    %v3080 = vpack.c.b16 %v2937, %v2936
    %v3081 = vpack.c.b16 %v2939, %v2938
    %v3082 = vpack.c.b16 %v2941, %v2940
    %v3083 = vpack.c.b16 %v2943, %v2942
    %v3084 = vpack.c.b16 %v2945, %v2944
    %v3085 = vpack.c.b16 %v2947, %v2946
    %v3086 = vpack.c.b16 %v2949, %v2948
    %v3087 = vpack.c.b16 %v2951, %v2950
    %v3088 = vpack.c.b16 %v2953, %v2952
    %v3089 = vpack.c.b16 %v2955, %v2954
    %v3090 = vpack.c.b16 %v2957, %v2956
    %v3091 = vpack.c.b16 %v2959, %v2958
    %v3092 = vpack.c.b16 %v2961, %v2960
    %v3093 = vpack.c.b16 %v2963, %v2962
    %v3094 = vpack.c.b16 %v2965, %v2964
    %v3095 = vpack.c.b16 %v2967, %v2966
    %3224 = vmatprep.subr.bf16.mxu0 0
    %3225 = vmatpush1.bf16.msra.mxu0 %v2975
    %3226 = vmatprep.subr.bf16.mxu0 0
    %3227 = vmatpush1.bf16.msra.mxu0 %v2974
    %3228 = vmatprep.subr.bf16.mxu0 0
    %3229 = vmatpush1.bf16.msra.mxu0 %v2973
    %3230 = vmatprep.subr.bf16.mxu0 0
    %3231 = vmatpush1.bf16.msra.mxu0 %v2972
    %3232 = vmatprep.subr.bf16.mxu0 0
    %3233 = vmatpush1.bf16.msra.mxu0 %v2971
    %3234 = vmatprep.subr.bf16.mxu0 0
    %3235 = vmatpush1.bf16.msra.mxu0 %v2970
    %3236 = vmatprep.subr.bf16.mxu0 0
    %3237 = vmatpush1.bf16.msra.mxu0 %v2969
    %3238 = vmatprep.subr.bf16.mxu0 0
    %3239 = vmatpush1.bf16.msra.mxu0 %v2968
    %3240 = vmatprep.subr.bf16.mxu0 0
    %3241 = vmatpush2.bf16.msra.mxu0 %v2983
    %3242 = vmatprep.subr.bf16.mxu0 0
    %3243 = vmatpush2.bf16.msra.mxu0 %v2982
    %3244 = vmatprep.subr.bf16.mxu0 0
    %3245 = vmatpush2.bf16.msra.mxu0 %v2981
    %3246 = vmatprep.subr.bf16.mxu0 0
    %3247 = vmatpush2.bf16.msra.mxu0 %v2980
    %3248 = vmatprep.subr.bf16.mxu0 0
    %3249 = vmatpush2.bf16.msra.mxu0 %v2979
    %3250 = vmatprep.subr.bf16.mxu0 0
    %3251 = vmatpush2.bf16.msra.mxu0 %v2978
    %3252 = vmatprep.subr.bf16.mxu0 0
    %3253 = vmatpush2.bf16.msra.mxu0 %v2977
    %3254 = vmatprep.subr.bf16.mxu0 0
    %3255 = vmatpush2.bf16.msra.mxu0 %v2976
    %3256 = vmatprep.mubr.bf16.mxu0 %v2435
    %3257 = vmatmul.mubr.bf16.gmra.mxu0 %v2434
    %v3258 = vpop.f32.mrf.mxu0
    %v3259 = vadd.f32 %v2454, %v3258
    %v3260 = vpop.f32.mrf.mxu0
    %v3261 = vpop.f32.mrf.mxu0
    %v3262 = vpop.f32.mrf.mxu0
    %3263 = vdwg.mxu0
    %3264 = vmatprep.subr.bf16.mxu0 0
    %3265 = vmatpush1.bf16.msra.mxu0 %v2991
    %3266 = vmatprep.subr.bf16.mxu0 0
    %3267 = vmatpush1.bf16.msra.mxu0 %v2990
    %3268 = vmatprep.subr.bf16.mxu0 0
    %3269 = vmatpush1.bf16.msra.mxu0 %v2989
    %3270 = vmatprep.subr.bf16.mxu0 0
    %3271 = vmatpush1.bf16.msra.mxu0 %v2988
    %3272 = vmatprep.subr.bf16.mxu0 0
    %3273 = vmatpush1.bf16.msra.mxu0 %v2987
    %3274 = vmatprep.subr.bf16.mxu0 0
    %3275 = vmatpush1.bf16.msra.mxu0 %v2986
    %3276 = vmatprep.subr.bf16.mxu0 0
    %3277 = vmatpush1.bf16.msra.mxu0 %v2985
    %3278 = vmatprep.subr.bf16.mxu0 0
    %3279 = vmatpush1.bf16.msra.mxu0 %v2984
    %3280 = vmatprep.subr.bf16.mxu0 0
    %3281 = vmatpush2.bf16.msra.mxu0 %v2999
    %3282 = vmatprep.subr.bf16.mxu0 0
    %3283 = vmatpush2.bf16.msra.mxu0 %v2998
    %3284 = vmatprep.subr.bf16.mxu0 0
    %3285 = vmatpush2.bf16.msra.mxu0 %v2997
    %3286 = vmatprep.subr.bf16.mxu0 0
    %3287 = vmatpush2.bf16.msra.mxu0 %v2996
    %3288 = vmatprep.subr.bf16.mxu0 0
    %3289 = vmatpush2.bf16.msra.mxu0 %v2995
    %3290 = vmatprep.subr.bf16.mxu0 0
    %3291 = vmatpush2.bf16.msra.mxu0 %v2994
    %3292 = vmatprep.subr.bf16.mxu0 0
    %3293 = vmatpush2.bf16.msra.mxu0 %v2993
    %3294 = vmatprep.subr.bf16.mxu0 0
    %3295 = vmatpush2.bf16.msra.mxu0 %v2992
    %3296 = vmatprep.mubr.bf16.mxu0 %v2437
    %3297 = vmatmul.mubr.bf16.gmra.mxu0 %v2436
    %v3298 = vpop.f32.mrf.mxu0
    %v3299 = vadd.f32 %v3259, %v3298
    %v3300 = vpop.f32.mrf.mxu0
    %v3301 = vpop.f32.mrf.mxu0
    %v3302 = vpop.f32.mrf.mxu0
    %3303 = vdwg.mxu0
    %3304 = vmatprep.subr.bf16.mxu0 0
    %3305 = vmatpush1.bf16.msra.mxu0 %v3007
    %3306 = vmatprep.subr.bf16.mxu0 0
    %3307 = vmatpush1.bf16.msra.mxu0 %v3006
    %3308 = vmatprep.subr.bf16.mxu0 0
    %3309 = vmatpush1.bf16.msra.mxu0 %v3005
    %3310 = vmatprep.subr.bf16.mxu0 0
    %3311 = vmatpush1.bf16.msra.mxu0 %v3004
    %3312 = vmatprep.subr.bf16.mxu0 0
    %3313 = vmatpush1.bf16.msra.mxu0 %v3003
    %3314 = vmatprep.subr.bf16.mxu0 0
    %3315 = vmatpush1.bf16.msra.mxu0 %v3002
    %3316 = vmatprep.subr.bf16.mxu0 0
    %3317 = vmatpush1.bf16.msra.mxu0 %v3001
    %3318 = vmatprep.subr.bf16.mxu0 0
    %3319 = vmatpush1.bf16.msra.mxu0 %v3000
    %3320 = vmatprep.subr.bf16.mxu0 0
    %3321 = vmatpush2.bf16.msra.mxu0 %v3015
    %3322 = vmatprep.subr.bf16.mxu0 0
    %3323 = vmatpush2.bf16.msra.mxu0 %v3014
    %3324 = vmatprep.subr.bf16.mxu0 0
    %3325 = vmatpush2.bf16.msra.mxu0 %v3013
    %3326 = vmatprep.subr.bf16.mxu0 0
    %3327 = vmatpush2.bf16.msra.mxu0 %v3012
    %3328 = vmatprep.subr.bf16.mxu0 0
    %3329 = vmatpush2.bf16.msra.mxu0 %v3011
    %3330 = vmatprep.subr.bf16.mxu0 0
    %3331 = vmatpush2.bf16.msra.mxu0 %v3010
    %3332 = vmatprep.subr.bf16.mxu0 0
    %3333 = vmatpush2.bf16.msra.mxu0 %v3009
    %3334 = vmatprep.subr.bf16.mxu0 0
    %3335 = vmatpush2.bf16.msra.mxu0 %v3008
    %3336 = vmatprep.mubr.bf16.mxu0 %v2439
    %3337 = vmatmul.mubr.bf16.gmra.mxu0 %v2438
    %v3338 = vpop.f32.mrf.mxu0
    %v3339 = vadd.f32 %v3299, %v3338
    %v3340 = vpop.f32.mrf.mxu0
    %v3341 = vpop.f32.mrf.mxu0
    %v3342 = vpop.f32.mrf.mxu0
    %3343 = vdwg.mxu0
    %3344 = vmatprep.subr.bf16.mxu0 0
    %3345 = vmatpush1.bf16.msra.mxu0 %v3023
    %3346 = vmatprep.subr.bf16.mxu0 0
    %3347 = vmatpush1.bf16.msra.mxu0 %v3022
    %3348 = vmatprep.subr.bf16.mxu0 0
    %3349 = vmatpush1.bf16.msra.mxu0 %v3021
    %3350 = vmatprep.subr.bf16.mxu0 0
    %3351 = vmatpush1.bf16.msra.mxu0 %v3020
    %3352 = vmatprep.subr.bf16.mxu0 0
    %3353 = vmatpush1.bf16.msra.mxu0 %v3019
    %3354 = vmatprep.subr.bf16.mxu0 0
    %3355 = vmatpush1.bf16.msra.mxu0 %v3018
    %3356 = vmatprep.subr.bf16.mxu0 0
    %3357 = vmatpush1.bf16.msra.mxu0 %v3017
    %3358 = vmatprep.subr.bf16.mxu0 0
    %3359 = vmatpush1.bf16.msra.mxu0 %v3016
    %3360 = vmatprep.subr.bf16.mxu0 0
    %3361 = vmatpush2.bf16.msra.mxu0 %v3031
    %3362 = vmatprep.subr.bf16.mxu0 0
    %3363 = vmatpush2.bf16.msra.mxu0 %v3030
    %3364 = vmatprep.subr.bf16.mxu0 0
    %3365 = vmatpush2.bf16.msra.mxu0 %v3029
    %3366 = vmatprep.subr.bf16.mxu0 0
    %3367 = vmatpush2.bf16.msra.mxu0 %v3028
    %3368 = vmatprep.subr.bf16.mxu0 0
    %3369 = vmatpush2.bf16.msra.mxu0 %v3027
    %3370 = vmatprep.subr.bf16.mxu0 0
    %3371 = vmatpush2.bf16.msra.mxu0 %v3026
    %3372 = vmatprep.subr.bf16.mxu0 0
    %3373 = vmatpush2.bf16.msra.mxu0 %v3025
    %3374 = vmatprep.subr.bf16.mxu0 0
    %3375 = vmatpush2.bf16.msra.mxu0 %v3024
    %3376 = vmatprep.mubr.bf16.mxu0 %v2441
    %3377 = vmatmul.mubr.bf16.gmra.mxu0 %v2440
    %v3378 = vpop.f32.mrf.mxu0
    %v3379 = vadd.f32 %v3339, %v3378
    %v3380 = vpop.f32.mrf.mxu0
    %v3381 = vpop.f32.mrf.mxu0
    %v3382 = vpop.f32.mrf.mxu0
    %3383 = vdwg.mxu0
    %3384 = vmatprep.subr.bf16.mxu0 0
    %3385 = vmatpush1.bf16.msra.mxu0 %v3039
    %3386 = vmatprep.subr.bf16.mxu0 0
    %3387 = vmatpush1.bf16.msra.mxu0 %v3038
    %3388 = vmatprep.subr.bf16.mxu0 0
    %3389 = vmatpush1.bf16.msra.mxu0 %v3037
    %3390 = vmatprep.subr.bf16.mxu0 0
    %3391 = vmatpush1.bf16.msra.mxu0 %v3036
    %3392 = vmatprep.subr.bf16.mxu0 0
    %3393 = vmatpush1.bf16.msra.mxu0 %v3035
    %3394 = vmatprep.subr.bf16.mxu0 0
    %3395 = vmatpush1.bf16.msra.mxu0 %v3034
    %3396 = vmatprep.subr.bf16.mxu0 0
    %3397 = vmatpush1.bf16.msra.mxu0 %v3033
    %3398 = vmatprep.subr.bf16.mxu0 0
    %3399 = vmatpush1.bf16.msra.mxu0 %v3032
    %3400 = vmatprep.subr.bf16.mxu0 0
    %3401 = vmatpush2.bf16.msra.mxu0 %v3047
    %3402 = vmatprep.subr.bf16.mxu0 0
    %3403 = vmatpush2.bf16.msra.mxu0 %v3046
    %3404 = vmatprep.subr.bf16.mxu0 0
    %3405 = vmatpush2.bf16.msra.mxu0 %v3045
    %3406 = vmatprep.subr.bf16.mxu0 0
    %3407 = vmatpush2.bf16.msra.mxu0 %v3044
    %3408 = vmatprep.subr.bf16.mxu0 0
    %3409 = vmatpush2.bf16.msra.mxu0 %v3043
    %3410 = vmatprep.subr.bf16.mxu0 0
    %3411 = vmatpush2.bf16.msra.mxu0 %v3042
    %3412 = vmatprep.subr.bf16.mxu0 0
    %3413 = vmatpush2.bf16.msra.mxu0 %v3041
    %3414 = vmatprep.subr.bf16.mxu0 0
    %3415 = vmatpush2.bf16.msra.mxu0 %v3040
    %3416 = vmatprep.mubr.bf16.mxu0 %v2443
    %3417 = vmatmul.mubr.bf16.gmra.mxu0 %v2442
    %v3418 = vpop.f32.mrf.mxu0
    %v3419 = vadd.f32 %v3379, %v3418
    %v3420 = vpop.f32.mrf.mxu0
    %v3421 = vpop.f32.mrf.mxu0
    %v3422 = vpop.f32.mrf.mxu0
    %3423 = vdwg.mxu0
    %3424 = vmatprep.subr.bf16.mxu0 0
    %3425 = vmatpush1.bf16.msra.mxu0 %v3055
    %3426 = vmatprep.subr.bf16.mxu0 0
    %3427 = vmatpush1.bf16.msra.mxu0 %v3054
    %3428 = vmatprep.subr.bf16.mxu0 0
    %3429 = vmatpush1.bf16.msra.mxu0 %v3053
    %3430 = vmatprep.subr.bf16.mxu0 0
    %3431 = vmatpush1.bf16.msra.mxu0 %v3052
    %3432 = vmatprep.subr.bf16.mxu0 0
    %3433 = vmatpush1.bf16.msra.mxu0 %v3051
    %3434 = vmatprep.subr.bf16.mxu0 0
    %3435 = vmatpush1.bf16.msra.mxu0 %v3050
    %3436 = vmatprep.subr.bf16.mxu0 0
    %3437 = vmatpush1.bf16.msra.mxu0 %v3049
    %3438 = vmatprep.subr.bf16.mxu0 0
    %3439 = vmatpush1.bf16.msra.mxu0 %v3048
    %3440 = vmatprep.subr.bf16.mxu0 0
    %3441 = vmatpush2.bf16.msra.mxu0 %v3063
    %3442 = vmatprep.subr.bf16.mxu0 0
    %3443 = vmatpush2.bf16.msra.mxu0 %v3062
    %3444 = vmatprep.subr.bf16.mxu0 0
    %3445 = vmatpush2.bf16.msra.mxu0 %v3061
    %3446 = vmatprep.subr.bf16.mxu0 0
    %3447 = vmatpush2.bf16.msra.mxu0 %v3060
    %3448 = vmatprep.subr.bf16.mxu0 0
    %3449 = vmatpush2.bf16.msra.mxu0 %v3059
    %3450 = vmatprep.subr.bf16.mxu0 0
    %3451 = vmatpush2.bf16.msra.mxu0 %v3058
    %3452 = vmatprep.subr.bf16.mxu0 0
    %3453 = vmatpush2.bf16.msra.mxu0 %v3057
    %3454 = vmatprep.subr.bf16.mxu0 0
    %3455 = vmatpush2.bf16.msra.mxu0 %v3056
    %3456 = vmatprep.mubr.bf16.mxu0 %v2445
    %3457 = vmatmul.mubr.bf16.gmra.mxu0 %v2444
    %v3458 = vpop.f32.mrf.mxu0
    %v3459 = vadd.f32 %v3419, %v3458
    %v3460 = vpop.f32.mrf.mxu0
    %v3461 = vpop.f32.mrf.mxu0
    %v3462 = vpop.f32.mrf.mxu0
    %3463 = vdwg.mxu0
    %3464 = vmatprep.subr.bf16.mxu0 0
    %3465 = vmatpush1.bf16.msra.mxu0 %v3071
    %3466 = vmatprep.subr.bf16.mxu0 0
    %3467 = vmatpush1.bf16.msra.mxu0 %v3070
    %3468 = vmatprep.subr.bf16.mxu0 0
    %3469 = vmatpush1.bf16.msra.mxu0 %v3069
    %3470 = vmatprep.subr.bf16.mxu0 0
    %3471 = vmatpush1.bf16.msra.mxu0 %v3068
    %3472 = vmatprep.subr.bf16.mxu0 0
    %3473 = vmatpush1.bf16.msra.mxu0 %v3067
    %3474 = vmatprep.subr.bf16.mxu0 0
    %3475 = vmatpush1.bf16.msra.mxu0 %v3066
    %3476 = vmatprep.subr.bf16.mxu0 0
    %3477 = vmatpush1.bf16.msra.mxu0 %v3065
    %3478 = vmatprep.subr.bf16.mxu0 0
    %3479 = vmatpush1.bf16.msra.mxu0 %v3064
    %3480 = vmatprep.subr.bf16.mxu0 0
    %3481 = vmatpush2.bf16.msra.mxu0 %v3079
    %3482 = vmatprep.subr.bf16.mxu0 0
    %3483 = vmatpush2.bf16.msra.mxu0 %v3078
    %3484 = vmatprep.subr.bf16.mxu0 0
    %3485 = vmatpush2.bf16.msra.mxu0 %v3077
    %3486 = vmatprep.subr.bf16.mxu0 0
    %3487 = vmatpush2.bf16.msra.mxu0 %v3076
    %3488 = vmatprep.subr.bf16.mxu0 0
    %3489 = vmatpush2.bf16.msra.mxu0 %v3075
    %3490 = vmatprep.subr.bf16.mxu0 0
    %3491 = vmatpush2.bf16.msra.mxu0 %v3074
    %3492 = vmatprep.subr.bf16.mxu0 0
    %3493 = vmatpush2.bf16.msra.mxu0 %v3073
    %3494 = vmatprep.subr.bf16.mxu0 0
    %3495 = vmatpush2.bf16.msra.mxu0 %v3072
    %3496 = vmatprep.mubr.bf16.mxu0 %v2447
    %3497 = vmatmul.mubr.bf16.gmra.mxu0 %v2446
    %v3498 = vpop.f32.mrf.mxu0
    %v3499 = vadd.f32 %v3459, %v3498
    %v3500 = vpop.f32.mrf.mxu0
    %v3501 = vpop.f32.mrf.mxu0
    %v3502 = vpop.f32.mrf.mxu0
    %3503 = vdwg.mxu0
    %3504 = vmatprep.subr.bf16.mxu0 0
    %3505 = vmatpush1.bf16.msra.mxu0 %v3087
    %3506 = vmatprep.subr.bf16.mxu0 0
    %3507 = vmatpush1.bf16.msra.mxu0 %v3086
    %3508 = vmatprep.subr.bf16.mxu0 0
    %3509 = vmatpush1.bf16.msra.mxu0 %v3085
    %3510 = vmatprep.subr.bf16.mxu0 0
    %3511 = vmatpush1.bf16.msra.mxu0 %v3084
    %3512 = vmatprep.subr.bf16.mxu0 0
    %3513 = vmatpush1.bf16.msra.mxu0 %v3083
    %3514 = vmatprep.subr.bf16.mxu0 0
    %3515 = vmatpush1.bf16.msra.mxu0 %v3082
    %3516 = vmatprep.subr.bf16.mxu0 0
    %3517 = vmatpush1.bf16.msra.mxu0 %v3081
    %3518 = vmatprep.subr.bf16.mxu0 0
    %3519 = vmatpush1.bf16.msra.mxu0 %v3080
    %3520 = vmatprep.subr.bf16.mxu0 0
    %3521 = vmatpush2.bf16.msra.mxu0 %v3095
    %3522 = vmatprep.subr.bf16.mxu0 0
    %3523 = vmatpush2.bf16.msra.mxu0 %v3094
    %3524 = vmatprep.subr.bf16.mxu0 0
    %3525 = vmatpush2.bf16.msra.mxu0 %v3093
    %3526 = vmatprep.subr.bf16.mxu0 0
    %3527 = vmatpush2.bf16.msra.mxu0 %v3092
    %3528 = vmatprep.subr.bf16.mxu0 0
    %3529 = vmatpush2.bf16.msra.mxu0 %v3091
    %3530 = vmatprep.subr.bf16.mxu0 0
    %3531 = vmatpush2.bf16.msra.mxu0 %v3090
    %3532 = vmatprep.subr.bf16.mxu0 0
    %3533 = vmatpush2.bf16.msra.mxu0 %v3089
    %3534 = vmatprep.subr.bf16.mxu0 0
    %3535 = vmatpush2.bf16.msra.mxu0 %v3088
    %3536 = vmatprep.mubr.bf16.mxu0 %v2449
    %3537 = vmatmul.mubr.bf16.gmra.mxu0 %v2448
    %v3538 = vpop.f32.mrf.mxu0
    %v3539 = vadd.f32 %v3499, %v3538
    %v3540 = vpop.f32.mrf.mxu0
    %v3541 = vpop.f32.mrf.mxu0
    %v3542 = vpop.f32.mrf.mxu0
    %3543 = vdwg.mxu0
    %v3544 = vadd.f32 %v979, %v3539
    %v3545 = vld [vmem:[%s25] sm:$0x1]
    %v3546 = vld [vmem:[%s27] sm:$0x1]
    %3547 = vadd.xlane.f32.xlu0 %v3544
    %v3548 = vpop.xlane.xlu0 %3547
    %v3549 = vmul.f32 %v3548, 0.03125
    %v3550 = vsub.f32 %v3544, %v3549
    %v3551 = vmul.f32 %v3550, %v194
    %v3552 = vmul.f32 %v3551, %v3551
    %3553 = vadd.xlane.f32.xlu0 %v3552
    %v3554 = vpop.xlane.xlu0 %3553
    %v3555 = vmul.f32 %v3554, 0.03125
    %v3556 = vadd.f32 %v3555, 1e-05
    %v3557 = vrsqrt.pop %v3556
    %v3558 = vmul.f32 %v3551, %v3557
    %v3560 = vlaneseq
    %v3561 = vshrl.u32 %v3560, 7
    %v3562 = vsub.s32 0, %v3561
    %v3563 = vrot.slane %v3545, %v3562
    %v3565 = vmul.f32 %v3558, %v3563
    %v3567 = vlaneseq
    %v3568 = vshrl.u32 %v3567, 7
    %v3569 = vsub.s32 0, %v3568
    %v3570 = vrot.slane %v3546, %v3569
    %v3572 = vadd.f32 %v3565, %v3570
    %v3573 = vld [vmem:[%s29] sm:$0x1]
    %v3574 = vld [vmem:[%s31] sm:$0x1]
    %3575 = vadd.xlane.f32.xlu0 %v3572
    %v3576 = vpop.xlane.xlu0 %3575
    %v3577 = vmul.f32 %v3576, 0.03125
    %v3578 = vsub.f32 %v3572, %v3577
    %v3579 = vmul.f32 %v3578, %v194
    %v3580 = vmul.f32 %v3579, %v3579
    %3581 = vadd.xlane.f32.xlu0 %v3580
    %v3582 = vpop.xlane.xlu0 %3581
    %v3583 = vmul.f32 %v3582, 0.03125
    %v3584 = vadd.f32 %v3583, 1e-05
    %v3585 = vrsqrt.pop %v3584
    %v3586 = vmul.f32 %v3579, %v3585
    %v3588 = vlaneseq
    %v3589 = vshrl.u32 %v3588, 7
    %v3590 = vsub.s32 0, %v3589
    %v3591 = vrot.slane %v3573, %v3590
    %v3593 = vmul.f32 %v3586, %v3591
    %v3595 = vlaneseq
    %v3596 = vshrl.u32 %v3595, 7
    %v3597 = vsub.s32 0, %v3596
    %v3598 = vrot.slane %v3574, %v3597
    %v3600 = vadd.f32 %v3593, %v3598
    %v3601 = vpack.c.bf16 %v3600, %v3600
    %v3602 = vld [vmem:[%s33] sm:$0xf]
    %v3603 = vld [vmem:[%s33 + $0x4] sm:$0xf]
    %v3604 = vld [vmem:[%s33 + $0x8] sm:$0xf]
    %v3605 = vld [vmem:[%s33 + $0xc] sm:$0xf]
    %v3606 = vld [vmem:[%s33 + $0x10] sm:$0xf]
    %v3607 = vld [vmem:[%s33 + $0x14] sm:$0xf]
    %v3608 = vld [vmem:[%s33 + $0x18] sm:$0xf]
    %v3609 = vld [vmem:[%s33 + $0x1c] sm:$0xf]
    %v3610 = vld [vmem:[%s33 + $0x20] sm:$0xf]
    %v3611 = vld [vmem:[%s33 + $0x24] sm:$0xf]
    %v3612 = vld [vmem:[%s33 + $0x28] sm:$0xf]
    %v3613 = vld [vmem:[%s33 + $0x2c] sm:$0xf]
    %v3614 = vld [vmem:[%s33 + $0x30] sm:$0xf]
    %v3615 = vld [vmem:[%s33 + $0x34] sm:$0xf]
    %v3616 = vld [vmem:[%s33 + $0x38] sm:$0xf]
    %v3617 = vld [vmem:[%s33 + $0x3c] sm:$0xf]
    %v3618 = vld [vmem:[%s35] sm:$0x1]
    %v3620 = vlaneseq
    %v3621 = vshrl.u32 %v3620, 7
    %v3622 = vsub.s32 0, %v3621
    %v3623 = vrot.slane %v3618, %v3622
    %v3641 = vunpack.c.l.b16 %v3602
    %v3642 = vunpack.c.l.b16 %v3603
    %v3643 = vunpack.c.l.b16 %v3604
    %v3644 = vunpack.c.l.b16 %v3605
    %v3645 = vunpack.c.l.b16 %v3606
    %v3646 = vunpack.c.l.b16 %v3607
    %v3647 = vunpack.c.l.b16 %v3608
    %v3648 = vunpack.c.l.b16 %v3609
    %v3649 = vunpack.c.l.b16 %v3610
    %v3650 = vunpack.c.l.b16 %v3611
    %v3651 = vunpack.c.l.b16 %v3612
    %v3652 = vunpack.c.l.b16 %v3613
    %v3653 = vunpack.c.l.b16 %v3614
    %v3654 = vunpack.c.l.b16 %v3615
    %v3655 = vunpack.c.l.b16 %v3616
    %v3656 = vunpack.c.l.b16 %v3617
    %v3657 = vpack.c.b16 %v3642, %v3641
    %v3658 = vpack.c.b16 %v3644, %v3643
    %v3659 = vpack.c.b16 %v3646, %v3645
    %v3660 = vpack.c.b16 %v3648, %v3647
    %v3661 = vpack.c.b16 %v3650, %v3649
    %v3662 = vpack.c.b16 %v3652, %v3651
    %v3663 = vpack.c.b16 %v3654, %v3653
    %v3664 = vpack.c.b16 %v3656, %v3655
    %3673 = vmatprep.subr.bf16.mxu0 0
    %3674 = vmatpush1.bf16.msra.mxu0 %v3664
    %3675 = vmatprep.subr.bf16.mxu0 0
    %3676 = vmatpush1.bf16.msra.mxu0 %v3663
    %3677 = vmatprep.subr.bf16.mxu0 0
    %3678 = vmatpush1.bf16.msra.mxu0 %v3662
    %3679 = vmatprep.subr.bf16.mxu0 0
    %3680 = vmatpush1.bf16.msra.mxu0 %v3661
    %3681 = vmatprep.subr.bf16.mxu0 0
    %3682 = vmatpush1.bf16.msra.mxu0 %v3660
    %3683 = vmatprep.subr.bf16.mxu0 0
    %3684 = vmatpush1.bf16.msra.mxu0 %v3659
    %3685 = vmatprep.subr.bf16.mxu0 0
    %3686 = vmatpush1.bf16.msra.mxu0 %v3658
    %3687 = vmatprep.subr.bf16.mxu0 0
    %3688 = vmatpush1.bf16.msra.mxu0 %v3657
    %3689 = vmatprep.subr.bf16.mxu0 0
    %3690 = vmatpush2.bf16.msra.mxu0 0
    %3691 = vmatprep.subr.bf16.mxu0 0
    %3692 = vmatpush2.bf16.msra.mxu0 0
    %3693 = vmatprep.subr.bf16.mxu0 0
    %3694 = vmatpush2.bf16.msra.mxu0 0
    %3695 = vmatprep.subr.bf16.mxu0 0
    %3696 = vmatpush2.bf16.msra.mxu0 0
    %3697 = vmatprep.subr.bf16.mxu0 0
    %3698 = vmatpush2.bf16.msra.mxu0 0
    %3699 = vmatprep.subr.bf16.mxu0 0
    %3700 = vmatpush2.bf16.msra.mxu0 0
    %3701 = vmatprep.subr.bf16.mxu0 0
    %3702 = vmatpush2.bf16.msra.mxu0 0
    %3703 = vmatprep.subr.bf16.mxu0 0
    %3704 = vmatpush2.bf16.msra.mxu0 0
    %3705 = vmatprep.mubr.bf16.mxu0 0
    %3706 = vmatmul.mubr.bf16.gmra.mxu0 %v3601
    %v3707 = vpop.f32.mrf.mxu0
    %v3708 = vadd.f32 %v3623, %v3707
    %v3709 = vpop.f32.mrf.mxu0
    %v3710 = vpop.f32.mrf.mxu0
    %v3711 = vpop.f32.mrf.mxu0
    %3712 = vdwg.mxu0
    %v3713 = vld [vmem:[%s7] sm:$0x1]
    %v3715 = vlaneseq
    %v3716 = vshrl.u32 %v3715, 7
    %v3717 = vsub.s32 0, %v3716
    %v3718 = vrot.slane %v3713, %v3717
    %v3720 = vadd.f32 %v3718, %v3718
    %v3721 = vld [vmem:[%s37] sm:$0x1]
    %v3722 = vld [vmem:[%s39] sm:$0x1]
    %3723 = vadd.xlane.f32.xlu0 %v3720
    %v3724 = vpop.xlane.xlu0 %3723
    %v3725 = vmul.f32 %v3724, 0.03125
    %v3726 = vsub.f32 %v3720, %v3725
    %v3727 = vmul.f32 %v3726, %v194
    %v3728 = vmul.f32 %v3727, %v3727
    %3729 = vadd.xlane.f32.xlu0 %v3728
    %v3730 = vpop.xlane.xlu0 %3729
    %v3731 = vmul.f32 %v3730, 0.03125
    %v3732 = vadd.f32 %v3731, 1e-05
    %v3733 = vrsqrt.pop %v3732
    %v3734 = vmul.f32 %v3727, %v3733
    %v3736 = vlaneseq
    %v3737 = vshrl.u32 %v3736, 7
    %v3738 = vsub.s32 0, %v3737
    %v3739 = vrot.slane %v3721, %v3738
    %v3741 = vmul.f32 %v3734, %v3739
    %v3743 = vlaneseq
    %v3744 = vshrl.u32 %v3743, 7
    %v3745 = vsub.s32 0, %v3744
    %v3746 = vrot.slane %v3722, %v3745
    %v3748 = vadd.f32 %v3741, %v3746
    %v3749 = vadd.f32 %v3748, %v3708
    %v3750 = vld [vmem:[%s41] sm:$0x1]
    %v3751 = vld [vmem:[%s43] sm:$0x1]
    %3752 = vadd.xlane.f32.xlu0 %v3749
    %v3753 = vpop.xlane.xlu0 %3752
    %v3754 = vmul.f32 %v3753, 0.03125
    %v3755 = vsub.f32 %v3749, %v3754
    %v3756 = vmul.f32 %v3755, %v194
    %v3757 = vmul.f32 %v3756, %v3756
    %3758 = vadd.xlane.f32.xlu0 %v3757
    %v3759 = vpop.xlane.xlu0 %3758
    %v3760 = vmul.f32 %v3759, 0.03125
    %v3761 = vadd.f32 %v3760, 1e-05
    %v3762 = vrsqrt.pop %v3761
    %v3763 = vmul.f32 %v3756, %v3762
    %v3765 = vlaneseq
    %v3766 = vshrl.u32 %v3765, 7
    %v3767 = vsub.s32 0, %v3766
    %v3768 = vrot.slane %v3750, %v3767
    %v3770 = vmul.f32 %v3763, %v3768
    %v3772 = vlaneseq
    %v3773 = vshrl.u32 %v3772, 7
    %v3774 = vsub.s32 0, %v3773
    %v3775 = vrot.slane %v3751, %v3774
    %v3777 = vadd.f32 %v3770, %v3775
    %v3778 = vld [vmem:[#allocation6] sm:$0xff]
    %v3779 = vld [vmem:[#allocation6 + $0x8] sm:$0xff]
    %v3780 = vld [vmem:[#allocation6 + $0x10] sm:$0xff]
    %v3781 = vld [vmem:[#allocation6 + $0x18] sm:$0xff]
    %v3782 = vld [vmem:[#allocation6 + $0x20] sm:$0xff]
    %v3783 = vld [vmem:[#allocation6 + $0x28] sm:$0xff]
    %v3784 = vld [vmem:[#allocation6 + $0x30] sm:$0xff]
    %v3785 = vld [vmem:[#allocation6 + $0x38] sm:$0xff]
    %v3786 = vld [vmem:[#allocation6 + $0x40] sm:$0xff]
    %v3787 = vld [vmem:[#allocation6 + $0x48] sm:$0xff]
    %v3788 = vld [vmem:[#allocation6 + $0x50] sm:$0xff]
    %v3789 = vld [vmem:[#allocation6 + $0x58] sm:$0xff]
    %v3790 = vld [vmem:[#allocation6 + $0x60] sm:$0xff]
    %v3791 = vld [vmem:[#allocation6 + $0x68] sm:$0xff]
    %v3792 = vld [vmem:[#allocation6 + $0x70] sm:$0xff]
    %v3793 = vld [vmem:[#allocation6 + $0x78] sm:$0xff]
    %v3794 = vld [vmem:[#allocation6 + $0x80] sm:$0xff]
    %v3795 = vld [vmem:[#allocation6 + $0x88] sm:$0xff]
    %v3796 = vld [vmem:[#allocation6 + $0x90] sm:$0xff]
    %v3797 = vld [vmem:[#allocation6 + $0x98] sm:$0xff]
    %v3798 = vld [vmem:[#allocation6 + $0xa0] sm:$0xff]
    %v3799 = vld [vmem:[#allocation6 + $0xa8] sm:$0xff]
    %v3800 = vld [vmem:[#allocation6 + $0xb0] sm:$0xff]
    %v3801 = vld [vmem:[#allocation6 + $0xb8] sm:$0xff]
    %v3802 = vld [vmem:[#allocation6 + $0xc0] sm:$0xff]
    %v3803 = vld [vmem:[#allocation6 + $0xc8] sm:$0xff]
    %v3804 = vld [vmem:[#allocation6 + $0xd0] sm:$0xff]
    %v3805 = vld [vmem:[#allocation6 + $0xd8] sm:$0xff]
    %v3806 = vld [vmem:[#allocation6 + $0xe0] sm:$0xff]
    %v3807 = vld [vmem:[#allocation6 + $0xe8] sm:$0xff]
    %v3808 = vld [vmem:[#allocation6 + $0xf0] sm:$0xff]
    %v3809 = vld [vmem:[#allocation6 + $0xf8] sm:$0xff]
    %v3810 = vld [vmem:[#allocation6 + $0x100] sm:$0xff]
    %v3811 = vld [vmem:[#allocation6 + $0x108] sm:$0xff]
    %v3812 = vld [vmem:[#allocation6 + $0x110] sm:$0xff]
    %v3813 = vld [vmem:[#allocation6 + $0x118] sm:$0xff]
    %v3814 = vld [vmem:[#allocation6 + $0x120] sm:$0xff]
    %v3815 = vld [vmem:[#allocation6 + $0x128] sm:$0xff]
    %v3816 = vld [vmem:[#allocation6 + $0x130] sm:$0xff]
    %v3817 = vld [vmem:[#allocation6 + $0x138] sm:$0xff]
    %v3818 = vld [vmem:[#allocation6 + $0x140] sm:$0xff]
    %v3819 = vld [vmem:[#allocation6 + $0x148] sm:$0xff]
    %v3820 = vld [vmem:[#allocation6 + $0x150] sm:$0xff]
    %v3821 = vld [vmem:[#allocation6 + $0x158] sm:$0xff]
    %v3822 = vld [vmem:[#allocation6 + $0x160] sm:$0xff]
    %v3823 = vld [vmem:[#allocation6 + $0x168] sm:$0xff]
    %v3824 = vld [vmem:[#allocation6 + $0x170] sm:$0xff]
    %v3825 = vld [vmem:[#allocation6 + $0x178] sm:$0xff]
    %v3826 = vld [vmem:[#allocation6 + $0x180] sm:$0xff]
    %v3827 = vld [vmem:[#allocation6 + $0x188] sm:$0xff]
    %v3828 = vld [vmem:[#allocation6 + $0x190] sm:$0xff]
    %v3829 = vld [vmem:[#allocation6 + $0x198] sm:$0xff]
    %v3830 = vld [vmem:[#allocation6 + $0x1a0] sm:$0xff]
    %v3831 = vld [vmem:[#allocation6 + $0x1a8] sm:$0xff]
    %v3832 = vld [vmem:[#allocation6 + $0x1b0] sm:$0xff]
    %v3833 = vld [vmem:[#allocation6 + $0x1b8] sm:$0xff]
    %v3834 = vld [vmem:[#allocation6 + $0x1c0] sm:$0xff]
    %v3835 = vld [vmem:[#allocation6 + $0x1c8] sm:$0xff]
    %v3836 = vld [vmem:[#allocation6 + $0x1d0] sm:$0xff]
    %v3837 = vld [vmem:[#allocation6 + $0x1d8] sm:$0xff]
    %v3838 = vld [vmem:[#allocation6 + $0x1e0] sm:$0xff]
    %v3839 = vld [vmem:[#allocation6 + $0x1e8] sm:$0xff]
    %v3840 = vld [vmem:[#allocation6 + $0x1f0] sm:$0xff]
    %v3841 = vld [vmem:[#allocation6 + $0x1f8] sm:$0xff]
    %v3842 = vld [vmem:[#allocation6 + $0x200] sm:$0xff]
    %v3843 = vld [vmem:[#allocation6 + $0x208] sm:$0xff]
    %v3844 = vld [vmem:[#allocation6 + $0x210] sm:$0xff]
    %v3845 = vld [vmem:[#allocation6 + $0x218] sm:$0xff]
    %v3846 = vld [vmem:[#allocation6 + $0x220] sm:$0xff]
    %v3847 = vld [vmem:[#allocation6 + $0x228] sm:$0xff]
    %v3848 = vld [vmem:[#allocation6 + $0x230] sm:$0xff]
    %v3849 = vld [vmem:[#allocation6 + $0x238] sm:$0xff]
    %v3850 = vld [vmem:[#allocation6 + $0x240] sm:$0xff]
    %v3851 = vld [vmem:[#allocation6 + $0x248] sm:$0xff]
    %v3852 = vld [vmem:[#allocation6 + $0x250] sm:$0xff]
    %v3853 = vld [vmem:[#allocation6 + $0x258] sm:$0xff]
    %v3854 = vld [vmem:[#allocation6 + $0x260] sm:$0xff]
    %v3855 = vld [vmem:[#allocation6 + $0x268] sm:$0xff]
    %v3856 = vld [vmem:[#allocation6 + $0x270] sm:$0xff]
    %v3857 = vld [vmem:[#allocation6 + $0x278] sm:$0xff]
    %v3858 = vld [vmem:[#allocation6 + $0x280] sm:$0xff]
    %v3859 = vld [vmem:[#allocation6 + $0x288] sm:$0xff]
    %v3860 = vld [vmem:[#allocation6 + $0x290] sm:$0xff]
    %v3861 = vld [vmem:[#allocation6 + $0x298] sm:$0xff]
    %v3862 = vld [vmem:[#allocation6 + $0x2a0] sm:$0xff]
    %v3863 = vld [vmem:[#allocation6 + $0x2a8] sm:$0xff]
    %v3864 = vld [vmem:[#allocation6 + $0x2b0] sm:$0xff]
    %v3865 = vld [vmem:[#allocation6 + $0x2b8] sm:$0xff]
    %v3866 = vld [vmem:[#allocation6 + $0x2c0] sm:$0xff]
    %v3867 = vld [vmem:[#allocation6 + $0x2c8] sm:$0xff]
    %v3868 = vld [vmem:[#allocation6 + $0x2d0] sm:$0xff]
    %v3869 = vld [vmem:[#allocation6 + $0x2d8] sm:$0xff]
    %v3870 = vld [vmem:[#allocation6 + $0x2e0] sm:$0xff]
    %v3871 = vld [vmem:[#allocation6 + $0x2e8] sm:$0xff]
    %v3872 = vld [vmem:[#allocation6 + $0x2f0] sm:$0xff]
    %v3873 = vld [vmem:[#allocation6 + $0x2f8] sm:$0xff]
    %v3874 = vld [vmem:[#allocation6 + $0x300] sm:$0xff]
    %v3875 = vld [vmem:[#allocation6 + $0x308] sm:$0xff]
    %v3876 = vld [vmem:[#allocation6 + $0x310] sm:$0xff]
    %v3877 = vld [vmem:[#allocation6 + $0x318] sm:$0xff]
    %v3878 = vld [vmem:[#allocation6 + $0x320] sm:$0xff]
    %v3879 = vld [vmem:[#allocation6 + $0x328] sm:$0xff]
    %v3880 = vld [vmem:[#allocation6 + $0x330] sm:$0xff]
    %v3881 = vld [vmem:[#allocation6 + $0x338] sm:$0xff]
    %v3882 = vld [vmem:[#allocation6 + $0x340] sm:$0xff]
    %v3883 = vld [vmem:[#allocation6 + $0x348] sm:$0xff]
    %v3884 = vld [vmem:[#allocation6 + $0x350] sm:$0xff]
    %v3885 = vld [vmem:[#allocation6 + $0x358] sm:$0xff]
    %v3886 = vld [vmem:[#allocation6 + $0x360] sm:$0xff]
    %v3887 = vld [vmem:[#allocation6 + $0x368] sm:$0xff]
    %v3888 = vld [vmem:[#allocation6 + $0x370] sm:$0xff]
    %v3889 = vld [vmem:[#allocation6 + $0x378] sm:$0xff]
    %v3890 = vld [vmem:[#allocation6 + $0x380] sm:$0xff]
    %v3891 = vld [vmem:[#allocation6 + $0x388] sm:$0xff]
    %v3892 = vld [vmem:[#allocation6 + $0x390] sm:$0xff]
    %v3893 = vld [vmem:[#allocation6 + $0x398] sm:$0xff]
    %v3894 = vld [vmem:[#allocation6 + $0x3a0] sm:$0xff]
    %v3895 = vld [vmem:[#allocation6 + $0x3a8] sm:$0xff]
    %v3896 = vld [vmem:[#allocation6 + $0x3b0] sm:$0xff]
    %v3897 = vld [vmem:[#allocation6 + $0x3b8] sm:$0xff]
    %v3898 = vld [vmem:[#allocation6 + $0x3c0] sm:$0xff]
    %v3899 = vld [vmem:[#allocation6 + $0x3c8] sm:$0xff]
    %v3900 = vld [vmem:[#allocation6 + $0x3d0] sm:$0xff]
    %v3901 = vld [vmem:[#allocation6 + $0x3d8] sm:$0xff]
    %v3902 = vld [vmem:[#allocation6 + $0x3e0] sm:$0xff]
    %v3903 = vld [vmem:[#allocation6 + $0x3e8] sm:$0xff]
    %v3904 = vld [vmem:[#allocation6 + $0x3f0] sm:$0xff]
    %v3905 = vld [vmem:[#allocation6 + $0x3f8] sm:$0xff]
    %v3906 = vld [vmem:[%s51] sm:$0xff]
    %v3907 = vld [vmem:[%s51 + $0x8] sm:$0xff]
    %v3908 = vpack.c.bf16 %v3777, %v3777
    %v3911 = vlaneseq
    %v3912 = vshrl.u32 %v3911, 7
    %v3913 = vsub.s32 0, %v3912
    %v3914 = vrot.slane %v3906, %v3913
    %v3915 = vlaneseq
    %v3916 = vshrl.u32 %v3915, 7
    %v3917 = vsub.s32 1, %v3916
    %v3918 = vrot.slane %v3906, %v3917
    %v3919 = vlaneseq
    %v3920 = vshrl.u32 %v3919, 7
    %v3921 = vsub.s32 2, %v3920
    %v3922 = vrot.slane %v3906, %v3921
    %v3923 = vlaneseq
    %v3924 = vshrl.u32 %v3923, 7
    %v3925 = vsub.s32 3, %v3924
    %v3926 = vrot.slane %v3906, %v3925
    %v3927 = vlaneseq
    %v3928 = vshrl.u32 %v3927, 7
    %v3929 = vsub.s32 4, %v3928
    %v3930 = vrot.slane %v3906, %v3929
    %v3931 = vlaneseq
    %v3932 = vshrl.u32 %v3931, 7
    %v3933 = vsub.s32 5, %v3932
    %v3934 = vrot.slane %v3906, %v3933
    %v3935 = vlaneseq
    %v3936 = vshrl.u32 %v3935, 7
    %v3937 = vsub.s32 6, %v3936
    %v3938 = vrot.slane %v3906, %v3937
    %v3939 = vlaneseq
    %v3940 = vshrl.u32 %v3939, 7
    %v3941 = vsub.s32 7, %v3940
    %v3942 = vrot.slane %v3906, %v3941
    %v3943 = vlaneseq
    %v3944 = vshrl.u32 %v3943, 7
    %v3945 = vsub.s32 0, %v3944
    %v3946 = vrot.slane %v3907, %v3945
    %v3947 = vlaneseq
    %v3948 = vshrl.u32 %v3947, 7
    %v3949 = vsub.s32 1, %v3948
    %v3950 = vrot.slane %v3907, %v3949
    %v3951 = vlaneseq
    %v3952 = vshrl.u32 %v3951, 7
    %v3953 = vsub.s32 2, %v3952
    %v3954 = vrot.slane %v3907, %v3953
    %v3955 = vlaneseq
    %v3956 = vshrl.u32 %v3955, 7
    %v3957 = vsub.s32 3, %v3956
    %v3958 = vrot.slane %v3907, %v3957
    %v3959 = vlaneseq
    %v3960 = vshrl.u32 %v3959, 7
    %v3961 = vsub.s32 4, %v3960
    %v3962 = vrot.slane %v3907, %v3961
    %v3963 = vlaneseq
    %v3964 = vshrl.u32 %v3963, 7
    %v3965 = vsub.s32 5, %v3964
    %v3966 = vrot.slane %v3907, %v3965
    %v3967 = vlaneseq
    %v3968 = vshrl.u32 %v3967, 7
    %v3969 = vsub.s32 6, %v3968
    %v3970 = vrot.slane %v3907, %v3969
    %v3971 = vlaneseq
    %v3972 = vshrl.u32 %v3971, 7
    %v3973 = vsub.s32 7, %v3972
    %v3974 = vrot.slane %v3907, %v3973
    %v4119 = vunpack.c.l.b16 %v3778
    %v4120 = vunpack.c.h.b16 %v3778
    %v4121 = vunpack.c.l.b16 %v3779
    %v4122 = vunpack.c.h.b16 %v3779
    %v4123 = vunpack.c.l.b16 %v3780
    %v4124 = vunpack.c.h.b16 %v3780
    %v4125 = vunpack.c.l.b16 %v3781
    %v4126 = vunpack.c.h.b16 %v3781
    %v4127 = vunpack.c.l.b16 %v3782
    %v4128 = vunpack.c.h.b16 %v3782
    %v4129 = vunpack.c.l.b16 %v3783
    %v4130 = vunpack.c.h.b16 %v3783
    %v4131 = vunpack.c.l.b16 %v3784
    %v4132 = vunpack.c.h.b16 %v3784
    %v4133 = vunpack.c.l.b16 %v3785
    %v4134 = vunpack.c.h.b16 %v3785
    %v4135 = vunpack.c.l.b16 %v3786
    %v4136 = vunpack.c.h.b16 %v3786
    %v4137 = vunpack.c.l.b16 %v3787
    %v4138 = vunpack.c.h.b16 %v3787
    %v4139 = vunpack.c.l.b16 %v3788
    %v4140 = vunpack.c.h.b16 %v3788
    %v4141 = vunpack.c.l.b16 %v3789
    %v4142 = vunpack.c.h.b16 %v3789
    %v4143 = vunpack.c.l.b16 %v3790
    %v4144 = vunpack.c.h.b16 %v3790
    %v4145 = vunpack.c.l.b16 %v3791
    %v4146 = vunpack.c.h.b16 %v3791
    %v4147 = vunpack.c.l.b16 %v3792
    %v4148 = vunpack.c.h.b16 %v3792
    %v4149 = vunpack.c.l.b16 %v3793
    %v4150 = vunpack.c.h.b16 %v3793
    %v4151 = vunpack.c.l.b16 %v3794
    %v4152 = vunpack.c.h.b16 %v3794
    %v4153 = vunpack.c.l.b16 %v3795
    %v4154 = vunpack.c.h.b16 %v3795
    %v4155 = vunpack.c.l.b16 %v3796
    %v4156 = vunpack.c.h.b16 %v3796
    %v4157 = vunpack.c.l.b16 %v3797
    %v4158 = vunpack.c.h.b16 %v3797
    %v4159 = vunpack.c.l.b16 %v3798
    %v4160 = vunpack.c.h.b16 %v3798
    %v4161 = vunpack.c.l.b16 %v3799
    %v4162 = vunpack.c.h.b16 %v3799
    %v4163 = vunpack.c.l.b16 %v3800
    %v4164 = vunpack.c.h.b16 %v3800
    %v4165 = vunpack.c.l.b16 %v3801
    %v4166 = vunpack.c.h.b16 %v3801
    %v4167 = vunpack.c.l.b16 %v3802
    %v4168 = vunpack.c.h.b16 %v3802
    %v4169 = vunpack.c.l.b16 %v3803
    %v4170 = vunpack.c.h.b16 %v3803
    %v4171 = vunpack.c.l.b16 %v3804
    %v4172 = vunpack.c.h.b16 %v3804
    %v4173 = vunpack.c.l.b16 %v3805
    %v4174 = vunpack.c.h.b16 %v3805
    %v4175 = vunpack.c.l.b16 %v3806
    %v4176 = vunpack.c.h.b16 %v3806
    %v4177 = vunpack.c.l.b16 %v3807
    %v4178 = vunpack.c.h.b16 %v3807
    %v4179 = vunpack.c.l.b16 %v3808
    %v4180 = vunpack.c.h.b16 %v3808
    %v4181 = vunpack.c.l.b16 %v3809
    %v4182 = vunpack.c.h.b16 %v3809
    %v4183 = vunpack.c.l.b16 %v3810
    %v4184 = vunpack.c.h.b16 %v3810
    %v4185 = vunpack.c.l.b16 %v3811
    %v4186 = vunpack.c.h.b16 %v3811
    %v4187 = vunpack.c.l.b16 %v3812
    %v4188 = vunpack.c.h.b16 %v3812
    %v4189 = vunpack.c.l.b16 %v3813
    %v4190 = vunpack.c.h.b16 %v3813
    %v4191 = vunpack.c.l.b16 %v3814
    %v4192 = vunpack.c.h.b16 %v3814
    %v4193 = vunpack.c.l.b16 %v3815
    %v4194 = vunpack.c.h.b16 %v3815
    %v4195 = vunpack.c.l.b16 %v3816
    %v4196 = vunpack.c.h.b16 %v3816
    %v4197 = vunpack.c.l.b16 %v3817
    %v4198 = vunpack.c.h.b16 %v3817
    %v4199 = vunpack.c.l.b16 %v3818
    %v4200 = vunpack.c.h.b16 %v3818
    %v4201 = vunpack.c.l.b16 %v3819
    %v4202 = vunpack.c.h.b16 %v3819
    %v4203 = vunpack.c.l.b16 %v3820
    %v4204 = vunpack.c.h.b16 %v3820
    %v4205 = vunpack.c.l.b16 %v3821
    %v4206 = vunpack.c.h.b16 %v3821
    %v4207 = vunpack.c.l.b16 %v3822
    %v4208 = vunpack.c.h.b16 %v3822
    %v4209 = vunpack.c.l.b16 %v3823
    %v4210 = vunpack.c.h.b16 %v3823
    %v4211 = vunpack.c.l.b16 %v3824
    %v4212 = vunpack.c.h.b16 %v3824
    %v4213 = vunpack.c.l.b16 %v3825
    %v4214 = vunpack.c.h.b16 %v3825
    %v4215 = vunpack.c.l.b16 %v3826
    %v4216 = vunpack.c.h.b16 %v3826
    %v4217 = vunpack.c.l.b16 %v3827
    %v4218 = vunpack.c.h.b16 %v3827
    %v4219 = vunpack.c.l.b16 %v3828
    %v4220 = vunpack.c.h.b16 %v3828
    %v4221 = vunpack.c.l.b16 %v3829
    %v4222 = vunpack.c.h.b16 %v3829
    %v4223 = vunpack.c.l.b16 %v3830
    %v4224 = vunpack.c.h.b16 %v3830
    %v4225 = vunpack.c.l.b16 %v3831
    %v4226 = vunpack.c.h.b16 %v3831
    %v4227 = vunpack.c.l.b16 %v3832
    %v4228 = vunpack.c.h.b16 %v3832
    %v4229 = vunpack.c.l.b16 %v3833
    %v4230 = vunpack.c.h.b16 %v3833
    %v4231 = vunpack.c.l.b16 %v3834
    %v4232 = vunpack.c.h.b16 %v3834
    %v4233 = vunpack.c.l.b16 %v3835
    %v4234 = vunpack.c.h.b16 %v3835
    %v4235 = vunpack.c.l.b16 %v3836
    %v4236 = vunpack.c.h.b16 %v3836
    %v4237 = vunpack.c.l.b16 %v3837
    %v4238 = vunpack.c.h.b16 %v3837
    %v4239 = vunpack.c.l.b16 %v3838
    %v4240 = vunpack.c.h.b16 %v3838
    %v4241 = vunpack.c.l.b16 %v3839
    %v4242 = vunpack.c.h.b16 %v3839
    %v4243 = vunpack.c.l.b16 %v3840
    %v4244 = vunpack.c.h.b16 %v3840
    %v4245 = vunpack.c.l.b16 %v3841
    %v4246 = vunpack.c.h.b16 %v3841
    %v4247 = vunpack.c.l.b16 %v3842
    %v4248 = vunpack.c.h.b16 %v3842
    %v4249 = vunpack.c.l.b16 %v3843
    %v4250 = vunpack.c.h.b16 %v3843
    %v4251 = vunpack.c.l.b16 %v3844
    %v4252 = vunpack.c.h.b16 %v3844
    %v4253 = vunpack.c.l.b16 %v3845
    %v4254 = vunpack.c.h.b16 %v3845
    %v4255 = vunpack.c.l.b16 %v3846
    %v4256 = vunpack.c.h.b16 %v3846
    %v4257 = vunpack.c.l.b16 %v3847
    %v4258 = vunpack.c.h.b16 %v3847
    %v4259 = vunpack.c.l.b16 %v3848
    %v4260 = vunpack.c.h.b16 %v3848
    %v4261 = vunpack.c.l.b16 %v3849
    %v4262 = vunpack.c.h.b16 %v3849
    %v4263 = vunpack.c.l.b16 %v3850
    %v4264 = vunpack.c.h.b16 %v3850
    %v4265 = vunpack.c.l.b16 %v3851
    %v4266 = vunpack.c.h.b16 %v3851
    %v4267 = vunpack.c.l.b16 %v3852
    %v4268 = vunpack.c.h.b16 %v3852
    %v4269 = vunpack.c.l.b16 %v3853
    %v4270 = vunpack.c.h.b16 %v3853
    %v4271 = vunpack.c.l.b16 %v3854
    %v4272 = vunpack.c.h.b16 %v3854
    %v4273 = vunpack.c.l.b16 %v3855
    %v4274 = vunpack.c.h.b16 %v3855
    %v4275 = vunpack.c.l.b16 %v3856
    %v4276 = vunpack.c.h.b16 %v3856
    %v4277 = vunpack.c.l.b16 %v3857
    %v4278 = vunpack.c.h.b16 %v3857
    %v4279 = vunpack.c.l.b16 %v3858
    %v4280 = vunpack.c.h.b16 %v3858
    %v4281 = vunpack.c.l.b16 %v3859
    %v4282 = vunpack.c.h.b16 %v3859
    %v4283 = vunpack.c.l.b16 %v3860
    %v4284 = vunpack.c.h.b16 %v3860
    %v4285 = vunpack.c.l.b16 %v3861
    %v4286 = vunpack.c.h.b16 %v3861
    %v4287 = vunpack.c.l.b16 %v3862
    %v4288 = vunpack.c.h.b16 %v3862
    %v4289 = vunpack.c.l.b16 %v3863
    %v4290 = vunpack.c.h.b16 %v3863
    %v4291 = vunpack.c.l.b16 %v3864
    %v4292 = vunpack.c.h.b16 %v3864
    %v4293 = vunpack.c.l.b16 %v3865
    %v4294 = vunpack.c.h.b16 %v3865
    %v4295 = vunpack.c.l.b16 %v3866
    %v4296 = vunpack.c.h.b16 %v3866
    %v4297 = vunpack.c.l.b16 %v3867
    %v4298 = vunpack.c.h.b16 %v3867
    %v4299 = vunpack.c.l.b16 %v3868
    %v4300 = vunpack.c.h.b16 %v3868
    %v4301 = vunpack.c.l.b16 %v3869
    %v4302 = vunpack.c.h.b16 %v3869
    %v4303 = vunpack.c.l.b16 %v3870
    %v4304 = vunpack.c.h.b16 %v3870
    %v4305 = vunpack.c.l.b16 %v3871
    %v4306 = vunpack.c.h.b16 %v3871
    %v4307 = vunpack.c.l.b16 %v3872
    %v4308 = vunpack.c.h.b16 %v3872
    %v4309 = vunpack.c.l.b16 %v3873
    %v4310 = vunpack.c.h.b16 %v3873
    %v4311 = vunpack.c.l.b16 %v3874
    %v4312 = vunpack.c.h.b16 %v3874
    %v4313 = vunpack.c.l.b16 %v3875
    %v4314 = vunpack.c.h.b16 %v3875
    %v4315 = vunpack.c.l.b16 %v3876
    %v4316 = vunpack.c.h.b16 %v3876
    %v4317 = vunpack.c.l.b16 %v3877
    %v4318 = vunpack.c.h.b16 %v3877
    %v4319 = vunpack.c.l.b16 %v3878
    %v4320 = vunpack.c.h.b16 %v3878
    %v4321 = vunpack.c.l.b16 %v3879
    %v4322 = vunpack.c.h.b16 %v3879
    %v4323 = vunpack.c.l.b16 %v3880
    %v4324 = vunpack.c.h.b16 %v3880
    %v4325 = vunpack.c.l.b16 %v3881
    %v4326 = vunpack.c.h.b16 %v3881
    %v4327 = vunpack.c.l.b16 %v3882
    %v4328 = vunpack.c.h.b16 %v3882
    %v4329 = vunpack.c.l.b16 %v3883
    %v4330 = vunpack.c.h.b16 %v3883
    %v4331 = vunpack.c.l.b16 %v3884
    %v4332 = vunpack.c.h.b16 %v3884
    %v4333 = vunpack.c.l.b16 %v3885
    %v4334 = vunpack.c.h.b16 %v3885
    %v4335 = vunpack.c.l.b16 %v3886
    %v4336 = vunpack.c.h.b16 %v3886
    %v4337 = vunpack.c.l.b16 %v3887
    %v4338 = vunpack.c.h.b16 %v3887
    %v4339 = vunpack.c.l.b16 %v3888
    %v4340 = vunpack.c.h.b16 %v3888
    %v4341 = vunpack.c.l.b16 %v3889
    %v4342 = vunpack.c.h.b16 %v3889
    %v4343 = vunpack.c.l.b16 %v3890
    %v4344 = vunpack.c.h.b16 %v3890
    %v4345 = vunpack.c.l.b16 %v3891
    %v4346 = vunpack.c.h.b16 %v3891
    %v4347 = vunpack.c.l.b16 %v3892
    %v4348 = vunpack.c.h.b16 %v3892
    %v4349 = vunpack.c.l.b16 %v3893
    %v4350 = vunpack.c.h.b16 %v3893
    %v4351 = vunpack.c.l.b16 %v3894
    %v4352 = vunpack.c.h.b16 %v3894
    %v4353 = vunpack.c.l.b16 %v3895
    %v4354 = vunpack.c.h.b16 %v3895
    %v4355 = vunpack.c.l.b16 %v3896
    %v4356 = vunpack.c.h.b16 %v3896
    %v4357 = vunpack.c.l.b16 %v3897
    %v4358 = vunpack.c.h.b16 %v3897
    %v4359 = vunpack.c.l.b16 %v3898
    %v4360 = vunpack.c.h.b16 %v3898
    %v4361 = vunpack.c.l.b16 %v3899
    %v4362 = vunpack.c.h.b16 %v3899
    %v4363 = vunpack.c.l.b16 %v3900
    %v4364 = vunpack.c.h.b16 %v3900
    %v4365 = vunpack.c.l.b16 %v3901
    %v4366 = vunpack.c.h.b16 %v3901
    %v4367 = vunpack.c.l.b16 %v3902
    %v4368 = vunpack.c.h.b16 %v3902
    %v4369 = vunpack.c.l.b16 %v3903
    %v4370 = vunpack.c.h.b16 %v3903
    %v4371 = vunpack.c.l.b16 %v3904
    %v4372 = vunpack.c.h.b16 %v3904
    %v4373 = vunpack.c.l.b16 %v3905
    %v4374 = vunpack.c.h.b16 %v3905
    %v4375 = vpack.c.b16 %v4135, %v4119
    %v4376 = vpack.c.b16 %v4136, %v4120
    %v4377 = vpack.c.b16 %v4137, %v4121
    %v4378 = vpack.c.b16 %v4138, %v4122
    %v4379 = vpack.c.b16 %v4139, %v4123
    %v4380 = vpack.c.b16 %v4140, %v4124
    %v4381 = vpack.c.b16 %v4141, %v4125
    %v4382 = vpack.c.b16 %v4142, %v4126
    %v4383 = vpack.c.b16 %v4143, %v4127
    %v4384 = vpack.c.b16 %v4144, %v4128
    %v4385 = vpack.c.b16 %v4145, %v4129
    %v4386 = vpack.c.b16 %v4146, %v4130
    %v4387 = vpack.c.b16 %v4147, %v4131
    %v4388 = vpack.c.b16 %v4148, %v4132
    %v4389 = vpack.c.b16 %v4149, %v4133
    %v4390 = vpack.c.b16 %v4150, %v4134
    %v4391 = vpack.c.b16 %v4167, %v4151
    %v4392 = vpack.c.b16 %v4168, %v4152
    %v4393 = vpack.c.b16 %v4169, %v4153
    %v4394 = vpack.c.b16 %v4170, %v4154
    %v4395 = vpack.c.b16 %v4171, %v4155
    %v4396 = vpack.c.b16 %v4172, %v4156
    %v4397 = vpack.c.b16 %v4173, %v4157
    %v4398 = vpack.c.b16 %v4174, %v4158
    %v4399 = vpack.c.b16 %v4175, %v4159
    %v4400 = vpack.c.b16 %v4176, %v4160
    %v4401 = vpack.c.b16 %v4177, %v4161
    %v4402 = vpack.c.b16 %v4178, %v4162
    %v4403 = vpack.c.b16 %v4179, %v4163
    %v4404 = vpack.c.b16 %v4180, %v4164
    %v4405 = vpack.c.b16 %v4181, %v4165
    %v4406 = vpack.c.b16 %v4182, %v4166
    %v4407 = vpack.c.b16 %v4199, %v4183
    %v4408 = vpack.c.b16 %v4200, %v4184
    %v4409 = vpack.c.b16 %v4201, %v4185
    %v4410 = vpack.c.b16 %v4202, %v4186
    %v4411 = vpack.c.b16 %v4203, %v4187
    %v4412 = vpack.c.b16 %v4204, %v4188
    %v4413 = vpack.c.b16 %v4205, %v4189
    %v4414 = vpack.c.b16 %v4206, %v4190
    %v4415 = vpack.c.b16 %v4207, %v4191
    %v4416 = vpack.c.b16 %v4208, %v4192
    %v4417 = vpack.c.b16 %v4209, %v4193
    %v4418 = vpack.c.b16 %v4210, %v4194
    %v4419 = vpack.c.b16 %v4211, %v4195
    %v4420 = vpack.c.b16 %v4212, %v4196
    %v4421 = vpack.c.b16 %v4213, %v4197
    %v4422 = vpack.c.b16 %v4214, %v4198
    %v4423 = vpack.c.b16 %v4231, %v4215
    %v4424 = vpack.c.b16 %v4232, %v4216
    %v4425 = vpack.c.b16 %v4233, %v4217
    %v4426 = vpack.c.b16 %v4234, %v4218
    %v4427 = vpack.c.b16 %v4235, %v4219
    %v4428 = vpack.c.b16 %v4236, %v4220
    %v4429 = vpack.c.b16 %v4237, %v4221
    %v4430 = vpack.c.b16 %v4238, %v4222
    %v4431 = vpack.c.b16 %v4239, %v4223
    %v4432 = vpack.c.b16 %v4240, %v4224
    %v4433 = vpack.c.b16 %v4241, %v4225
    %v4434 = vpack.c.b16 %v4242, %v4226
    %v4435 = vpack.c.b16 %v4243, %v4227
    %v4436 = vpack.c.b16 %v4244, %v4228
    %v4437 = vpack.c.b16 %v4245, %v4229
    %v4438 = vpack.c.b16 %v4246, %v4230
    %v4439 = vpack.c.b16 %v4263, %v4247
    %v4440 = vpack.c.b16 %v4264, %v4248
    %v4441 = vpack.c.b16 %v4265, %v4249
    %v4442 = vpack.c.b16 %v4266, %v4250
    %v4443 = vpack.c.b16 %v4267, %v4251
    %v4444 = vpack.c.b16 %v4268, %v4252
    %v4445 = vpack.c.b16 %v4269, %v4253
    %v4446 = vpack.c.b16 %v4270, %v4254
    %v4447 = vpack.c.b16 %v4271, %v4255
    %v4448 = vpack.c.b16 %v4272, %v4256
    %v4449 = vpack.c.b16 %v4273, %v4257
    %v4450 = vpack.c.b16 %v4274, %v4258
    %v4451 = vpack.c.b16 %v4275, %v4259
    %v4452 = vpack.c.b16 %v4276, %v4260
    %v4453 = vpack.c.b16 %v4277, %v4261
    %v4454 = vpack.c.b16 %v4278, %v4262
    %v4455 = vpack.c.b16 %v4295, %v4279
    %v4456 = vpack.c.b16 %v4296, %v4280
    %v4457 = vpack.c.b16 %v4297, %v4281
    %v4458 = vpack.c.b16 %v4298, %v4282
    %v4459 = vpack.c.b16 %v4299, %v4283
    %v4460 = vpack.c.b16 %v4300, %v4284
    %v4461 = vpack.c.b16 %v4301, %v4285
    %v4462 = vpack.c.b16 %v4302, %v4286
    %v4463 = vpack.c.b16 %v4303, %v4287
    %v4464 = vpack.c.b16 %v4304, %v4288
    %v4465 = vpack.c.b16 %v4305, %v4289
    %v4466 = vpack.c.b16 %v4306, %v4290
    %v4467 = vpack.c.b16 %v4307, %v4291
    %v4468 = vpack.c.b16 %v4308, %v4292
    %v4469 = vpack.c.b16 %v4309, %v4293
    %v4470 = vpack.c.b16 %v4310, %v4294
    %v4471 = vpack.c.b16 %v4327, %v4311
    %v4472 = vpack.c.b16 %v4328, %v4312
    %v4473 = vpack.c.b16 %v4329, %v4313
    %v4474 = vpack.c.b16 %v4330, %v4314
    %v4475 = vpack.c.b16 %v4331, %v4315
    %v4476 = vpack.c.b16 %v4332, %v4316
    %v4477 = vpack.c.b16 %v4333, %v4317
    %v4478 = vpack.c.b16 %v4334, %v4318
    %v4479 = vpack.c.b16 %v4335, %v4319
    %v4480 = vpack.c.b16 %v4336, %v4320
    %v4481 = vpack.c.b16 %v4337, %v4321
    %v4482 = vpack.c.b16 %v4338, %v4322
    %v4483 = vpack.c.b16 %v4339, %v4323
    %v4484 = vpack.c.b16 %v4340, %v4324
    %v4485 = vpack.c.b16 %v4341, %v4325
    %v4486 = vpack.c.b16 %v4342, %v4326
    %v4487 = vpack.c.b16 %v4359, %v4343
    %v4488 = vpack.c.b16 %v4360, %v4344
    %v4489 = vpack.c.b16 %v4361, %v4345
    %v4490 = vpack.c.b16 %v4362, %v4346
    %v4491 = vpack.c.b16 %v4363, %v4347
    %v4492 = vpack.c.b16 %v4364, %v4348
    %v4493 = vpack.c.b16 %v4365, %v4349
    %v4494 = vpack.c.b16 %v4366, %v4350
    %v4495 = vpack.c.b16 %v4367, %v4351
    %v4496 = vpack.c.b16 %v4368, %v4352
    %v4497 = vpack.c.b16 %v4369, %v4353
    %v4498 = vpack.c.b16 %v4370, %v4354
    %v4499 = vpack.c.b16 %v4371, %v4355
    %v4500 = vpack.c.b16 %v4372, %v4356
    %v4501 = vpack.c.b16 %v4373, %v4357
    %v4502 = vpack.c.b16 %v4374, %v4358
    %4631 = vmatprep.subr.bf16.mxu0 %v4488
    %4632 = vmatpush1.bf16.msra.mxu0 %v4487
    %4633 = vmatprep.subr.bf16.mxu0 %v4472
    %4634 = vmatpush1.bf16.msra.mxu0 %v4471
    %4635 = vmatprep.subr.bf16.mxu0 %v4456
    %4636 = vmatpush1.bf16.msra.mxu0 %v4455
    %4637 = vmatprep.subr.bf16.mxu0 %v4440
    %4638 = vmatpush1.bf16.msra.mxu0 %v4439
    %4639 = vmatprep.subr.bf16.mxu0 %v4424
    %4640 = vmatpush1.bf16.msra.mxu0 %v4423
    %4641 = vmatprep.subr.bf16.mxu0 %v4408
    %4642 = vmatpush1.bf16.msra.mxu0 %v4407
    %4643 = vmatprep.subr.bf16.mxu0 %v4392
    %4644 = vmatpush1.bf16.msra.mxu0 %v4391
    %4645 = vmatprep.subr.bf16.mxu0 %v4376
    %4646 = vmatpush1.bf16.msra.mxu0 %v4375
    %4647 = vmatprep.subr.bf16.mxu0 0
    %4648 = vmatpush2.bf16.msra.mxu0 0
    %4649 = vmatprep.subr.bf16.mxu0 0
    %4650 = vmatpush2.bf16.msra.mxu0 0
    %4651 = vmatprep.subr.bf16.mxu0 0
    %4652 = vmatpush2.bf16.msra.mxu0 0
    %4653 = vmatprep.subr.bf16.mxu0 0
    %4654 = vmatpush2.bf16.msra.mxu0 0
    %4655 = vmatprep.subr.bf16.mxu0 0
    %4656 = vmatpush2.bf16.msra.mxu0 0
    %4657 = vmatprep.subr.bf16.mxu0 0
    %4658 = vmatpush2.bf16.msra.mxu0 0
    %4659 = vmatprep.subr.bf16.mxu0 0
    %4660 = vmatpush2.bf16.msra.mxu0 0
    %4661 = vmatprep.subr.bf16.mxu0 0
    %4662 = vmatpush2.bf16.msra.mxu0 0
    %4663 = vmatprep.mubr.bf16.mxu0 0
    %4664 = vmatmul.mubr.bf16.gmra.mxu0 %v3908
    %v4665 = vpop.f32.mrf.mxu0
    %v4666 = vadd.f32 %v3914, %v4665
    %v4667 = vpop.f32.mrf.mxu0
    %v4668 = vadd.f32 %v3918, %v4667
    %v4669 = vpop.f32.mrf.mxu0
    %v4670 = vpop.f32.mrf.mxu0
    %4671 = vdwg.mxu0
    %4672 = vmatprep.subr.bf16.mxu0 %v4490
    %4673 = vmatpush1.bf16.msra.mxu0 %v4489
    %4674 = vmatprep.subr.bf16.mxu0 %v4474
    %4675 = vmatpush1.bf16.msra.mxu0 %v4473
    %4676 = vmatprep.subr.bf16.mxu0 %v4458
    %4677 = vmatpush1.bf16.msra.mxu0 %v4457
    %4678 = vmatprep.subr.bf16.mxu0 %v4442
    %4679 = vmatpush1.bf16.msra.mxu0 %v4441
    %4680 = vmatprep.subr.bf16.mxu0 %v4426
    %4681 = vmatpush1.bf16.msra.mxu0 %v4425
    %4682 = vmatprep.subr.bf16.mxu0 %v4410
    %4683 = vmatpush1.bf16.msra.mxu0 %v4409
    %4684 = vmatprep.subr.bf16.mxu0 %v4394
    %4685 = vmatpush1.bf16.msra.mxu0 %v4393
    %4686 = vmatprep.subr.bf16.mxu0 %v4378
    %4687 = vmatpush1.bf16.msra.mxu0 %v4377
    %4688 = vmatprep.subr.bf16.mxu0 0
    %4689 = vmatpush2.bf16.msra.mxu0 0
    %4690 = vmatprep.subr.bf16.mxu0 0
    %4691 = vmatpush2.bf16.msra.mxu0 0
    %4692 = vmatprep.subr.bf16.mxu0 0
    %4693 = vmatpush2.bf16.msra.mxu0 0
    %4694 = vmatprep.subr.bf16.mxu0 0
    %4695 = vmatpush2.bf16.msra.mxu0 0
    %4696 = vmatprep.subr.bf16.mxu0 0
    %4697 = vmatpush2.bf16.msra.mxu0 0
    %4698 = vmatprep.subr.bf16.mxu0 0
    %4699 = vmatpush2.bf16.msra.mxu0 0
    %4700 = vmatprep.subr.bf16.mxu0 0
    %4701 = vmatpush2.bf16.msra.mxu0 0
    %4702 = vmatprep.subr.bf16.mxu0 0
    %4703 = vmatpush2.bf16.msra.mxu0 0
    %4704 = vmatprep.mubr.bf16.mxu0 0
    %4705 = vmatmul.mubr.bf16.gmra.mxu0 %v3908
    %v4706 = vpop.f32.mrf.mxu0
    %v4707 = vadd.f32 %v3922, %v4706
    %v4708 = vpop.f32.mrf.mxu0
    %v4709 = vadd.f32 %v3926, %v4708
    %v4710 = vpop.f32.mrf.mxu0
    %v4711 = vpop.f32.mrf.mxu0
    %4712 = vdwg.mxu0
    %4713 = vmatprep.subr.bf16.mxu0 %v4492
    %4714 = vmatpush1.bf16.msra.mxu0 %v4491
    %4715 = vmatprep.subr.bf16.mxu0 %v4476
    %4716 = vmatpush1.bf16.msra.mxu0 %v4475
    %4717 = vmatprep.subr.bf16.mxu0 %v4460
    %4718 = vmatpush1.bf16.msra.mxu0 %v4459
    %4719 = vmatprep.subr.bf16.mxu0 %v4444
    %4720 = vmatpush1.bf16.msra.mxu0 %v4443
    %4721 = vmatprep.subr.bf16.mxu0 %v4428
    %4722 = vmatpush1.bf16.msra.mxu0 %v4427
    %4723 = vmatprep.subr.bf16.mxu0 %v4412
    %4724 = vmatpush1.bf16.msra.mxu0 %v4411
    %4725 = vmatprep.subr.bf16.mxu0 %v4396
    %4726 = vmatpush1.bf16.msra.mxu0 %v4395
    %4727 = vmatprep.subr.bf16.mxu0 %v4380
    %4728 = vmatpush1.bf16.msra.mxu0 %v4379
    %4729 = vmatprep.subr.bf16.mxu0 0
    %4730 = vmatpush2.bf16.msra.mxu0 0
    %4731 = vmatprep.subr.bf16.mxu0 0
    %4732 = vmatpush2.bf16.msra.mxu0 0
    %4733 = vmatprep.subr.bf16.mxu0 0
    %4734 = vmatpush2.bf16.msra.mxu0 0
    %4735 = vmatprep.subr.bf16.mxu0 0
    %4736 = vmatpush2.bf16.msra.mxu0 0
    %4737 = vmatprep.subr.bf16.mxu0 0
    %4738 = vmatpush2.bf16.msra.mxu0 0
    %4739 = vmatprep.subr.bf16.mxu0 0
    %4740 = vmatpush2.bf16.msra.mxu0 0
    %4741 = vmatprep.subr.bf16.mxu0 0
    %4742 = vmatpush2.bf16.msra.mxu0 0
    %4743 = vmatprep.subr.bf16.mxu0 0
    %4744 = vmatpush2.bf16.msra.mxu0 0
    %4745 = vmatprep.mubr.bf16.mxu0 0
    %4746 = vmatmul.mubr.bf16.gmra.mxu0 %v3908
    %v4747 = vpop.f32.mrf.mxu0
    %v4748 = vadd.f32 %v3930, %v4747
    %v4749 = vpop.f32.mrf.mxu0
    %v4750 = vadd.f32 %v3934, %v4749
    %v4751 = vpop.f32.mrf.mxu0
    %v4752 = vpop.f32.mrf.mxu0
    %4753 = vdwg.mxu0
    %4754 = vmatprep.subr.bf16.mxu0 %v4494
    %4755 = vmatpush1.bf16.msra.mxu0 %v4493
    %4756 = vmatprep.subr.bf16.mxu0 %v4478
    %4757 = vmatpush1.bf16.msra.mxu0 %v4477
    %4758 = vmatprep.subr.bf16.mxu0 %v4462
    %4759 = vmatpush1.bf16.msra.mxu0 %v4461
    %4760 = vmatprep.subr.bf16.mxu0 %v4446
    %4761 = vmatpush1.bf16.msra.mxu0 %v4445
    %4762 = vmatprep.subr.bf16.mxu0 %v4430
    %4763 = vmatpush1.bf16.msra.mxu0 %v4429
    %4764 = vmatprep.subr.bf16.mxu0 %v4414
    %4765 = vmatpush1.bf16.msra.mxu0 %v4413
    %4766 = vmatprep.subr.bf16.mxu0 %v4398
    %4767 = vmatpush1.bf16.msra.mxu0 %v4397
    %4768 = vmatprep.subr.bf16.mxu0 %v4382
    %4769 = vmatpush1.bf16.msra.mxu0 %v4381
    %4770 = vmatprep.subr.bf16.mxu0 0
    %4771 = vmatpush2.bf16.msra.mxu0 0
    %4772 = vmatprep.subr.bf16.mxu0 0
    %4773 = vmatpush2.bf16.msra.mxu0 0
    %4774 = vmatprep.subr.bf16.mxu0 0
    %4775 = vmatpush2.bf16.msra.mxu0 0
    %4776 = vmatprep.subr.bf16.mxu0 0
    %4777 = vmatpush2.bf16.msra.mxu0 0
    %4778 = vmatprep.subr.bf16.mxu0 0
    %4779 = vmatpush2.bf16.msra.mxu0 0
    %4780 = vmatprep.subr.bf16.mxu0 0
    %4781 = vmatpush2.bf16.msra.mxu0 0
    %4782 = vmatprep.subr.bf16.mxu0 0
    %4783 = vmatpush2.bf16.msra.mxu0 0
    %4784 = vmatprep.subr.bf16.mxu0 0
    %4785 = vmatpush2.bf16.msra.mxu0 0
    %4786 = vmatprep.mubr.bf16.mxu0 0
    %4787 = vmatmul.mubr.bf16.gmra.mxu0 %v3908
    %v4788 = vpop.f32.mrf.mxu0
    %v4789 = vadd.f32 %v3938, %v4788
    %v4790 = vpop.f32.mrf.mxu0
    %v4791 = vadd.f32 %v3942, %v4790
    %v4792 = vpop.f32.mrf.mxu0
    %v4793 = vpop.f32.mrf.mxu0
    %4794 = vdwg.mxu0
    %4795 = vmatprep.subr.bf16.mxu0 %v4496
    %4796 = vmatpush1.bf16.msra.mxu0 %v4495
    %4797 = vmatprep.subr.bf16.mxu0 %v4480
    %4798 = vmatpush1.bf16.msra.mxu0 %v4479
    %4799 = vmatprep.subr.bf16.mxu0 %v4464
    %4800 = vmatpush1.bf16.msra.mxu0 %v4463
    %4801 = vmatprep.subr.bf16.mxu0 %v4448
    %4802 = vmatpush1.bf16.msra.mxu0 %v4447
    %4803 = vmatprep.subr.bf16.mxu0 %v4432
    %4804 = vmatpush1.bf16.msra.mxu0 %v4431
    %4805 = vmatprep.subr.bf16.mxu0 %v4416
    %4806 = vmatpush1.bf16.msra.mxu0 %v4415
    %4807 = vmatprep.subr.bf16.mxu0 %v4400
    %4808 = vmatpush1.bf16.msra.mxu0 %v4399
    %4809 = vmatprep.subr.bf16.mxu0 %v4384
    %4810 = vmatpush1.bf16.msra.mxu0 %v4383
    %4811 = vmatprep.subr.bf16.mxu0 0
    %4812 = vmatpush2.bf16.msra.mxu0 0
    %4813 = vmatprep.subr.bf16.mxu0 0
    %4814 = vmatpush2.bf16.msra.mxu0 0
    %4815 = vmatprep.subr.bf16.mxu0 0
    %4816 = vmatpush2.bf16.msra.mxu0 0
    %4817 = vmatprep.subr.bf16.mxu0 0
    %4818 = vmatpush2.bf16.msra.mxu0 0
    %4819 = vmatprep.subr.bf16.mxu0 0
    %4820 = vmatpush2.bf16.msra.mxu0 0
    %4821 = vmatprep.subr.bf16.mxu0 0
    %4822 = vmatpush2.bf16.msra.mxu0 0
    %4823 = vmatprep.subr.bf16.mxu0 0
    %4824 = vmatpush2.bf16.msra.mxu0 0
    %4825 = vmatprep.subr.bf16.mxu0 0
    %4826 = vmatpush2.bf16.msra.mxu0 0
    %4827 = vmatprep.mubr.bf16.mxu0 0
    %4828 = vmatmul.mubr.bf16.gmra.mxu0 %v3908
    %v4829 = vpop.f32.mrf.mxu0
    %v4830 = vadd.f32 %v3946, %v4829
    %v4831 = vpop.f32.mrf.mxu0
    %v4832 = vadd.f32 %v3950, %v4831
    %v4833 = vpop.f32.mrf.mxu0
    %v4834 = vpop.f32.mrf.mxu0
    %4835 = vdwg.mxu0
    %4836 = vmatprep.subr.bf16.mxu0 %v4498
    %4837 = vmatpush1.bf16.msra.mxu0 %v4497
    %4838 = vmatprep.subr.bf16.mxu0 %v4482
    %4839 = vmatpush1.bf16.msra.mxu0 %v4481
    %4840 = vmatprep.subr.bf16.mxu0 %v4466
    %4841 = vmatpush1.bf16.msra.mxu0 %v4465
    %4842 = vmatprep.subr.bf16.mxu0 %v4450
    %4843 = vmatpush1.bf16.msra.mxu0 %v4449
    %4844 = vmatprep.subr.bf16.mxu0 %v4434
    %4845 = vmatpush1.bf16.msra.mxu0 %v4433
    %4846 = vmatprep.subr.bf16.mxu0 %v4418
    %4847 = vmatpush1.bf16.msra.mxu0 %v4417
    %4848 = vmatprep.subr.bf16.mxu0 %v4402
    %4849 = vmatpush1.bf16.msra.mxu0 %v4401
    %4850 = vmatprep.subr.bf16.mxu0 %v4386
    %4851 = vmatpush1.bf16.msra.mxu0 %v4385
    %4852 = vmatprep.subr.bf16.mxu0 0
    %4853 = vmatpush2.bf16.msra.mxu0 0
    %4854 = vmatprep.subr.bf16.mxu0 0
    %4855 = vmatpush2.bf16.msra.mxu0 0
    %4856 = vmatprep.subr.bf16.mxu0 0
    %4857 = vmatpush2.bf16.msra.mxu0 0
    %4858 = vmatprep.subr.bf16.mxu0 0
    %4859 = vmatpush2.bf16.msra.mxu0 0
    %4860 = vmatprep.subr.bf16.mxu0 0
    %4861 = vmatpush2.bf16.msra.mxu0 0
    %4862 = vmatprep.subr.bf16.mxu0 0
    %4863 = vmatpush2.bf16.msra.mxu0 0
    %4864 = vmatprep.subr.bf16.mxu0 0
    %4865 = vmatpush2.bf16.msra.mxu0 0
    %4866 = vmatprep.subr.bf16.mxu0 0
    %4867 = vmatpush2.bf16.msra.mxu0 0
    %4868 = vmatprep.mubr.bf16.mxu0 0
    %4869 = vmatmul.mubr.bf16.gmra.mxu0 %v3908
    %v4870 = vpop.f32.mrf.mxu0
    %v4871 = vadd.f32 %v3954, %v4870
    %v4872 = vpop.f32.mrf.mxu0
    %v4873 = vadd.f32 %v3958, %v4872
    %v4874 = vpop.f32.mrf.mxu0
    %v4875 = vpop.f32.mrf.mxu0
    %4876 = vdwg.mxu0
    %4877 = vmatprep.subr.bf16.mxu0 %v4500
    %4878 = vmatpush1.bf16.msra.mxu0 %v4499
    %4879 = vmatprep.subr.bf16.mxu0 %v4484
    %4880 = vmatpush1.bf16.msra.mxu0 %v4483
    %4881 = vmatprep.subr.bf16.mxu0 %v4468
    %4882 = vmatpush1.bf16.msra.mxu0 %v4467
    %4883 = vmatprep.subr.bf16.mxu0 %v4452
    %4884 = vmatpush1.bf16.msra.mxu0 %v4451
    %4885 = vmatprep.subr.bf16.mxu0 %v4436
    %4886 = vmatpush1.bf16.msra.mxu0 %v4435
    %4887 = vmatprep.subr.bf16.mxu0 %v4420
    %4888 = vmatpush1.bf16.msra.mxu0 %v4419
    %4889 = vmatprep.subr.bf16.mxu0 %v4404
    %4890 = vmatpush1.bf16.msra.mxu0 %v4403
    %4891 = vmatprep.subr.bf16.mxu0 %v4388
    %4892 = vmatpush1.bf16.msra.mxu0 %v4387
    %4893 = vmatprep.subr.bf16.mxu0 0
    %4894 = vmatpush2.bf16.msra.mxu0 0
    %4895 = vmatprep.subr.bf16.mxu0 0
    %4896 = vmatpush2.bf16.msra.mxu0 0
    %4897 = vmatprep.subr.bf16.mxu0 0
    %4898 = vmatpush2.bf16.msra.mxu0 0
    %4899 = vmatprep.subr.bf16.mxu0 0
    %4900 = vmatpush2.bf16.msra.mxu0 0
    %4901 = vmatprep.subr.bf16.mxu0 0
    %4902 = vmatpush2.bf16.msra.mxu0 0
    %4903 = vmatprep.subr.bf16.mxu0 0
    %4904 = vmatpush2.bf16.msra.mxu0 0
    %4905 = vmatprep.subr.bf16.mxu0 0
    %4906 = vmatpush2.bf16.msra.mxu0 0
    %4907 = vmatprep.subr.bf16.mxu0 0
    %4908 = vmatpush2.bf16.msra.mxu0 0
    %4909 = vmatprep.mubr.bf16.mxu0 0
    %4910 = vmatmul.mubr.bf16.gmra.mxu0 %v3908
    %v4911 = vpop.f32.mrf.mxu0
    %v4912 = vadd.f32 %v3962, %v4911
    %v4913 = vpop.f32.mrf.mxu0
    %v4914 = vadd.f32 %v3966, %v4913
    %v4915 = vpop.f32.mrf.mxu0
    %v4916 = vpop.f32.mrf.mxu0
    %4917 = vdwg.mxu0
    %4918 = vmatprep.subr.bf16.mxu0 %v4502
    %4919 = vmatpush1.bf16.msra.mxu0 %v4501
    %4920 = vmatprep.subr.bf16.mxu0 %v4486
    %4921 = vmatpush1.bf16.msra.mxu0 %v4485
    %4922 = vmatprep.subr.bf16.mxu0 %v4470
    %4923 = vmatpush1.bf16.msra.mxu0 %v4469
    %4924 = vmatprep.subr.bf16.mxu0 %v4454
    %4925 = vmatpush1.bf16.msra.mxu0 %v4453
    %4926 = vmatprep.subr.bf16.mxu0 %v4438
    %4927 = vmatpush1.bf16.msra.mxu0 %v4437
    %4928 = vmatprep.subr.bf16.mxu0 %v4422
    %4929 = vmatpush1.bf16.msra.mxu0 %v4421
    %4930 = vmatprep.subr.bf16.mxu0 %v4406
    %4931 = vmatpush1.bf16.msra.mxu0 %v4405
    %4932 = vmatprep.subr.bf16.mxu0 %v4390
    %4933 = vmatpush1.bf16.msra.mxu0 %v4389
    %4934 = vmatprep.subr.bf16.mxu0 0
    %4935 = vmatpush2.bf16.msra.mxu0 0
    %4936 = vmatprep.subr.bf16.mxu0 0
    %4937 = vmatpush2.bf16.msra.mxu0 0
    %4938 = vmatprep.subr.bf16.mxu0 0
    %4939 = vmatpush2.bf16.msra.mxu0 0
    %4940 = vmatprep.subr.bf16.mxu0 0
    %4941 = vmatpush2.bf16.msra.mxu0 0
    %4942 = vmatprep.subr.bf16.mxu0 0
    %4943 = vmatpush2.bf16.msra.mxu0 0
    %4944 = vmatprep.subr.bf16.mxu0 0
    %4945 = vmatpush2.bf16.msra.mxu0 0
    %4946 = vmatprep.subr.bf16.mxu0 0
    %4947 = vmatpush2.bf16.msra.mxu0 0
    %4948 = vmatprep.subr.bf16.mxu0 0
    %4949 = vmatpush2.bf16.msra.mxu0 0
    %4950 = vmatprep.mubr.bf16.mxu0 0
    %4951 = vmatmul.mubr.bf16.gmra.mxu0 %v3908
    %v4952 = vpop.f32.mrf.mxu0
    %v4953 = vadd.f32 %v3970, %v4952
    %v4954 = vpop.f32.mrf.mxu0
    %v4955 = vadd.f32 %v3974, %v4954
    %v4956 = vpop.f32.mrf.mxu0
    %v4957 = vpop.f32.mrf.mxu0
    %4958 = vdwg.mxu0
    %v4959 = vmax.f32 %v4666, 0.0
    %v4960 = vmax.f32 %v4668, 0.0
    %v4961 = vmax.f32 %v4707, 0.0
    %v4962 = vmax.f32 %v4709, 0.0
    %v4963 = vmax.f32 %v4748, 0.0
    %v4964 = vmax.f32 %v4750, 0.0
    %v4965 = vmax.f32 %v4789, 0.0
    %v4966 = vmax.f32 %v4791, 0.0
    %v4967 = vmax.f32 %v4830, 0.0
    %v4968 = vmax.f32 %v4832, 0.0
    %v4969 = vmax.f32 %v4871, 0.0
    %v4970 = vmax.f32 %v4873, 0.0
    %v4971 = vmax.f32 %v4912, 0.0
    %v4972 = vmax.f32 %v4914, 0.0
    %v4973 = vmax.f32 %v4953, 0.0
    %v4974 = vmax.f32 %v4955, 0.0
    %v4975 = vld [vmem:[#allocation7] sm:$0xf]
    %v4976 = vld [vmem:[#allocation7 + $0x4] sm:$0xf]
    %v4977 = vld [vmem:[#allocation7 + $0x8] sm:$0xf]
    %v4978 = vld [vmem:[#allocation7 + $0xc] sm:$0xf]
    %v4979 = vld [vmem:[#allocation7 + $0x10] sm:$0xf]
    %v4980 = vld [vmem:[#allocation7 + $0x14] sm:$0xf]
    %v4981 = vld [vmem:[#allocation7 + $0x18] sm:$0xf]
    %v4982 = vld [vmem:[#allocation7 + $0x1c] sm:$0xf]
    %v4983 = vld [vmem:[#allocation7 + $0x20] sm:$0xf]
    %v4984 = vld [vmem:[#allocation7 + $0x24] sm:$0xf]
    %v4985 = vld [vmem:[#allocation7 + $0x28] sm:$0xf]
    %v4986 = vld [vmem:[#allocation7 + $0x2c] sm:$0xf]
    %v4987 = vld [vmem:[#allocation7 + $0x30] sm:$0xf]
    %v4988 = vld [vmem:[#allocation7 + $0x34] sm:$0xf]
    %v4989 = vld [vmem:[#allocation7 + $0x38] sm:$0xf]
    %v4990 = vld [vmem:[#allocation7 + $0x3c] sm:$0xf]
    %v4991 = vld [vmem:[#allocation7 + $0x40] sm:$0xf]
    %v4992 = vld [vmem:[#allocation7 + $0x44] sm:$0xf]
    %v4993 = vld [vmem:[#allocation7 + $0x48] sm:$0xf]
    %v4994 = vld [vmem:[#allocation7 + $0x4c] sm:$0xf]
    %v4995 = vld [vmem:[#allocation7 + $0x50] sm:$0xf]
    %v4996 = vld [vmem:[#allocation7 + $0x54] sm:$0xf]
    %v4997 = vld [vmem:[#allocation7 + $0x58] sm:$0xf]
    %v4998 = vld [vmem:[#allocation7 + $0x5c] sm:$0xf]
    %v4999 = vld [vmem:[#allocation7 + $0x60] sm:$0xf]
    %v5000 = vld [vmem:[#allocation7 + $0x64] sm:$0xf]
    %v5001 = vld [vmem:[#allocation7 + $0x68] sm:$0xf]
    %v5002 = vld [vmem:[#allocation7 + $0x6c] sm:$0xf]
    %v5003 = vld [vmem:[#allocation7 + $0x70] sm:$0xf]
    %v5004 = vld [vmem:[#allocation7 + $0x74] sm:$0xf]
    %v5005 = vld [vmem:[#allocation7 + $0x78] sm:$0xf]
    %v5006 = vld [vmem:[#allocation7 + $0x7c] sm:$0xf]
    %v5007 = vld [vmem:[#allocation7 + $0x80] sm:$0xf]
    %v5008 = vld [vmem:[#allocation7 + $0x84] sm:$0xf]
    %v5009 = vld [vmem:[#allocation7 + $0x88] sm:$0xf]
    %v5010 = vld [vmem:[#allocation7 + $0x8c] sm:$0xf]
    %v5011 = vld [vmem:[#allocation7 + $0x90] sm:$0xf]
    %v5012 = vld [vmem:[#allocation7 + $0x94] sm:$0xf]
    %v5013 = vld [vmem:[#allocation7 + $0x98] sm:$0xf]
    %v5014 = vld [vmem:[#allocation7 + $0x9c] sm:$0xf]
    %v5015 = vld [vmem:[#allocation7 + $0xa0] sm:$0xf]
    %v5016 = vld [vmem:[#allocation7 + $0xa4] sm:$0xf]
    %v5017 = vld [vmem:[#allocation7 + $0xa8] sm:$0xf]
    %v5018 = vld [vmem:[#allocation7 + $0xac] sm:$0xf]
    %v5019 = vld [vmem:[#allocation7 + $0xb0] sm:$0xf]
    %v5020 = vld [vmem:[#allocation7 + $0xb4] sm:$0xf]
    %v5021 = vld [vmem:[#allocation7 + $0xb8] sm:$0xf]
    %v5022 = vld [vmem:[#allocation7 + $0xbc] sm:$0xf]
    %v5023 = vld [vmem:[#allocation7 + $0xc0] sm:$0xf]
    %v5024 = vld [vmem:[#allocation7 + $0xc4] sm:$0xf]
    %v5025 = vld [vmem:[#allocation7 + $0xc8] sm:$0xf]
    %v5026 = vld [vmem:[#allocation7 + $0xcc] sm:$0xf]
    %v5027 = vld [vmem:[#allocation7 + $0xd0] sm:$0xf]
    %v5028 = vld [vmem:[#allocation7 + $0xd4] sm:$0xf]
    %v5029 = vld [vmem:[#allocation7 + $0xd8] sm:$0xf]
    %v5030 = vld [vmem:[#allocation7 + $0xdc] sm:$0xf]
    %v5031 = vld [vmem:[#allocation7 + $0xe0] sm:$0xf]
    %v5032 = vld [vmem:[#allocation7 + $0xe4] sm:$0xf]
    %v5033 = vld [vmem:[#allocation7 + $0xe8] sm:$0xf]
    %v5034 = vld [vmem:[#allocation7 + $0xec] sm:$0xf]
    %v5035 = vld [vmem:[#allocation7 + $0xf0] sm:$0xf]
    %v5036 = vld [vmem:[#allocation7 + $0xf4] sm:$0xf]
    %v5037 = vld [vmem:[#allocation7 + $0xf8] sm:$0xf]
    %v5038 = vld [vmem:[#allocation7 + $0xfc] sm:$0xf]
    %v5039 = vld [vmem:[#allocation7 + $0x100] sm:$0xf]
    %v5040 = vld [vmem:[#allocation7 + $0x104] sm:$0xf]
    %v5041 = vld [vmem:[#allocation7 + $0x108] sm:$0xf]
    %v5042 = vld [vmem:[#allocation7 + $0x10c] sm:$0xf]
    %v5043 = vld [vmem:[#allocation7 + $0x110] sm:$0xf]
    %v5044 = vld [vmem:[#allocation7 + $0x114] sm:$0xf]
    %v5045 = vld [vmem:[#allocation7 + $0x118] sm:$0xf]
    %v5046 = vld [vmem:[#allocation7 + $0x11c] sm:$0xf]
    %v5047 = vld [vmem:[#allocation7 + $0x120] sm:$0xf]
    %v5048 = vld [vmem:[#allocation7 + $0x124] sm:$0xf]
    %v5049 = vld [vmem:[#allocation7 + $0x128] sm:$0xf]
    %v5050 = vld [vmem:[#allocation7 + $0x12c] sm:$0xf]
    %v5051 = vld [vmem:[#allocation7 + $0x130] sm:$0xf]
    %v5052 = vld [vmem:[#allocation7 + $0x134] sm:$0xf]
    %v5053 = vld [vmem:[#allocation7 + $0x138] sm:$0xf]
    %v5054 = vld [vmem:[#allocation7 + $0x13c] sm:$0xf]
    %v5055 = vld [vmem:[#allocation7 + $0x140] sm:$0xf]
    %v5056 = vld [vmem:[#allocation7 + $0x144] sm:$0xf]
    %v5057 = vld [vmem:[#allocation7 + $0x148] sm:$0xf]
    %v5058 = vld [vmem:[#allocation7 + $0x14c] sm:$0xf]
    %v5059 = vld [vmem:[#allocation7 + $0x150] sm:$0xf]
    %v5060 = vld [vmem:[#allocation7 + $0x154] sm:$0xf]
    %v5061 = vld [vmem:[#allocation7 + $0x158] sm:$0xf]
    %v5062 = vld [vmem:[#allocation7 + $0x15c] sm:$0xf]
    %v5063 = vld [vmem:[#allocation7 + $0x160] sm:$0xf]
    %v5064 = vld [vmem:[#allocation7 + $0x164] sm:$0xf]
    %v5065 = vld [vmem:[#allocation7 + $0x168] sm:$0xf]
    %v5066 = vld [vmem:[#allocation7 + $0x16c] sm:$0xf]
    %v5067 = vld [vmem:[#allocation7 + $0x170] sm:$0xf]
    %v5068 = vld [vmem:[#allocation7 + $0x174] sm:$0xf]
    %v5069 = vld [vmem:[#allocation7 + $0x178] sm:$0xf]
    %v5070 = vld [vmem:[#allocation7 + $0x17c] sm:$0xf]
    %v5071 = vld [vmem:[#allocation7 + $0x180] sm:$0xf]
    %v5072 = vld [vmem:[#allocation7 + $0x184] sm:$0xf]
    %v5073 = vld [vmem:[#allocation7 + $0x188] sm:$0xf]
    %v5074 = vld [vmem:[#allocation7 + $0x18c] sm:$0xf]
    %v5075 = vld [vmem:[#allocation7 + $0x190] sm:$0xf]
    %v5076 = vld [vmem:[#allocation7 + $0x194] sm:$0xf]
    %v5077 = vld [vmem:[#allocation7 + $0x198] sm:$0xf]
    %v5078 = vld [vmem:[#allocation7 + $0x19c] sm:$0xf]
    %v5079 = vld [vmem:[#allocation7 + $0x1a0] sm:$0xf]
    %v5080 = vld [vmem:[#allocation7 + $0x1a4] sm:$0xf]
    %v5081 = vld [vmem:[#allocation7 + $0x1a8] sm:$0xf]
    %v5082 = vld [vmem:[#allocation7 + $0x1ac] sm:$0xf]
    %v5083 = vld [vmem:[#allocation7 + $0x1b0] sm:$0xf]
    %v5084 = vld [vmem:[#allocation7 + $0x1b4] sm:$0xf]
    %v5085 = vld [vmem:[#allocation7 + $0x1b8] sm:$0xf]
    %v5086 = vld [vmem:[#allocation7 + $0x1bc] sm:$0xf]
    %v5087 = vld [vmem:[#allocation7 + $0x1c0] sm:$0xf]
    %v5088 = vld [vmem:[#allocation7 + $0x1c4] sm:$0xf]
    %v5089 = vld [vmem:[#allocation7 + $0x1c8] sm:$0xf]
    %v5090 = vld [vmem:[#allocation7 + $0x1cc] sm:$0xf]
    %v5091 = vld [vmem:[#allocation7 + $0x1d0] sm:$0xf]
    %v5092 = vld [vmem:[#allocation7 + $0x1d4] sm:$0xf]
    %v5093 = vld [vmem:[#allocation7 + $0x1d8] sm:$0xf]
    %v5094 = vld [vmem:[#allocation7 + $0x1dc] sm:$0xf]
    %v5095 = vld [vmem:[#allocation7 + $0x1e0] sm:$0xf]
    %v5096 = vld [vmem:[#allocation7 + $0x1e4] sm:$0xf]
    %v5097 = vld [vmem:[#allocation7 + $0x1e8] sm:$0xf]
    %v5098 = vld [vmem:[#allocation7 + $0x1ec] sm:$0xf]
    %v5099 = vld [vmem:[#allocation7 + $0x1f0] sm:$0xf]
    %v5100 = vld [vmem:[#allocation7 + $0x1f4] sm:$0xf]
    %v5101 = vld [vmem:[#allocation7 + $0x1f8] sm:$0xf]
    %v5102 = vld [vmem:[#allocation7 + $0x1fc] sm:$0xf]
    %v5103 = vld [vmem:[#allocation7 + $0x200] sm:$0xf]
    %v5104 = vld [vmem:[#allocation7 + $0x204] sm:$0xf]
    %v5105 = vld [vmem:[#allocation7 + $0x208] sm:$0xf]
    %v5106 = vld [vmem:[#allocation7 + $0x20c] sm:$0xf]
    %v5107 = vld [vmem:[#allocation7 + $0x210] sm:$0xf]
    %v5108 = vld [vmem:[#allocation7 + $0x214] sm:$0xf]
    %v5109 = vld [vmem:[#allocation7 + $0x218] sm:$0xf]
    %v5110 = vld [vmem:[#allocation7 + $0x21c] sm:$0xf]
    %v5111 = vld [vmem:[#allocation7 + $0x220] sm:$0xf]
    %v5112 = vld [vmem:[#allocation7 + $0x224] sm:$0xf]
    %v5113 = vld [vmem:[#allocation7 + $0x228] sm:$0xf]
    %v5114 = vld [vmem:[#allocation7 + $0x22c] sm:$0xf]
    %v5115 = vld [vmem:[#allocation7 + $0x230] sm:$0xf]
    %v5116 = vld [vmem:[#allocation7 + $0x234] sm:$0xf]
    %v5117 = vld [vmem:[#allocation7 + $0x238] sm:$0xf]
    %v5118 = vld [vmem:[#allocation7 + $0x23c] sm:$0xf]
    %v5119 = vld [vmem:[#allocation7 + $0x240] sm:$0xf]
    %v5120 = vld [vmem:[#allocation7 + $0x244] sm:$0xf]
    %v5121 = vld [vmem:[#allocation7 + $0x248] sm:$0xf]
    %v5122 = vld [vmem:[#allocation7 + $0x24c] sm:$0xf]
    %v5123 = vld [vmem:[#allocation7 + $0x250] sm:$0xf]
    %v5124 = vld [vmem:[#allocation7 + $0x254] sm:$0xf]
    %v5125 = vld [vmem:[#allocation7 + $0x258] sm:$0xf]
    %v5126 = vld [vmem:[#allocation7 + $0x25c] sm:$0xf]
    %v5127 = vld [vmem:[#allocation7 + $0x260] sm:$0xf]
    %v5128 = vld [vmem:[#allocation7 + $0x264] sm:$0xf]
    %v5129 = vld [vmem:[#allocation7 + $0x268] sm:$0xf]
    %v5130 = vld [vmem:[#allocation7 + $0x26c] sm:$0xf]
    %v5131 = vld [vmem:[#allocation7 + $0x270] sm:$0xf]
    %v5132 = vld [vmem:[#allocation7 + $0x274] sm:$0xf]
    %v5133 = vld [vmem:[#allocation7 + $0x278] sm:$0xf]
    %v5134 = vld [vmem:[#allocation7 + $0x27c] sm:$0xf]
    %v5135 = vld [vmem:[#allocation7 + $0x280] sm:$0xf]
    %v5136 = vld [vmem:[#allocation7 + $0x284] sm:$0xf]
    %v5137 = vld [vmem:[#allocation7 + $0x288] sm:$0xf]
    %v5138 = vld [vmem:[#allocation7 + $0x28c] sm:$0xf]
    %v5139 = vld [vmem:[#allocation7 + $0x290] sm:$0xf]
    %v5140 = vld [vmem:[#allocation7 + $0x294] sm:$0xf]
    %v5141 = vld [vmem:[#allocation7 + $0x298] sm:$0xf]
    %v5142 = vld [vmem:[#allocation7 + $0x29c] sm:$0xf]
    %v5143 = vld [vmem:[#allocation7 + $0x2a0] sm:$0xf]
    %v5144 = vld [vmem:[#allocation7 + $0x2a4] sm:$0xf]
    %v5145 = vld [vmem:[#allocation7 + $0x2a8] sm:$0xf]
    %v5146 = vld [vmem:[#allocation7 + $0x2ac] sm:$0xf]
    %v5147 = vld [vmem:[#allocation7 + $0x2b0] sm:$0xf]
    %v5148 = vld [vmem:[#allocation7 + $0x2b4] sm:$0xf]
    %v5149 = vld [vmem:[#allocation7 + $0x2b8] sm:$0xf]
    %v5150 = vld [vmem:[#allocation7 + $0x2bc] sm:$0xf]
    %v5151 = vld [vmem:[#allocation7 + $0x2c0] sm:$0xf]
    %v5152 = vld [vmem:[#allocation7 + $0x2c4] sm:$0xf]
    %v5153 = vld [vmem:[#allocation7 + $0x2c8] sm:$0xf]
    %v5154 = vld [vmem:[#allocation7 + $0x2cc] sm:$0xf]
    %v5155 = vld [vmem:[#allocation7 + $0x2d0] sm:$0xf]
    %v5156 = vld [vmem:[#allocation7 + $0x2d4] sm:$0xf]
    %v5157 = vld [vmem:[#allocation7 + $0x2d8] sm:$0xf]
    %v5158 = vld [vmem:[#allocation7 + $0x2dc] sm:$0xf]
    %v5159 = vld [vmem:[#allocation7 + $0x2e0] sm:$0xf]
    %v5160 = vld [vmem:[#allocation7 + $0x2e4] sm:$0xf]
    %v5161 = vld [vmem:[#allocation7 + $0x2e8] sm:$0xf]
    %v5162 = vld [vmem:[#allocation7 + $0x2ec] sm:$0xf]
    %v5163 = vld [vmem:[#allocation7 + $0x2f0] sm:$0xf]
    %v5164 = vld [vmem:[#allocation7 + $0x2f4] sm:$0xf]
    %v5165 = vld [vmem:[#allocation7 + $0x2f8] sm:$0xf]
    %v5166 = vld [vmem:[#allocation7 + $0x2fc] sm:$0xf]
    %v5167 = vld [vmem:[#allocation7 + $0x300] sm:$0xf]
    %v5168 = vld [vmem:[#allocation7 + $0x304] sm:$0xf]
    %v5169 = vld [vmem:[#allocation7 + $0x308] sm:$0xf]
    %v5170 = vld [vmem:[#allocation7 + $0x30c] sm:$0xf]
    %v5171 = vld [vmem:[#allocation7 + $0x310] sm:$0xf]
    %v5172 = vld [vmem:[#allocation7 + $0x314] sm:$0xf]
    %v5173 = vld [vmem:[#allocation7 + $0x318] sm:$0xf]
    %v5174 = vld [vmem:[#allocation7 + $0x31c] sm:$0xf]
    %v5175 = vld [vmem:[#allocation7 + $0x320] sm:$0xf]
    %v5176 = vld [vmem:[#allocation7 + $0x324] sm:$0xf]
    %v5177 = vld [vmem:[#allocation7 + $0x328] sm:$0xf]
    %v5178 = vld [vmem:[#allocation7 + $0x32c] sm:$0xf]
    %v5179 = vld [vmem:[#allocation7 + $0x330] sm:$0xf]
    %v5180 = vld [vmem:[#allocation7 + $0x334] sm:$0xf]
    %v5181 = vld [vmem:[#allocation7 + $0x338] sm:$0xf]
    %v5182 = vld [vmem:[#allocation7 + $0x33c] sm:$0xf]
    %v5183 = vld [vmem:[#allocation7 + $0x340] sm:$0xf]
    %v5184 = vld [vmem:[#allocation7 + $0x344] sm:$0xf]
    %v5185 = vld [vmem:[#allocation7 + $0x348] sm:$0xf]
    %v5186 = vld [vmem:[#allocation7 + $0x34c] sm:$0xf]
    %v5187 = vld [vmem:[#allocation7 + $0x350] sm:$0xf]
    %v5188 = vld [vmem:[#allocation7 + $0x354] sm:$0xf]
    %v5189 = vld [vmem:[#allocation7 + $0x358] sm:$0xf]
    %v5190 = vld [vmem:[#allocation7 + $0x35c] sm:$0xf]
    %v5191 = vld [vmem:[#allocation7 + $0x360] sm:$0xf]
    %v5192 = vld [vmem:[#allocation7 + $0x364] sm:$0xf]
    %v5193 = vld [vmem:[#allocation7 + $0x368] sm:$0xf]
    %v5194 = vld [vmem:[#allocation7 + $0x36c] sm:$0xf]
    %v5195 = vld [vmem:[#allocation7 + $0x370] sm:$0xf]
    %v5196 = vld [vmem:[#allocation7 + $0x374] sm:$0xf]
    %v5197 = vld [vmem:[#allocation7 + $0x378] sm:$0xf]
    %v5198 = vld [vmem:[#allocation7 + $0x37c] sm:$0xf]
    %v5199 = vld [vmem:[#allocation7 + $0x380] sm:$0xf]
    %v5200 = vld [vmem:[#allocation7 + $0x384] sm:$0xf]
    %v5201 = vld [vmem:[#allocation7 + $0x388] sm:$0xf]
    %v5202 = vld [vmem:[#allocation7 + $0x38c] sm:$0xf]
    %v5203 = vld [vmem:[#allocation7 + $0x390] sm:$0xf]
    %v5204 = vld [vmem:[#allocation7 + $0x394] sm:$0xf]
    %v5205 = vld [vmem:[#allocation7 + $0x398] sm:$0xf]
    %v5206 = vld [vmem:[#allocation7 + $0x39c] sm:$0xf]
    %v5207 = vld [vmem:[#allocation7 + $0x3a0] sm:$0xf]
    %v5208 = vld [vmem:[#allocation7 + $0x3a4] sm:$0xf]
    %v5209 = vld [vmem:[#allocation7 + $0x3a8] sm:$0xf]
    %v5210 = vld [vmem:[#allocation7 + $0x3ac] sm:$0xf]
    %v5211 = vld [vmem:[#allocation7 + $0x3b0] sm:$0xf]
    %v5212 = vld [vmem:[#allocation7 + $0x3b4] sm:$0xf]
    %v5213 = vld [vmem:[#allocation7 + $0x3b8] sm:$0xf]
    %v5214 = vld [vmem:[#allocation7 + $0x3bc] sm:$0xf]
    %v5215 = vld [vmem:[#allocation7 + $0x3c0] sm:$0xf]
    %v5216 = vld [vmem:[#allocation7 + $0x3c4] sm:$0xf]
    %v5217 = vld [vmem:[#allocation7 + $0x3c8] sm:$0xf]
    %v5218 = vld [vmem:[#allocation7 + $0x3cc] sm:$0xf]
    %v5219 = vld [vmem:[#allocation7 + $0x3d0] sm:$0xf]
    %v5220 = vld [vmem:[#allocation7 + $0x3d4] sm:$0xf]
    %v5221 = vld [vmem:[#allocation7 + $0x3d8] sm:$0xf]
    %v5222 = vld [vmem:[#allocation7 + $0x3dc] sm:$0xf]
    %v5223 = vld [vmem:[#allocation7 + $0x3e0] sm:$0xf]
    %v5224 = vld [vmem:[#allocation7 + $0x3e4] sm:$0xf]
    %v5225 = vld [vmem:[#allocation7 + $0x3e8] sm:$0xf]
    %v5226 = vld [vmem:[#allocation7 + $0x3ec] sm:$0xf]
    %v5227 = vld [vmem:[#allocation7 + $0x3f0] sm:$0xf]
    %v5228 = vld [vmem:[#allocation7 + $0x3f4] sm:$0xf]
    %v5229 = vld [vmem:[#allocation7 + $0x3f8] sm:$0xf]
    %v5230 = vld [vmem:[#allocation7 + $0x3fc] sm:$0xf]
    %v5231 = vld [vmem:[%s55] sm:$0x1]
    %v5232 = vpack.c.bf16 %v4959, %v4959
    %v5233 = vpack.c.bf16 %v4960, %v4960
    %v5234 = vpack.c.bf16 %v4961, %v4961
    %v5235 = vpack.c.bf16 %v4962, %v4962
    %v5236 = vpack.c.bf16 %v4963, %v4963
    %v5237 = vpack.c.bf16 %v4964, %v4964
    %v5238 = vpack.c.bf16 %v4965, %v4965
    %v5239 = vpack.c.bf16 %v4966, %v4966
    %v5240 = vpack.c.bf16 %v4967, %v4967
    %v5241 = vpack.c.bf16 %v4968, %v4968
    %v5242 = vpack.c.bf16 %v4969, %v4969
    %v5243 = vpack.c.bf16 %v4970, %v4970
    %v5244 = vpack.c.bf16 %v4971, %v4971
    %v5245 = vpack.c.bf16 %v4972, %v4972
    %v5246 = vpack.c.bf16 %v4973, %v4973
    %v5247 = vpack.c.bf16 %v4974, %v4974
    %v5249 = vlaneseq
    %v5250 = vshrl.u32 %v5249, 7
    %v5251 = vsub.s32 0, %v5250
    %v5252 = vrot.slane %v5231, %v5251
    %v5510 = vunpack.c.l.b16 %v4975
    %v5511 = vunpack.c.l.b16 %v4976
    %v5512 = vunpack.c.l.b16 %v4977
    %v5513 = vunpack.c.l.b16 %v4978
    %v5514 = vunpack.c.l.b16 %v4979
    %v5515 = vunpack.c.l.b16 %v4980
    %v5516 = vunpack.c.l.b16 %v4981
    %v5517 = vunpack.c.l.b16 %v4982
    %v5518 = vunpack.c.l.b16 %v4983
    %v5519 = vunpack.c.l.b16 %v4984
    %v5520 = vunpack.c.l.b16 %v4985
    %v5521 = vunpack.c.l.b16 %v4986
    %v5522 = vunpack.c.l.b16 %v4987
    %v5523 = vunpack.c.l.b16 %v4988
    %v5524 = vunpack.c.l.b16 %v4989
    %v5525 = vunpack.c.l.b16 %v4990
    %v5526 = vunpack.c.l.b16 %v4991
    %v5527 = vunpack.c.l.b16 %v4992
    %v5528 = vunpack.c.l.b16 %v4993
    %v5529 = vunpack.c.l.b16 %v4994
    %v5530 = vunpack.c.l.b16 %v4995
    %v5531 = vunpack.c.l.b16 %v4996
    %v5532 = vunpack.c.l.b16 %v4997
    %v5533 = vunpack.c.l.b16 %v4998
    %v5534 = vunpack.c.l.b16 %v4999
    %v5535 = vunpack.c.l.b16 %v5000
    %v5536 = vunpack.c.l.b16 %v5001
    %v5537 = vunpack.c.l.b16 %v5002
    %v5538 = vunpack.c.l.b16 %v5003
    %v5539 = vunpack.c.l.b16 %v5004
    %v5540 = vunpack.c.l.b16 %v5005
    %v5541 = vunpack.c.l.b16 %v5006
    %v5542 = vunpack.c.l.b16 %v5007
    %v5543 = vunpack.c.l.b16 %v5008
    %v5544 = vunpack.c.l.b16 %v5009
    %v5545 = vunpack.c.l.b16 %v5010
    %v5546 = vunpack.c.l.b16 %v5011
    %v5547 = vunpack.c.l.b16 %v5012
    %v5548 = vunpack.c.l.b16 %v5013
    %v5549 = vunpack.c.l.b16 %v5014
    %v5550 = vunpack.c.l.b16 %v5015
    %v5551 = vunpack.c.l.b16 %v5016
    %v5552 = vunpack.c.l.b16 %v5017
    %v5553 = vunpack.c.l.b16 %v5018
    %v5554 = vunpack.c.l.b16 %v5019
    %v5555 = vunpack.c.l.b16 %v5020
    %v5556 = vunpack.c.l.b16 %v5021
    %v5557 = vunpack.c.l.b16 %v5022
    %v5558 = vunpack.c.l.b16 %v5023
    %v5559 = vunpack.c.l.b16 %v5024
    %v5560 = vunpack.c.l.b16 %v5025
    %v5561 = vunpack.c.l.b16 %v5026
    %v5562 = vunpack.c.l.b16 %v5027
    %v5563 = vunpack.c.l.b16 %v5028
    %v5564 = vunpack.c.l.b16 %v5029
    %v5565 = vunpack.c.l.b16 %v5030
    %v5566 = vunpack.c.l.b16 %v5031
    %v5567 = vunpack.c.l.b16 %v5032
    %v5568 = vunpack.c.l.b16 %v5033
    %v5569 = vunpack.c.l.b16 %v5034
    %v5570 = vunpack.c.l.b16 %v5035
    %v5571 = vunpack.c.l.b16 %v5036
    %v5572 = vunpack.c.l.b16 %v5037
    %v5573 = vunpack.c.l.b16 %v5038
    %v5574 = vunpack.c.l.b16 %v5039
    %v5575 = vunpack.c.l.b16 %v5040
    %v5576 = vunpack.c.l.b16 %v5041
    %v5577 = vunpack.c.l.b16 %v5042
    %v5578 = vunpack.c.l.b16 %v5043
    %v5579 = vunpack.c.l.b16 %v5044
    %v5580 = vunpack.c.l.b16 %v5045
    %v5581 = vunpack.c.l.b16 %v5046
    %v5582 = vunpack.c.l.b16 %v5047
    %v5583 = vunpack.c.l.b16 %v5048
    %v5584 = vunpack.c.l.b16 %v5049
    %v5585 = vunpack.c.l.b16 %v5050
    %v5586 = vunpack.c.l.b16 %v5051
    %v5587 = vunpack.c.l.b16 %v5052
    %v5588 = vunpack.c.l.b16 %v5053
    %v5589 = vunpack.c.l.b16 %v5054
    %v5590 = vunpack.c.l.b16 %v5055
    %v5591 = vunpack.c.l.b16 %v5056
    %v5592 = vunpack.c.l.b16 %v5057
    %v5593 = vunpack.c.l.b16 %v5058
    %v5594 = vunpack.c.l.b16 %v5059
    %v5595 = vunpack.c.l.b16 %v5060
    %v5596 = vunpack.c.l.b16 %v5061
    %v5597 = vunpack.c.l.b16 %v5062
    %v5598 = vunpack.c.l.b16 %v5063
    %v5599 = vunpack.c.l.b16 %v5064
    %v5600 = vunpack.c.l.b16 %v5065
    %v5601 = vunpack.c.l.b16 %v5066
    %v5602 = vunpack.c.l.b16 %v5067
    %v5603 = vunpack.c.l.b16 %v5068
    %v5604 = vunpack.c.l.b16 %v5069
    %v5605 = vunpack.c.l.b16 %v5070
    %v5606 = vunpack.c.l.b16 %v5071
    %v5607 = vunpack.c.l.b16 %v5072
    %v5608 = vunpack.c.l.b16 %v5073
    %v5609 = vunpack.c.l.b16 %v5074
    %v5610 = vunpack.c.l.b16 %v5075
    %v5611 = vunpack.c.l.b16 %v5076
    %v5612 = vunpack.c.l.b16 %v5077
    %v5613 = vunpack.c.l.b16 %v5078
    %v5614 = vunpack.c.l.b16 %v5079
    %v5615 = vunpack.c.l.b16 %v5080
    %v5616 = vunpack.c.l.b16 %v5081
    %v5617 = vunpack.c.l.b16 %v5082
    %v5618 = vunpack.c.l.b16 %v5083
    %v5619 = vunpack.c.l.b16 %v5084
    %v5620 = vunpack.c.l.b16 %v5085
    %v5621 = vunpack.c.l.b16 %v5086
    %v5622 = vunpack.c.l.b16 %v5087
    %v5623 = vunpack.c.l.b16 %v5088
    %v5624 = vunpack.c.l.b16 %v5089
    %v5625 = vunpack.c.l.b16 %v5090
    %v5626 = vunpack.c.l.b16 %v5091
    %v5627 = vunpack.c.l.b16 %v5092
    %v5628 = vunpack.c.l.b16 %v5093
    %v5629 = vunpack.c.l.b16 %v5094
    %v5630 = vunpack.c.l.b16 %v5095
    %v5631 = vunpack.c.l.b16 %v5096
    %v5632 = vunpack.c.l.b16 %v5097
    %v5633 = vunpack.c.l.b16 %v5098
    %v5634 = vunpack.c.l.b16 %v5099
    %v5635 = vunpack.c.l.b16 %v5100
    %v5636 = vunpack.c.l.b16 %v5101
    %v5637 = vunpack.c.l.b16 %v5102
    %v5638 = vunpack.c.l.b16 %v5103
    %v5639 = vunpack.c.l.b16 %v5104
    %v5640 = vunpack.c.l.b16 %v5105
    %v5641 = vunpack.c.l.b16 %v5106
    %v5642 = vunpack.c.l.b16 %v5107
    %v5643 = vunpack.c.l.b16 %v5108
    %v5644 = vunpack.c.l.b16 %v5109
    %v5645 = vunpack.c.l.b16 %v5110
    %v5646 = vunpack.c.l.b16 %v5111
    %v5647 = vunpack.c.l.b16 %v5112
    %v5648 = vunpack.c.l.b16 %v5113
    %v5649 = vunpack.c.l.b16 %v5114
    %v5650 = vunpack.c.l.b16 %v5115
    %v5651 = vunpack.c.l.b16 %v5116
    %v5652 = vunpack.c.l.b16 %v5117
    %v5653 = vunpack.c.l.b16 %v5118
    %v5654 = vunpack.c.l.b16 %v5119
    %v5655 = vunpack.c.l.b16 %v5120
    %v5656 = vunpack.c.l.b16 %v5121
    %v5657 = vunpack.c.l.b16 %v5122
    %v5658 = vunpack.c.l.b16 %v5123
    %v5659 = vunpack.c.l.b16 %v5124
    %v5660 = vunpack.c.l.b16 %v5125
    %v5661 = vunpack.c.l.b16 %v5126
    %v5662 = vunpack.c.l.b16 %v5127
    %v5663 = vunpack.c.l.b16 %v5128
    %v5664 = vunpack.c.l.b16 %v5129
    %v5665 = vunpack.c.l.b16 %v5130
    %v5666 = vunpack.c.l.b16 %v5131
    %v5667 = vunpack.c.l.b16 %v5132
    %v5668 = vunpack.c.l.b16 %v5133
    %v5669 = vunpack.c.l.b16 %v5134
    %v5670 = vunpack.c.l.b16 %v5135
    %v5671 = vunpack.c.l.b16 %v5136
    %v5672 = vunpack.c.l.b16 %v5137
    %v5673 = vunpack.c.l.b16 %v5138
    %v5674 = vunpack.c.l.b16 %v5139
    %v5675 = vunpack.c.l.b16 %v5140
    %v5676 = vunpack.c.l.b16 %v5141
    %v5677 = vunpack.c.l.b16 %v5142
    %v5678 = vunpack.c.l.b16 %v5143
    %v5679 = vunpack.c.l.b16 %v5144
    %v5680 = vunpack.c.l.b16 %v5145
    %v5681 = vunpack.c.l.b16 %v5146
    %v5682 = vunpack.c.l.b16 %v5147
    %v5683 = vunpack.c.l.b16 %v5148
    %v5684 = vunpack.c.l.b16 %v5149
    %v5685 = vunpack.c.l.b16 %v5150
    %v5686 = vunpack.c.l.b16 %v5151
    %v5687 = vunpack.c.l.b16 %v5152
    %v5688 = vunpack.c.l.b16 %v5153
    %v5689 = vunpack.c.l.b16 %v5154
    %v5690 = vunpack.c.l.b16 %v5155
    %v5691 = vunpack.c.l.b16 %v5156
    %v5692 = vunpack.c.l.b16 %v5157
    %v5693 = vunpack.c.l.b16 %v5158
    %v5694 = vunpack.c.l.b16 %v5159
    %v5695 = vunpack.c.l.b16 %v5160
    %v5696 = vunpack.c.l.b16 %v5161
    %v5697 = vunpack.c.l.b16 %v5162
    %v5698 = vunpack.c.l.b16 %v5163
    %v5699 = vunpack.c.l.b16 %v5164
    %v5700 = vunpack.c.l.b16 %v5165
    %v5701 = vunpack.c.l.b16 %v5166
    %v5702 = vunpack.c.l.b16 %v5167
    %v5703 = vunpack.c.l.b16 %v5168
    %v5704 = vunpack.c.l.b16 %v5169
    %v5705 = vunpack.c.l.b16 %v5170
    %v5706 = vunpack.c.l.b16 %v5171
    %v5707 = vunpack.c.l.b16 %v5172
    %v5708 = vunpack.c.l.b16 %v5173
    %v5709 = vunpack.c.l.b16 %v5174
    %v5710 = vunpack.c.l.b16 %v5175
    %v5711 = vunpack.c.l.b16 %v5176
    %v5712 = vunpack.c.l.b16 %v5177
    %v5713 = vunpack.c.l.b16 %v5178
    %v5714 = vunpack.c.l.b16 %v5179
    %v5715 = vunpack.c.l.b16 %v5180
    %v5716 = vunpack.c.l.b16 %v5181
    %v5717 = vunpack.c.l.b16 %v5182
    %v5718 = vunpack.c.l.b16 %v5183
    %v5719 = vunpack.c.l.b16 %v5184
    %v5720 = vunpack.c.l.b16 %v5185
    %v5721 = vunpack.c.l.b16 %v5186
    %v5722 = vunpack.c.l.b16 %v5187
    %v5723 = vunpack.c.l.b16 %v5188
    %v5724 = vunpack.c.l.b16 %v5189
    %v5725 = vunpack.c.l.b16 %v5190
    %v5726 = vunpack.c.l.b16 %v5191
    %v5727 = vunpack.c.l.b16 %v5192
    %v5728 = vunpack.c.l.b16 %v5193
    %v5729 = vunpack.c.l.b16 %v5194
    %v5730 = vunpack.c.l.b16 %v5195
    %v5731 = vunpack.c.l.b16 %v5196
    %v5732 = vunpack.c.l.b16 %v5197
    %v5733 = vunpack.c.l.b16 %v5198
    %v5734 = vunpack.c.l.b16 %v5199
    %v5735 = vunpack.c.l.b16 %v5200
    %v5736 = vunpack.c.l.b16 %v5201
    %v5737 = vunpack.c.l.b16 %v5202
    %v5738 = vunpack.c.l.b16 %v5203
    %v5739 = vunpack.c.l.b16 %v5204
    %v5740 = vunpack.c.l.b16 %v5205
    %v5741 = vunpack.c.l.b16 %v5206
    %v5742 = vunpack.c.l.b16 %v5207
    %v5743 = vunpack.c.l.b16 %v5208
    %v5744 = vunpack.c.l.b16 %v5209
    %v5745 = vunpack.c.l.b16 %v5210
    %v5746 = vunpack.c.l.b16 %v5211
    %v5747 = vunpack.c.l.b16 %v5212
    %v5748 = vunpack.c.l.b16 %v5213
    %v5749 = vunpack.c.l.b16 %v5214
    %v5750 = vunpack.c.l.b16 %v5215
    %v5751 = vunpack.c.l.b16 %v5216
    %v5752 = vunpack.c.l.b16 %v5217
    %v5753 = vunpack.c.l.b16 %v5218
    %v5754 = vunpack.c.l.b16 %v5219
    %v5755 = vunpack.c.l.b16 %v5220
    %v5756 = vunpack.c.l.b16 %v5221
    %v5757 = vunpack.c.l.b16 %v5222
    %v5758 = vunpack.c.l.b16 %v5223
    %v5759 = vunpack.c.l.b16 %v5224
    %v5760 = vunpack.c.l.b16 %v5225
    %v5761 = vunpack.c.l.b16 %v5226
    %v5762 = vunpack.c.l.b16 %v5227
    %v5763 = vunpack.c.l.b16 %v5228
    %v5764 = vunpack.c.l.b16 %v5229
    %v5765 = vunpack.c.l.b16 %v5230
    %v5766 = vpack.c.b16 %v5511, %v5510
    %v5767 = vpack.c.b16 %v5513, %v5512
    %v5768 = vpack.c.b16 %v5515, %v5514
    %v5769 = vpack.c.b16 %v5517, %v5516
    %v5770 = vpack.c.b16 %v5519, %v5518
    %v5771 = vpack.c.b16 %v5521, %v5520
    %v5772 = vpack.c.b16 %v5523, %v5522
    %v5773 = vpack.c.b16 %v5525, %v5524
    %v5774 = vpack.c.b16 %v5527, %v5526
    %v5775 = vpack.c.b16 %v5529, %v5528
    %v5776 = vpack.c.b16 %v5531, %v5530
    %v5777 = vpack.c.b16 %v5533, %v5532
    %v5778 = vpack.c.b16 %v5535, %v5534
    %v5779 = vpack.c.b16 %v5537, %v5536
    %v5780 = vpack.c.b16 %v5539, %v5538
    %v5781 = vpack.c.b16 %v5541, %v5540
    %v5782 = vpack.c.b16 %v5543, %v5542
    %v5783 = vpack.c.b16 %v5545, %v5544
    %v5784 = vpack.c.b16 %v5547, %v5546
    %v5785 = vpack.c.b16 %v5549, %v5548
    %v5786 = vpack.c.b16 %v5551, %v5550
    %v5787 = vpack.c.b16 %v5553, %v5552
    %v5788 = vpack.c.b16 %v5555, %v5554
    %v5789 = vpack.c.b16 %v5557, %v5556
    %v5790 = vpack.c.b16 %v5559, %v5558
    %v5791 = vpack.c.b16 %v5561, %v5560
    %v5792 = vpack.c.b16 %v5563, %v5562
    %v5793 = vpack.c.b16 %v5565, %v5564
    %v5794 = vpack.c.b16 %v5567, %v5566
    %v5795 = vpack.c.b16 %v5569, %v5568
    %v5796 = vpack.c.b16 %v5571, %v5570
    %v5797 = vpack.c.b16 %v5573, %v5572
    %v5798 = vpack.c.b16 %v5575, %v5574
    %v5799 = vpack.c.b16 %v5577, %v5576
    %v5800 = vpack.c.b16 %v5579, %v5578
    %v5801 = vpack.c.b16 %v5581, %v5580
    %v5802 = vpack.c.b16 %v5583, %v5582
    %v5803 = vpack.c.b16 %v5585, %v5584
    %v5804 = vpack.c.b16 %v5587, %v5586
    %v5805 = vpack.c.b16 %v5589, %v5588
    %v5806 = vpack.c.b16 %v5591, %v5590
    %v5807 = vpack.c.b16 %v5593, %v5592
    %v5808 = vpack.c.b16 %v5595, %v5594
    %v5809 = vpack.c.b16 %v5597, %v5596
    %v5810 = vpack.c.b16 %v5599, %v5598
    %v5811 = vpack.c.b16 %v5601, %v5600
    %v5812 = vpack.c.b16 %v5603, %v5602
    %v5813 = vpack.c.b16 %v5605, %v5604
    %v5814 = vpack.c.b16 %v5607, %v5606
    %v5815 = vpack.c.b16 %v5609, %v5608
    %v5816 = vpack.c.b16 %v5611, %v5610
    %v5817 = vpack.c.b16 %v5613, %v5612
    %v5818 = vpack.c.b16 %v5615, %v5614
    %v5819 = vpack.c.b16 %v5617, %v5616
    %v5820 = vpack.c.b16 %v5619, %v5618
    %v5821 = vpack.c.b16 %v5621, %v5620
    %v5822 = vpack.c.b16 %v5623, %v5622
    %v5823 = vpack.c.b16 %v5625, %v5624
    %v5824 = vpack.c.b16 %v5627, %v5626
    %v5825 = vpack.c.b16 %v5629, %v5628
    %v5826 = vpack.c.b16 %v5631, %v5630
    %v5827 = vpack.c.b16 %v5633, %v5632
    %v5828 = vpack.c.b16 %v5635, %v5634
    %v5829 = vpack.c.b16 %v5637, %v5636
    %v5830 = vpack.c.b16 %v5639, %v5638
    %v5831 = vpack.c.b16 %v5641, %v5640
    %v5832 = vpack.c.b16 %v5643, %v5642
    %v5833 = vpack.c.b16 %v5645, %v5644
    %v5834 = vpack.c.b16 %v5647, %v5646
    %v5835 = vpack.c.b16 %v5649, %v5648
    %v5836 = vpack.c.b16 %v5651, %v5650
    %v5837 = vpack.c.b16 %v5653, %v5652
    %v5838 = vpack.c.b16 %v5655, %v5654
    %v5839 = vpack.c.b16 %v5657, %v5656
    %v5840 = vpack.c.b16 %v5659, %v5658
    %v5841 = vpack.c.b16 %v5661, %v5660
    %v5842 = vpack.c.b16 %v5663, %v5662
    %v5843 = vpack.c.b16 %v5665, %v5664
    %v5844 = vpack.c.b16 %v5667, %v5666
    %v5845 = vpack.c.b16 %v5669, %v5668
    %v5846 = vpack.c.b16 %v5671, %v5670
    %v5847 = vpack.c.b16 %v5673, %v5672
    %v5848 = vpack.c.b16 %v5675, %v5674
    %v5849 = vpack.c.b16 %v5677, %v5676
    %v5850 = vpack.c.b16 %v5679, %v5678
    %v5851 = vpack.c.b16 %v5681, %v5680
    %v5852 = vpack.c.b16 %v5683, %v5682
    %v5853 = vpack.c.b16 %v5685, %v5684
    %v5854 = vpack.c.b16 %v5687, %v5686
    %v5855 = vpack.c.b16 %v5689, %v5688
    %v5856 = vpack.c.b16 %v5691, %v5690
    %v5857 = vpack.c.b16 %v5693, %v5692
    %v5858 = vpack.c.b16 %v5695, %v5694
    %v5859 = vpack.c.b16 %v5697, %v5696
    %v5860 = vpack.c.b16 %v5699, %v5698
    %v5861 = vpack.c.b16 %v5701, %v5700
    %v5862 = vpack.c.b16 %v5703, %v5702
    %v5863 = vpack.c.b16 %v5705, %v5704
    %v5864 = vpack.c.b16 %v5707, %v5706
    %v5865 = vpack.c.b16 %v5709, %v5708
    %v5866 = vpack.c.b16 %v5711, %v5710
    %v5867 = vpack.c.b16 %v5713, %v5712
    %v5868 = vpack.c.b16 %v5715, %v5714
    %v5869 = vpack.c.b16 %v5717, %v5716
    %v5870 = vpack.c.b16 %v5719, %v5718
    %v5871 = vpack.c.b16 %v5721, %v5720
    %v5872 = vpack.c.b16 %v5723, %v5722
    %v5873 = vpack.c.b16 %v5725, %v5724
    %v5874 = vpack.c.b16 %v5727, %v5726
    %v5875 = vpack.c.b16 %v5729, %v5728
    %v5876 = vpack.c.b16 %v5731, %v5730
    %v5877 = vpack.c.b16 %v5733, %v5732
    %v5878 = vpack.c.b16 %v5735, %v5734
    %v5879 = vpack.c.b16 %v5737, %v5736
    %v5880 = vpack.c.b16 %v5739, %v5738
    %v5881 = vpack.c.b16 %v5741, %v5740
    %v5882 = vpack.c.b16 %v5743, %v5742
    %v5883 = vpack.c.b16 %v5745, %v5744
    %v5884 = vpack.c.b16 %v5747, %v5746
    %v5885 = vpack.c.b16 %v5749, %v5748
    %v5886 = vpack.c.b16 %v5751, %v5750
    %v5887 = vpack.c.b16 %v5753, %v5752
    %v5888 = vpack.c.b16 %v5755, %v5754
    %v5889 = vpack.c.b16 %v5757, %v5756
    %v5890 = vpack.c.b16 %v5759, %v5758
    %v5891 = vpack.c.b16 %v5761, %v5760
    %v5892 = vpack.c.b16 %v5763, %v5762
    %v5893 = vpack.c.b16 %v5765, %v5764
    %6022 = vmatprep.subr.bf16.mxu0 0
    %6023 = vmatpush1.bf16.msra.mxu0 %v5773
    %6024 = vmatprep.subr.bf16.mxu0 0
    %6025 = vmatpush1.bf16.msra.mxu0 %v5772
    %6026 = vmatprep.subr.bf16.mxu0 0
    %6027 = vmatpush1.bf16.msra.mxu0 %v5771
    %6028 = vmatprep.subr.bf16.mxu0 0
    %6029 = vmatpush1.bf16.msra.mxu0 %v5770
    %6030 = vmatprep.subr.bf16.mxu0 0
    %6031 = vmatpush1.bf16.msra.mxu0 %v5769
    %6032 = vmatprep.subr.bf16.mxu0 0
    %6033 = vmatpush1.bf16.msra.mxu0 %v5768
    %6034 = vmatprep.subr.bf16.mxu0 0
    %6035 = vmatpush1.bf16.msra.mxu0 %v5767
    %6036 = vmatprep.subr.bf16.mxu0 0
    %6037 = vmatpush1.bf16.msra.mxu0 %v5766
    %6038 = vmatprep.subr.bf16.mxu0 0
    %6039 = vmatpush2.bf16.msra.mxu0 %v5781
    %6040 = vmatprep.subr.bf16.mxu0 0
    %6041 = vmatpush2.bf16.msra.mxu0 %v5780
    %6042 = vmatprep.subr.bf16.mxu0 0
    %6043 = vmatpush2.bf16.msra.mxu0 %v5779
    %6044 = vmatprep.subr.bf16.mxu0 0
    %6045 = vmatpush2.bf16.msra.mxu0 %v5778
    %6046 = vmatprep.subr.bf16.mxu0 0
    %6047 = vmatpush2.bf16.msra.mxu0 %v5777
    %6048 = vmatprep.subr.bf16.mxu0 0
    %6049 = vmatpush2.bf16.msra.mxu0 %v5776
    %6050 = vmatprep.subr.bf16.mxu0 0
    %6051 = vmatpush2.bf16.msra.mxu0 %v5775
    %6052 = vmatprep.subr.bf16.mxu0 0
    %6053 = vmatpush2.bf16.msra.mxu0 %v5774
    %6054 = vmatprep.mubr.bf16.mxu0 %v5233
    %6055 = vmatmul.mubr.bf16.gmra.mxu0 %v5232
    %v6056 = vpop.f32.mrf.mxu0
    %v6057 = vadd.f32 %v5252, %v6056
    %v6058 = vpop.f32.mrf.mxu0
    %v6059 = vpop.f32.mrf.mxu0
    %v6060 = vpop.f32.mrf.mxu0
    %6061 = vdwg.mxu0
    %6062 = vmatprep.subr.bf16.mxu0 0
    %6063 = vmatpush1.bf16.msra.mxu0 %v5789
    %6064 = vmatprep.subr.bf16.mxu0 0
    %6065 = vmatpush1.bf16.msra.mxu0 %v5788
    %6066 = vmatprep.subr.bf16.mxu0 0
    %6067 = vmatpush1.bf16.msra.mxu0 %v5787
    %6068 = vmatprep.subr.bf16.mxu0 0
    %6069 = vmatpush1.bf16.msra.mxu0 %v5786
    %6070 = vmatprep.subr.bf16.mxu0 0
    %6071 = vmatpush1.bf16.msra.mxu0 %v5785
    %6072 = vmatprep.subr.bf16.mxu0 0
    %6073 = vmatpush1.bf16.msra.mxu0 %v5784
    %6074 = vmatprep.subr.bf16.mxu0 0
    %6075 = vmatpush1.bf16.msra.mxu0 %v5783
    %6076 = vmatprep.subr.bf16.mxu0 0
    %6077 = vmatpush1.bf16.msra.mxu0 %v5782
    %6078 = vmatprep.subr.bf16.mxu0 0
    %6079 = vmatpush2.bf16.msra.mxu0 %v5797
    %6080 = vmatprep.subr.bf16.mxu0 0
    %6081 = vmatpush2.bf16.msra.mxu0 %v5796
    %6082 = vmatprep.subr.bf16.mxu0 0
    %6083 = vmatpush2.bf16.msra.mxu0 %v5795
    %6084 = vmatprep.subr.bf16.mxu0 0
    %6085 = vmatpush2.bf16.msra.mxu0 %v5794
    %6086 = vmatprep.subr.bf16.mxu0 0
    %6087 = vmatpush2.bf16.msra.mxu0 %v5793
    %6088 = vmatprep.subr.bf16.mxu0 0
    %6089 = vmatpush2.bf16.msra.mxu0 %v5792
    %6090 = vmatprep.subr.bf16.mxu0 0
    %6091 = vmatpush2.bf16.msra.mxu0 %v5791
    %6092 = vmatprep.subr.bf16.mxu0 0
    %6093 = vmatpush2.bf16.msra.mxu0 %v5790
    %6094 = vmatprep.mubr.bf16.mxu0 %v5235
    %6095 = vmatmul.mubr.bf16.gmra.mxu0 %v5234
    %v6096 = vpop.f32.mrf.mxu0
    %v6097 = vadd.f32 %v6057, %v6096
    %v6098 = vpop.f32.mrf.mxu0
    %v6099 = vpop.f32.mrf.mxu0
    %v6100 = vpop.f32.mrf.mxu0
    %6101 = vdwg.mxu0
    %6102 = vmatprep.subr.bf16.mxu0 0
    %6103 = vmatpush1.bf16.msra.mxu0 %v5805
    %6104 = vmatprep.subr.bf16.mxu0 0
    %6105 = vmatpush1.bf16.msra.mxu0 %v5804
    %6106 = vmatprep.subr.bf16.mxu0 0
    %6107 = vmatpush1.bf16.msra.mxu0 %v5803
    %6108 = vmatprep.subr.bf16.mxu0 0
    %6109 = vmatpush1.bf16.msra.mxu0 %v5802
    %6110 = vmatprep.subr.bf16.mxu0 0
    %6111 = vmatpush1.bf16.msra.mxu0 %v5801
    %6112 = vmatprep.subr.bf16.mxu0 0
    %6113 = vmatpush1.bf16.msra.mxu0 %v5800
    %6114 = vmatprep.subr.bf16.mxu0 0
    %6115 = vmatpush1.bf16.msra.mxu0 %v5799
    %6116 = vmatprep.subr.bf16.mxu0 0
    %6117 = vmatpush1.bf16.msra.mxu0 %v5798
    %6118 = vmatprep.subr.bf16.mxu0 0
    %6119 = vmatpush2.bf16.msra.mxu0 %v5813
    %6120 = vmatprep.subr.bf16.mxu0 0
    %6121 = vmatpush2.bf16.msra.mxu0 %v5812
    %6122 = vmatprep.subr.bf16.mxu0 0
    %6123 = vmatpush2.bf16.msra.mxu0 %v5811
    %6124 = vmatprep.subr.bf16.mxu0 0
    %6125 = vmatpush2.bf16.msra.mxu0 %v5810
    %6126 = vmatprep.subr.bf16.mxu0 0
    %6127 = vmatpush2.bf16.msra.mxu0 %v5809
    %6128 = vmatprep.subr.bf16.mxu0 0
    %6129 = vmatpush2.bf16.msra.mxu0 %v5808
    %6130 = vmatprep.subr.bf16.mxu0 0
    %6131 = vmatpush2.bf16.msra.mxu0 %v5807
    %6132 = vmatprep.subr.bf16.mxu0 0
    %6133 = vmatpush2.bf16.msra.mxu0 %v5806
    %6134 = vmatprep.mubr.bf16.mxu0 %v5237
    %6135 = vmatmul.mubr.bf16.gmra.mxu0 %v5236
    %v6136 = vpop.f32.mrf.mxu0
    %v6137 = vadd.f32 %v6097, %v6136
    %v6138 = vpop.f32.mrf.mxu0
    %v6139 = vpop.f32.mrf.mxu0
    %v6140 = vpop.f32.mrf.mxu0
    %6141 = vdwg.mxu0
    %6142 = vmatprep.subr.bf16.mxu0 0
    %6143 = vmatpush1.bf16.msra.mxu0 %v5821
    %6144 = vmatprep.subr.bf16.mxu0 0
    %6145 = vmatpush1.bf16.msra.mxu0 %v5820
    %6146 = vmatprep.subr.bf16.mxu0 0
    %6147 = vmatpush1.bf16.msra.mxu0 %v5819
    %6148 = vmatprep.subr.bf16.mxu0 0
    %6149 = vmatpush1.bf16.msra.mxu0 %v5818
    %6150 = vmatprep.subr.bf16.mxu0 0
    %6151 = vmatpush1.bf16.msra.mxu0 %v5817
    %6152 = vmatprep.subr.bf16.mxu0 0
    %6153 = vmatpush1.bf16.msra.mxu0 %v5816
    %6154 = vmatprep.subr.bf16.mxu0 0
    %6155 = vmatpush1.bf16.msra.mxu0 %v5815
    %6156 = vmatprep.subr.bf16.mxu0 0
    %6157 = vmatpush1.bf16.msra.mxu0 %v5814
    %6158 = vmatprep.subr.bf16.mxu0 0
    %6159 = vmatpush2.bf16.msra.mxu0 %v5829
    %6160 = vmatprep.subr.bf16.mxu0 0
    %6161 = vmatpush2.bf16.msra.mxu0 %v5828
    %6162 = vmatprep.subr.bf16.mxu0 0
    %6163 = vmatpush2.bf16.msra.mxu0 %v5827
    %6164 = vmatprep.subr.bf16.mxu0 0
    %6165 = vmatpush2.bf16.msra.mxu0 %v5826
    %6166 = vmatprep.subr.bf16.mxu0 0
    %6167 = vmatpush2.bf16.msra.mxu0 %v5825
    %6168 = vmatprep.subr.bf16.mxu0 0
    %6169 = vmatpush2.bf16.msra.mxu0 %v5824
    %6170 = vmatprep.subr.bf16.mxu0 0
    %6171 = vmatpush2.bf16.msra.mxu0 %v5823
    %6172 = vmatprep.subr.bf16.mxu0 0
    %6173 = vmatpush2.bf16.msra.mxu0 %v5822
    %6174 = vmatprep.mubr.bf16.mxu0 %v5239
    %6175 = vmatmul.mubr.bf16.gmra.mxu0 %v5238
    %v6176 = vpop.f32.mrf.mxu0
    %v6177 = vadd.f32 %v6137, %v6176
    %v6178 = vpop.f32.mrf.mxu0
    %v6179 = vpop.f32.mrf.mxu0
    %v6180 = vpop.f32.mrf.mxu0
    %6181 = vdwg.mxu0
    %6182 = vmatprep.subr.bf16.mxu0 0
    %6183 = vmatpush1.bf16.msra.mxu0 %v5837
    %6184 = vmatprep.subr.bf16.mxu0 0
    %6185 = vmatpush1.bf16.msra.mxu0 %v5836
    %6186 = vmatprep.subr.bf16.mxu0 0
    %6187 = vmatpush1.bf16.msra.mxu0 %v5835
    %6188 = vmatprep.subr.bf16.mxu0 0
    %6189 = vmatpush1.bf16.msra.mxu0 %v5834
    %6190 = vmatprep.subr.bf16.mxu0 0
    %6191 = vmatpush1.bf16.msra.mxu0 %v5833
    %6192 = vmatprep.subr.bf16.mxu0 0
    %6193 = vmatpush1.bf16.msra.mxu0 %v5832
    %6194 = vmatprep.subr.bf16.mxu0 0
    %6195 = vmatpush1.bf16.msra.mxu0 %v5831
    %6196 = vmatprep.subr.bf16.mxu0 0
    %6197 = vmatpush1.bf16.msra.mxu0 %v5830
    %6198 = vmatprep.subr.bf16.mxu0 0
    %6199 = vmatpush2.bf16.msra.mxu0 %v5845
    %6200 = vmatprep.subr.bf16.mxu0 0
    %6201 = vmatpush2.bf16.msra.mxu0 %v5844
    %6202 = vmatprep.subr.bf16.mxu0 0
    %6203 = vmatpush2.bf16.msra.mxu0 %v5843
    %6204 = vmatprep.subr.bf16.mxu0 0
    %6205 = vmatpush2.bf16.msra.mxu0 %v5842
    %6206 = vmatprep.subr.bf16.mxu0 0
    %6207 = vmatpush2.bf16.msra.mxu0 %v5841
    %6208 = vmatprep.subr.bf16.mxu0 0
    %6209 = vmatpush2.bf16.msra.mxu0 %v5840
    %6210 = vmatprep.subr.bf16.mxu0 0
    %6211 = vmatpush2.bf16.msra.mxu0 %v5839
    %6212 = vmatprep.subr.bf16.mxu0 0
    %6213 = vmatpush2.bf16.msra.mxu0 %v5838
    %6214 = vmatprep.mubr.bf16.mxu0 %v5241
    %6215 = vmatmul.mubr.bf16.gmra.mxu0 %v5240
    %v6216 = vpop.f32.mrf.mxu0
    %v6217 = vadd.f32 %v6177, %v6216
    %v6218 = vpop.f32.mrf.mxu0
    %v6219 = vpop.f32.mrf.mxu0
    %v6220 = vpop.f32.mrf.mxu0
    %6221 = vdwg.mxu0
    %6222 = vmatprep.subr.bf16.mxu0 0
    %6223 = vmatpush1.bf16.msra.mxu0 %v5853
    %6224 = vmatprep.subr.bf16.mxu0 0
    %6225 = vmatpush1.bf16.msra.mxu0 %v5852
    %6226 = vmatprep.subr.bf16.mxu0 0
    %6227 = vmatpush1.bf16.msra.mxu0 %v5851
    %6228 = vmatprep.subr.bf16.mxu0 0
    %6229 = vmatpush1.bf16.msra.mxu0 %v5850
    %6230 = vmatprep.subr.bf16.mxu0 0
    %6231 = vmatpush1.bf16.msra.mxu0 %v5849
    %6232 = vmatprep.subr.bf16.mxu0 0
    %6233 = vmatpush1.bf16.msra.mxu0 %v5848
    %6234 = vmatprep.subr.bf16.mxu0 0
    %6235 = vmatpush1.bf16.msra.mxu0 %v5847
    %6236 = vmatprep.subr.bf16.mxu0 0
    %6237 = vmatpush1.bf16.msra.mxu0 %v5846
    %6238 = vmatprep.subr.bf16.mxu0 0
    %6239 = vmatpush2.bf16.msra.mxu0 %v5861
    %6240 = vmatprep.subr.bf16.mxu0 0
    %6241 = vmatpush2.bf16.msra.mxu0 %v5860
    %6242 = vmatprep.subr.bf16.mxu0 0
    %6243 = vmatpush2.bf16.msra.mxu0 %v5859
    %6244 = vmatprep.subr.bf16.mxu0 0
    %6245 = vmatpush2.bf16.msra.mxu0 %v5858
    %6246 = vmatprep.subr.bf16.mxu0 0
    %6247 = vmatpush2.bf16.msra.mxu0 %v5857
    %6248 = vmatprep.subr.bf16.mxu0 0
    %6249 = vmatpush2.bf16.msra.mxu0 %v5856
    %6250 = vmatprep.subr.bf16.mxu0 0
    %6251 = vmatpush2.bf16.msra.mxu0 %v5855
    %6252 = vmatprep.subr.bf16.mxu0 0
    %6253 = vmatpush2.bf16.msra.mxu0 %v5854
    %6254 = vmatprep.mubr.bf16.mxu0 %v5243
    %6255 = vmatmul.mubr.bf16.gmra.mxu0 %v5242
    %v6256 = vpop.f32.mrf.mxu0
    %v6257 = vadd.f32 %v6217, %v6256
    %v6258 = vpop.f32.mrf.mxu0
    %v6259 = vpop.f32.mrf.mxu0
    %v6260 = vpop.f32.mrf.mxu0
    %6261 = vdwg.mxu0
    %6262 = vmatprep.subr.bf16.mxu0 0
    %6263 = vmatpush1.bf16.msra.mxu0 %v5869
    %6264 = vmatprep.subr.bf16.mxu0 0
    %6265 = vmatpush1.bf16.msra.mxu0 %v5868
    %6266 = vmatprep.subr.bf16.mxu0 0
    %6267 = vmatpush1.bf16.msra.mxu0 %v5867
    %6268 = vmatprep.subr.bf16.mxu0 0
    %6269 = vmatpush1.bf16.msra.mxu0 %v5866
    %6270 = vmatprep.subr.bf16.mxu0 0
    %6271 = vmatpush1.bf16.msra.mxu0 %v5865
    %6272 = vmatprep.subr.bf16.mxu0 0
    %6273 = vmatpush1.bf16.msra.mxu0 %v5864
    %6274 = vmatprep.subr.bf16.mxu0 0
    %6275 = vmatpush1.bf16.msra.mxu0 %v5863
    %6276 = vmatprep.subr.bf16.mxu0 0
    %6277 = vmatpush1.bf16.msra.mxu0 %v5862
    %6278 = vmatprep.subr.bf16.mxu0 0
    %6279 = vmatpush2.bf16.msra.mxu0 %v5877
    %6280 = vmatprep.subr.bf16.mxu0 0
    %6281 = vmatpush2.bf16.msra.mxu0 %v5876
    %6282 = vmatprep.subr.bf16.mxu0 0
    %6283 = vmatpush2.bf16.msra.mxu0 %v5875
    %6284 = vmatprep.subr.bf16.mxu0 0
    %6285 = vmatpush2.bf16.msra.mxu0 %v5874
    %6286 = vmatprep.subr.bf16.mxu0 0
    %6287 = vmatpush2.bf16.msra.mxu0 %v5873
    %6288 = vmatprep.subr.bf16.mxu0 0
    %6289 = vmatpush2.bf16.msra.mxu0 %v5872
    %6290 = vmatprep.subr.bf16.mxu0 0
    %6291 = vmatpush2.bf16.msra.mxu0 %v5871
    %6292 = vmatprep.subr.bf16.mxu0 0
    %6293 = vmatpush2.bf16.msra.mxu0 %v5870
    %6294 = vmatprep.mubr.bf16.mxu0 %v5245
    %6295 = vmatmul.mubr.bf16.gmra.mxu0 %v5244
    %v6296 = vpop.f32.mrf.mxu0
    %v6297 = vadd.f32 %v6257, %v6296
    %v6298 = vpop.f32.mrf.mxu0
    %v6299 = vpop.f32.mrf.mxu0
    %v6300 = vpop.f32.mrf.mxu0
    %6301 = vdwg.mxu0
    %6302 = vmatprep.subr.bf16.mxu0 0
    %6303 = vmatpush1.bf16.msra.mxu0 %v5885
    %6304 = vmatprep.subr.bf16.mxu0 0
    %6305 = vmatpush1.bf16.msra.mxu0 %v5884
    %6306 = vmatprep.subr.bf16.mxu0 0
    %6307 = vmatpush1.bf16.msra.mxu0 %v5883
    %6308 = vmatprep.subr.bf16.mxu0 0
    %6309 = vmatpush1.bf16.msra.mxu0 %v5882
    %6310 = vmatprep.subr.bf16.mxu0 0
    %6311 = vmatpush1.bf16.msra.mxu0 %v5881
    %6312 = vmatprep.subr.bf16.mxu0 0
    %6313 = vmatpush1.bf16.msra.mxu0 %v5880
    %6314 = vmatprep.subr.bf16.mxu0 0
    %6315 = vmatpush1.bf16.msra.mxu0 %v5879
    %6316 = vmatprep.subr.bf16.mxu0 0
    %6317 = vmatpush1.bf16.msra.mxu0 %v5878
    %6318 = vmatprep.subr.bf16.mxu0 0
    %6319 = vmatpush2.bf16.msra.mxu0 %v5893
    %6320 = vmatprep.subr.bf16.mxu0 0
    %6321 = vmatpush2.bf16.msra.mxu0 %v5892
    %6322 = vmatprep.subr.bf16.mxu0 0
    %6323 = vmatpush2.bf16.msra.mxu0 %v5891
    %6324 = vmatprep.subr.bf16.mxu0 0
    %6325 = vmatpush2.bf16.msra.mxu0 %v5890
    %6326 = vmatprep.subr.bf16.mxu0 0
    %6327 = vmatpush2.bf16.msra.mxu0 %v5889
    %6328 = vmatprep.subr.bf16.mxu0 0
    %6329 = vmatpush2.bf16.msra.mxu0 %v5888
    %6330 = vmatprep.subr.bf16.mxu0 0
    %6331 = vmatpush2.bf16.msra.mxu0 %v5887
    %6332 = vmatprep.subr.bf16.mxu0 0
    %6333 = vmatpush2.bf16.msra.mxu0 %v5886
    %6334 = vmatprep.mubr.bf16.mxu0 %v5247
    %6335 = vmatmul.mubr.bf16.gmra.mxu0 %v5246
    %v6336 = vpop.f32.mrf.mxu0
    %v6337 = vadd.f32 %v6297, %v6336
    %v6338 = vpop.f32.mrf.mxu0
    %v6339 = vpop.f32.mrf.mxu0
    %v6340 = vpop.f32.mrf.mxu0
    %6341 = vdwg.mxu0
    %v6342 = vadd.f32 %v3777, %v6337
    %v6343 = vld [vmem:[%s45] sm:$0x1]
    %v6344 = vld [vmem:[%s47] sm:$0x1]
    %6345 = vadd.xlane.f32.xlu0 %v6342
    %v6346 = vpop.xlane.xlu0 %6345
    %v6347 = vmul.f32 %v6346, 0.03125
    %v6348 = vsub.f32 %v6342, %v6347
    %v6349 = vmul.f32 %v6348, %v194
    %v6350 = vmul.f32 %v6349, %v6349
    %6351 = vadd.xlane.f32.xlu0 %v6350
    %v6352 = vpop.xlane.xlu0 %6351
    %v6353 = vmul.f32 %v6352, 0.03125
    %v6354 = vadd.f32 %v6353, 1e-05
    %v6355 = vrsqrt.pop %v6354
    %v6356 = vmul.f32 %v6349, %v6355
    %v6358 = vlaneseq
    %v6359 = vshrl.u32 %v6358, 7
    %v6360 = vsub.s32 0, %v6359
    %v6361 = vrot.slane %v6343, %v6360
    %v6363 = vmul.f32 %v6356, %v6361
    %v6365 = vlaneseq
    %v6366 = vshrl.u32 %v6365, 7
    %v6367 = vsub.s32 0, %v6366
    %v6368 = vrot.slane %v6344, %v6367
    %v6370 = vadd.f32 %v6363, %v6368
    %v6371 = vld [vmem:[%s57] sm:$0x1]
    %v6372 = vld [vmem:[%s59] sm:$0x1]
    %6373 = vadd.xlane.f32.xlu0 %v6370
    %v6374 = vpop.xlane.xlu0 %6373
    %v6375 = vmul.f32 %v6374, 0.03125
    %v6376 = vsub.f32 %v6370, %v6375
    %v6377 = vmul.f32 %v6376, %v194
    %v6378 = vmul.f32 %v6377, %v6377
    %6379 = vadd.xlane.f32.xlu0 %v6378
    %v6380 = vpop.xlane.xlu0 %6379
    %v6381 = vmul.f32 %v6380, 0.03125
    %v6382 = vadd.f32 %v6381, 1e-05
    %v6383 = vrsqrt.pop %v6382
    %v6384 = vmul.f32 %v6377, %v6383
    %v6386 = vlaneseq
    %v6387 = vshrl.u32 %v6386, 7
    %v6388 = vsub.s32 0, %v6387
    %v6389 = vrot.slane %v6371, %v6388
    %v6391 = vmul.f32 %v6384, %v6389
    %v6393 = vlaneseq
    %v6394 = vshrl.u32 %v6393, 7
    %v6395 = vsub.s32 0, %v6394
    %v6396 = vrot.slane %v6372, %v6395
    %v6398 = vadd.f32 %v6391, %v6396
    %v6399 = vld [vmem:[%s61] sm:$0xf]
    %v6400 = vld [vmem:[%s61 + $0x4] sm:$0xf]
    %v6401 = vld [vmem:[%s61 + $0x8] sm:$0xf]
    %v6402 = vld [vmem:[%s61 + $0xc] sm:$0xf]
    %v6403 = vld [vmem:[%s61 + $0x10] sm:$0xf]
    %v6404 = vld [vmem:[%s61 + $0x14] sm:$0xf]
    %v6405 = vld [vmem:[%s61 + $0x18] sm:$0xf]
    %v6406 = vld [vmem:[%s61 + $0x1c] sm:$0xf]
    %v6407 = vld [vmem:[%s61 + $0x20] sm:$0xf]
    %v6408 = vld [vmem:[%s61 + $0x24] sm:$0xf]
    %v6409 = vld [vmem:[%s61 + $0x28] sm:$0xf]
    %v6410 = vld [vmem:[%s61 + $0x2c] sm:$0xf]
    %v6411 = vld [vmem:[%s61 + $0x30] sm:$0xf]
    %v6412 = vld [vmem:[%s61 + $0x34] sm:$0xf]
    %v6413 = vld [vmem:[%s61 + $0x38] sm:$0xf]
    %v6414 = vld [vmem:[%s61 + $0x3c] sm:$0xf]
    %v6415 = vld [vmem:[%s63] sm:$0x1]
    %v6416 = vpack.c.bf16 %v6398, %v6398
    %v6418 = vlaneseq
    %v6419 = vshrl.u32 %v6418, 7
    %v6420 = vsub.s32 0, %v6419
    %v6421 = vrot.slane %v6415, %v6420
    %v6439 = vunpack.c.l.b16 %v6399
    %v6440 = vunpack.c.l.b16 %v6400
    %v6441 = vunpack.c.l.b16 %v6401
    %v6442 = vunpack.c.l.b16 %v6402
    %v6443 = vunpack.c.l.b16 %v6403
    %v6444 = vunpack.c.l.b16 %v6404
    %v6445 = vunpack.c.l.b16 %v6405
    %v6446 = vunpack.c.l.b16 %v6406
    %v6447 = vunpack.c.l.b16 %v6407
    %v6448 = vunpack.c.l.b16 %v6408
    %v6449 = vunpack.c.l.b16 %v6409
    %v6450 = vunpack.c.l.b16 %v6410
    %v6451 = vunpack.c.l.b16 %v6411
    %v6452 = vunpack.c.l.b16 %v6412
    %v6453 = vunpack.c.l.b16 %v6413
    %v6454 = vunpack.c.l.b16 %v6414
    %v6455 = vpack.c.b16 %v6440, %v6439
    %v6456 = vpack.c.b16 %v6442, %v6441
    %v6457 = vpack.c.b16 %v6444, %v6443
    %v6458 = vpack.c.b16 %v6446, %v6445
    %v6459 = vpack.c.b16 %v6448, %v6447
    %v6460 = vpack.c.b16 %v6450, %v6449
    %v6461 = vpack.c.b16 %v6452, %v6451
    %v6462 = vpack.c.b16 %v6454, %v6453
    %6471 = vmatprep.subr.bf16.mxu0 0
    %6472 = vmatpush1.bf16.msra.mxu0 %v6462
    %6473 = vmatprep.subr.bf16.mxu0 0
    %6474 = vmatpush1.bf16.msra.mxu0 %v6461
    %6475 = vmatprep.subr.bf16.mxu0 0
    %6476 = vmatpush1.bf16.msra.mxu0 %v6460
    %6477 = vmatprep.subr.bf16.mxu0 0
    %6478 = vmatpush1.bf16.msra.mxu0 %v6459
    %6479 = vmatprep.subr.bf16.mxu0 0
    %6480 = vmatpush1.bf16.msra.mxu0 %v6458
    %6481 = vmatprep.subr.bf16.mxu0 0
    %6482 = vmatpush1.bf16.msra.mxu0 %v6457
    %6483 = vmatprep.subr.bf16.mxu0 0
    %6484 = vmatpush1.bf16.msra.mxu0 %v6456
    %6485 = vmatprep.subr.bf16.mxu0 0
    %6486 = vmatpush1.bf16.msra.mxu0 %v6455
    %6487 = vmatprep.subr.bf16.mxu0 0
    %6488 = vmatpush2.bf16.msra.mxu0 0
    %6489 = vmatprep.subr.bf16.mxu0 0
    %6490 = vmatpush2.bf16.msra.mxu0 0
    %6491 = vmatprep.subr.bf16.mxu0 0
    %6492 = vmatpush2.bf16.msra.mxu0 0
    %6493 = vmatprep.subr.bf16.mxu0 0
    %6494 = vmatpush2.bf16.msra.mxu0 0
    %6495 = vmatprep.subr.bf16.mxu0 0
    %6496 = vmatpush2.bf16.msra.mxu0 0
    %6497 = vmatprep.subr.bf16.mxu0 0
    %6498 = vmatpush2.bf16.msra.mxu0 0
    %6499 = vmatprep.subr.bf16.mxu0 0
    %6500 = vmatpush2.bf16.msra.mxu0 0
    %6501 = vmatprep.subr.bf16.mxu0 0
    %6502 = vmatpush2.bf16.msra.mxu0 0
    %6503 = vmatprep.mubr.bf16.mxu0 0
    %6504 = vmatmul.mubr.bf16.gmra.mxu0 %v6416
    %v6505 = vpop.f32.mrf.mxu0
    %v6506 = vadd.f32 %v6421, %v6505
    %v6507 = vpop.f32.mrf.mxu0
    %v6508 = vpop.f32.mrf.mxu0
    %v6509 = vpop.f32.mrf.mxu0
    %6510 = vdwg.mxu0
    %6511 = vst [vmem:[%s65] sm:$0xff] %v6506
    // Predicated region
    $region146: #{spoter_forward.1} parent=1 // pred_check
      _
    $region147: #{spoter_forward.1} parent=1 // pred_check_branch
      %6513 = sbr.rel (0) target = $region149
    $region148: #{spoter_forward.1} parent=1 // pred_region
      _
    $region149: #{spoter_forward.1} parent=1 // pred_fallthru
      _
    // Predicated region
    $region150: #{spoter_forward.1} parent=1 // pred_check
      _
    $region151: #{spoter_forward.1} parent=1 // pred_check_branch
      %6515 = sbr.rel (0) target = $region153
    $region152: #{spoter_forward.1} parent=1 // pred_region
      _
    $region153: #{spoter_forward.1} parent=1 // pred_fallthru
      _
    %6516 = vsyncpa [#allocation3], 1
    %6517 = vsyncpa [#allocation5], 1
    %6518 = vsyncpa [#allocation8], 1

</llo_original>
